<compile_context>
chip_gen: v6e
topology: v6e:2x2x1
jax: 0.10.0
libtpu: 0.0.40
codegen_flags: <defaults>
</compile_context>

<pallas_src>
import functools

import jax
import jax.numpy as jnp
import numpy as np
from jax import lax
from jax.experimental import pallas as pl
from jax.experimental.pallas import tpu as pltpu

# ---- small, TPU-friendly problem sizes (consistent with the module) ----
BATCH = 2
SEQ = 128
D_MODEL = 128
NUM_HEADS = 4
D_K = D_MODEL // NUM_HEADS     # 32
D_V = D_MODEL // NUM_HEADS     # 32
LN_EPS = 1e-5


def mha_kernel(q_ref, k_ref, v_ref,
               wq_ref, bq_ref, wk_ref, bk_ref, wv_ref, bv_ref,
               wo_ref, bo_ref, gamma_ref, beta_ref,
               out_ref, ctx_ref, *, batch_per_block):
    S, D = SEQ, D_MODEL
    M = batch_per_block * S

    # Fold the batch sub-block into the projection matmuls (leading-dim collapse
    # is layout-free; lanes stay at D = 128, rows become M = batch_per_block*S).
    xq = q_ref[...].reshape(M, D)
    xk = k_ref[...].reshape(M, D)
    xv = v_ref[...].reshape(M, D)

    Q = jnp.dot(xq, wq_ref[...], preferred_element_type=jnp.float32) + bq_ref[...]
    K = jnp.dot(xk, wk_ref[...], preferred_element_type=jnp.float32) + bk_ref[...]
    V = jnp.dot(xv, wv_ref[...], preferred_element_type=jnp.float32) + bv_ref[...]

    # Hoisted out of the unrolled batch loop (no broadcast_in_dim re-materialize).
    W_o = wo_ref[...]
    b_o = bo_ref[...]
    gamma = gamma_ref[...]
    beta = beta_ref[...]
    scale = 1.0 / jnp.sqrt(jnp.float32(D_K))

    for b in range(batch_per_block):            # static loop over batch in block
        Qb = Q[b * S:(b + 1) * S]               # (S, D) static sublane slice
        Kb = K[b * S:(b + 1) * S]
        Vb = V[b * S:(b + 1) * S]

        for h in range(NUM_HEADS):              # static unrolled head loop
            # Scale q (S, d_k) up front, not the (S, S) scores.
            qh = Qb[:, h * D_K:(h + 1) * D_K] * scale
            kh = Kb[:, h * D_K:(h + 1) * D_K]
            vh = Vb[:, h * D_V:(h + 1) * D_V]

            # Q @ K^T as an 'nt' dot_general -> MXU consumes K directly,
            # no explicit skinny transpose.
            scores = lax.dot_general(
                qh, kh, (((1,), (1,)), ((), ())),
                preferred_element_type=jnp.float32)                  # (S, S)
            scores = scores - jnp.max(scores, axis=-1, keepdims=True)
            p = jnp.exp(scores)
            inv = pl.reciprocal(jnp.sum(p, axis=-1, keepdims=True), approx=True)
            # Deferred normalization: PV matmul on unnormalized probs, then
            # scale the (S, d_v) context (not the (S, S) probs).
            ctx_h = jnp.dot(p, vh, preferred_element_type=jnp.float32)
            ctx_ref[:, h * D_V:(h + 1) * D_V] = ctx_h * inv

        # Single native-depth (K=128) output-projection matmul on the assembled
        # (S, 128) context, plus the projected-Q residual and output bias.
        out = Qb + b_o + jnp.dot(ctx_ref[...], W_o,
                                 preferred_element_type=jnp.float32)

        # LayerNorm over last dim (biased variance, eps = 1e-5).
        mean = jnp.mean(out, axis=-1, keepdims=True)
        var = jnp.mean((out - mean) ** 2, axis=-1, keepdims=True)
        normed = (out - mean) * lax.rsqrt(var + LN_EPS)
        out_ref[b] = normed * gamma + beta


def multihead_attention(query, key, value, params, batch_blocks=None):
    B, S, D = query.shape
    if batch_blocks is None:
        # Default: one grid step per batch element. Weights have constant index
        # maps (fetched once), activations are double-buffered across steps, so
        # input DMA overlaps compute on v5e/v6e; the "parallel" axis shards the
        # batch across the two TensorCores on v7x.
        batch_blocks = B
    batch_blocks = max(1, min(batch_blocks, B))
    while B % batch_blocks:
        batch_blocks -= 1
    bpb = B // batch_blocks

    act_spec = pl.BlockSpec((bpb, S, D), lambda b: (b, 0, 0))
    w_spec = pl.BlockSpec((D, D), lambda b: (0, 0))
    vec_spec = pl.BlockSpec((1, D), lambda b: (0, 0))

    # Advisory cost estimate (projections + out-proj + per-head QK^T, PV).
    flops = 4 * (2 * B * S * D * D) + 4 * B * NUM_HEADS * S * S * D_K
    transcendentals = B * NUM_HEADS * S * S + B * NUM_HEADS * S + B * S
    bytes_accessed = 4 * (4 * B * S * D + 4 * D * D + 6 * D)

    kernel = functools.partial(mha_kernel, batch_per_block=bpb)
    return pl.pallas_call(
        kernel,
        out_shape=jax.ShapeDtypeStruct((B, S, D), jnp.float32),
        grid_spec=pltpu.PrefetchScalarGridSpec(
            num_scalar_prefetch=0,
            grid=(batch_blocks,),
            in_specs=[
                act_spec, act_spec, act_spec,        # q, k, v
                w_spec, vec_spec,                    # W_q, b_q
                w_spec, vec_spec,                    # W_k, b_k
                w_spec, vec_spec,                    # W_v, b_v
                w_spec, vec_spec,                    # W_o, b_o
                vec_spec, vec_spec,                  # gamma, beta
            ],
            out_specs=act_spec,
            scratch_shapes=[pltpu.VMEM((S, D), jnp.float32)],   # assembled ctx
        ),
        compiler_params=pltpu.CompilerParams(
            dimension_semantics=("parallel",)),
        cost_estimate=pl.CostEstimate(
            flops=flops, transcendentals=transcendentals,
            bytes_accessed=bytes_accessed),
    )(query, key, value,
      params["Wq"], params["bq"],
      params["Wk"], params["bk"],
      params["Wv"], params["bv"],
      params["Wo"], params["bo"],
      params["gamma"], params["beta"])


def reference_mha(query, key, value, params):
    """Pure-JAX reference reproducing the PyTorch forward."""
    B, S, D = query.shape
    Q = query @ params["Wq"] + params["bq"][0]
    K = key @ params["Wk"] + params["bk"][0]
    V = value @ params["Wv"] + params["bv"][0]

    def split_heads(x, dh):
        return x.reshape(B, S, NUM_HEADS, dh).transpose(0, 2, 1, 3)

    Qh, Kh, Vh = split_heads(Q, D_K), split_heads(K, D_K), split_heads(V, D_V)
    scores = jnp.einsum("bhqd,bhkd->bhqk", Qh, Kh) / jnp.sqrt(jnp.float32(D_K))
    attn = jax.nn.softmax(scores, axis=-1)
    ctx = jnp.einsum("bhqk,bhkd->bhqd", attn, Vh)
    ctx = ctx.transpose(0, 2, 1, 3).reshape(B, S, NUM_HEADS * D_V)

    out = ctx @ params["Wo"] + params["bo"][0]
    res = out + Q
    mean = jnp.mean(res, axis=-1, keepdims=True)
    var = jnp.mean((res - mean) ** 2, axis=-1, keepdims=True)
    return (res - mean) / jnp.sqrt(var + LN_EPS) * params["gamma"][0] + params["beta"][0]


def init_params(key):
    ks = jax.random.split(key, 8)
    s = 1.0 / np.sqrt(D_MODEL)
    u = lambda k, shape: jax.random.uniform(k, shape, jnp.float32, -s, s)
    return {
        "Wq": u(ks[0], (D_MODEL, NUM_HEADS * D_K)),
        "bq": u(ks[1], (1, NUM_HEADS * D_K)),
        "Wk": u(ks[2], (D_MODEL, NUM_HEADS * D_K)),
        "bk": u(ks[3], (1, NUM_HEADS * D_K)),
        "Wv": u(ks[4], (D_MODEL, NUM_HEADS * D_V)),
        "bv": u(ks[5], (1, NUM_HEADS * D_V)),
        "Wo": u(ks[6], (NUM_HEADS * D_V, D_MODEL)),
        "bo": u(ks[7], (1, D_MODEL)),
        "gamma": jnp.ones((1, D_MODEL), jnp.float32),
        "beta": jnp.zeros((1, D_MODEL), jnp.float32),
    }


if __name__ == "__main__":
    root = jax.random.PRNGKey(0)
    k_p, k_q, k_k, k_v = jax.random.split(root, 4)

    params = init_params(k_p)
    query = jax.random.normal(k_q, (BATCH, SEQ, D_MODEL), jnp.float32)
    key_in = jax.random.normal(k_k, (BATCH, SEQ, D_MODEL), jnp.float32)
    value = jax.random.normal(k_v, (BATCH, SEQ, D_MODEL), jnp.float32)

    ref = jax.block_until_ready(reference_mha(query, key_in, value, params))

    # Tolerance is 1e-3 because softmax normalization uses the EUP approximate
    # reciprocal (pl.reciprocal(..., approx=True)).
    TOL = 1e-3

    # Default configuration: grid=(B,) per-batch blocks (DMA/compute overlap on
    # v5e/v6e, 2-TensorCore sharding on v7x).
    out = jax.block_until_ready(multihead_attention(query, key_in, value, params))
    np.testing.assert_allclose(np.asarray(out), np.asarray(ref), rtol=TOL, atol=TOL)

    # Exercise both the batch-folded (1 grid step) and per-batch parallel paths.
    for nb in (1, BATCH):
        out_nb = jax.block_until_ready(
            multihead_attention(query, key_in, value, params, batch_blocks=nb))
        np.testing.assert_allclose(np.asarray(out_nb), np.asarray(ref),
                                   rtol=TOL, atol=TOL)

    print("KERNEL_OK")
</pallas_src>

<mosaic_0001>
module attributes {stable_mosaic.version = 11 : i64} {
  func.func @mha_kernel(%arg0: i32, %arg1: memref<1x128x128xf32, #tpu.memory_space<vmem>>, %arg2: memref<1x128x128xf32, #tpu.memory_space<vmem>>, %arg3: memref<1x128x128xf32, #tpu.memory_space<vmem>>, %arg4: memref<128x128xf32, #tpu.memory_space<vmem>>, %arg5: memref<1x128xf32, #tpu.memory_space<vmem>>, %arg6: memref<128x128xf32, #tpu.memory_space<vmem>>, %arg7: memref<1x128xf32, #tpu.memory_space<vmem>>, %arg8: memref<128x128xf32, #tpu.memory_space<vmem>>, %arg9: memref<1x128xf32, #tpu.memory_space<vmem>>, %arg10: memref<128x128xf32, #tpu.memory_space<vmem>>, %arg11: memref<1x128xf32, #tpu.memory_space<vmem>>, %arg12: memref<1x128xf32, #tpu.memory_space<vmem>>, %arg13: memref<1x128xf32, #tpu.memory_space<vmem>>, %arg14: memref<1x128x128xf32, #tpu.memory_space<vmem>>, %arg15: memref<128x128xf32, #tpu.memory_space<vmem>>) attributes {dimension_semantics = [#tpu.dimension_semantics<parallel>], iteration_bounds = array<i64: 2>, scalar_prefetch = 0 : i64, scratch_operands = 1 : i64, tpu.core_type = #tpu.core_type<tc>, window_params = [{transform_indices = @transform_0, window_bounds = array<i64: 1, 128, 128>}, {transform_indices = @transform_1, window_bounds = array<i64: 1, 128, 128>}, {transform_indices = @transform_2, window_bounds = array<i64: 1, 128, 128>}, {pipeline_mode = #tpu.pipeline_mode<synchronous>, transform_indices = @transform_3, window_bounds = array<i64: 128, 128>}, {pipeline_mode = #tpu.pipeline_mode<synchronous>, transform_indices = @transform_4, window_bounds = array<i64: 1, 128>}, {pipeline_mode = #tpu.pipeline_mode<synchronous>, transform_indices = @transform_5, window_bounds = array<i64: 128, 128>}, {pipeline_mode = #tpu.pipeline_mode<synchronous>, transform_indices = @transform_6, window_bounds = array<i64: 1, 128>}, {pipeline_mode = #tpu.pipeline_mode<synchronous>, transform_indices = @transform_7, window_bounds = array<i64: 128, 128>}, {pipeline_mode = #tpu.pipeline_mode<synchronous>, transform_indices = @transform_8, window_bounds = array<i64: 1, 128>}, {pipeline_mode = #tpu.pipeline_mode<synchronous>, transform_indices = @transform_9, window_bounds = array<i64: 128, 128>}, {pipeline_mode = #tpu.pipeline_mode<synchronous>, transform_indices = @transform_10, window_bounds = array<i64: 1, 128>}, {pipeline_mode = #tpu.pipeline_mode<synchronous>, transform_indices = @transform_11, window_bounds = array<i64: 1, 128>}, {pipeline_mode = #tpu.pipeline_mode<synchronous>, transform_indices = @transform_12, window_bounds = array<i64: 1, 128>}, {transform_indices = @transform_13, window_bounds = array<i64: 1, 128, 128>}]} {
    %c0 = arith.constant 0 : index
    %c0_0 = arith.constant 0 : index
    %c0_1 = arith.constant 0 : index
    %0 = vector.load %arg1[%c0, %c0_0, %c0_1] : memref<1x128x128xf32, #tpu.memory_space<vmem>>, vector<1x128x128xf32>
    %1 = vector.shape_cast %0 : vector<1x128x128xf32> to vector<128x128xf32>
    %c0_2 = arith.constant 0 : index
    %c0_3 = arith.constant 0 : index
    %c0_4 = arith.constant 0 : index
    %2 = vector.load %arg2[%c0_2, %c0_3, %c0_4] : memref<1x128x128xf32, #tpu.memory_space<vmem>>, vector<1x128x128xf32>
    %3 = vector.shape_cast %2 : vector<1x128x128xf32> to vector<128x128xf32>
    %c0_5 = arith.constant 0 : index
    %c0_6 = arith.constant 0 : index
    %c0_7 = arith.constant 0 : index
    %4 = vector.load %arg3[%c0_5, %c0_6, %c0_7] : memref<1x128x128xf32, #tpu.memory_space<vmem>>, vector<1x128x128xf32>
    %5 = vector.shape_cast %4 : vector<1x128x128xf32> to vector<128x128xf32>
    %c0_8 = arith.constant 0 : index
    %c0_9 = arith.constant 0 : index
    %6 = vector.load %arg4[%c0_8, %c0_9] : memref<128x128xf32, #tpu.memory_space<vmem>>, vector<128x128xf32>
    %cst = arith.constant dense<0.000000e+00> : vector<128x128xf32>
    %7 = tpu.matmul %1, %6, %cst {dimension_numbers = #tpu.dot_dimension_numbers<[1], [0], [0], [1], [0, 0, 1, 1], [], []>} : vector<128x128xf32>, vector<128x128xf32>, vector<128x128xf32> -> vector<128x128xf32>
    %c0_10 = arith.constant 0 : index
    %c0_11 = arith.constant 0 : index
    %8 = vector.load %arg5[%c0_10, %c0_11] : memref<1x128xf32, #tpu.memory_space<vmem>>, vector<1x128xf32>
    %9 = vector.broadcast %8 : vector<1x128xf32> to vector<128x128xf32>
    %10 = arith.addf %7, %9 : vector<128x128xf32>
    %c0_12 = arith.constant 0 : index
    %c0_13 = arith.constant 0 : index
    %11 = vector.load %arg6[%c0_12, %c0_13] : memref<128x128xf32, #tpu.memory_space<vmem>>, vector<128x128xf32>
    %cst_14 = arith.constant dense<0.000000e+00> : vector<128x128xf32>
    %12 = tpu.matmul %3, %11, %cst_14 {dimension_numbers = #tpu.dot_dimension_numbers<[1], [0], [0], [1], [0, 0, 1, 1], [], []>} : vector<128x128xf32>, vector<128x128xf32>, vector<128x128xf32> -> vector<128x128xf32>
    %c0_15 = arith.constant 0 : index
    %c0_16 = arith.constant 0 : index
    %13 = vector.load %arg7[%c0_15, %c0_16] : memref<1x128xf32, #tpu.memory_space<vmem>>, vector<1x128xf32>
    %14 = vector.broadcast %13 : vector<1x128xf32> to vector<128x128xf32>
    %15 = arith.addf %12, %14 : vector<128x128xf32>
    %c0_17 = arith.constant 0 : index
    %c0_18 = arith.constant 0 : index
    %16 = vector.load %arg8[%c0_17, %c0_18] : memref<128x128xf32, #tpu.memory_space<vmem>>, vector<128x128xf32>
    %cst_19 = arith.constant dense<0.000000e+00> : vector<128x128xf32>
    %17 = tpu.matmul %5, %16, %cst_19 {dimension_numbers = #tpu.dot_dimension_numbers<[1], [0], [0], [1], [0, 0, 1, 1], [], []>} : vector<128x128xf32>, vector<128x128xf32>, vector<128x128xf32> -> vector<128x128xf32>
    %c0_20 = arith.constant 0 : index
    %c0_21 = arith.constant 0 : index
    %18 = vector.load %arg9[%c0_20, %c0_21] : memref<1x128xf32, #tpu.memory_space<vmem>>, vector<1x128xf32>
    %19 = vector.broadcast %18 : vector<1x128xf32> to vector<128x128xf32>
    %20 = arith.addf %17, %19 : vector<128x128xf32>
    %c0_22 = arith.constant 0 : index
    %c0_23 = arith.constant 0 : index
    %21 = vector.load %arg10[%c0_22, %c0_23] : memref<128x128xf32, #tpu.memory_space<vmem>>, vector<128x128xf32>
    %c0_24 = arith.constant 0 : index
    %c0_25 = arith.constant 0 : index
    %22 = vector.load %arg11[%c0_24, %c0_25] : memref<1x128xf32, #tpu.memory_space<vmem>>, vector<1x128xf32>
    %c0_26 = arith.constant 0 : index
    %c0_27 = arith.constant 0 : index
    %23 = vector.load %arg12[%c0_26, %c0_27] : memref<1x128xf32, #tpu.memory_space<vmem>>, vector<1x128xf32>
    %c0_28 = arith.constant 0 : index
    %c0_29 = arith.constant 0 : index
    %24 = vector.load %arg13[%c0_28, %c0_29] : memref<1x128xf32, #tpu.memory_space<vmem>>, vector<1x128xf32>
    %cst_30 = arith.constant 3.200000e+01 : f32
    %25 = math.sqrt %cst_30 : f32
    %cst_31 = arith.constant 1.000000e+00 : f32
    %26 = arith.divf %cst_31, %25 : f32
    %27 = vector.extract_strided_slice %10 {offsets = [0, 0], sizes = [128, 32], strides = [1, 1]} : vector<128x128xf32> to vector<128x32xf32>
    %28 = vector.broadcast %26 : f32 to vector<128x32xf32>
    %29 = arith.mulf %27, %28 : vector<128x32xf32>
    %30 = vector.extract_strided_slice %15 {offsets = [0, 0], sizes = [128, 32], strides = [1, 1]} : vector<128x128xf32> to vector<128x32xf32>
    %31 = vector.extract_strided_slice %20 {offsets = [0, 0], sizes = [128, 32], strides = [1, 1]} : vector<128x128xf32> to vector<128x32xf32>
    %cst_32 = arith.constant dense<0.000000e+00> : vector<128x128xf32>
    %32 = tpu.matmul %29, %30, %cst_32 {dimension_numbers = #tpu.dot_dimension_numbers<[1], [1], [0], [0], [0, 0, 1, 0], [], []>} : vector<128x32xf32>, vector<128x32xf32>, vector<128x128xf32> -> vector<128x128xf32>
    %cst_33 = arith.constant dense<0xFF800000> : vector<128xf32>
    %33 = vector.multi_reduction <maximumf>, %32, %cst_33 [1] : vector<128x128xf32> to vector<128xf32>
    %34 = vector.shape_cast %33 : vector<128xf32> to vector<128x1xf32>
    %35 = vector.broadcast %34 : vector<128x1xf32> to vector<128x128xf32>
    %36 = arith.subf %32, %35 : vector<128x128xf32>
    %37 = math.exp %36 : vector<128x128xf32>
    %cst_34 = arith.constant dense<0.000000e+00> : vector<128xf32>
    %38 = vector.multi_reduction <add>, %37, %cst_34 [1] : vector<128x128xf32> to vector<128xf32>
    %39 = vector.shape_cast %38 : vector<128xf32> to vector<128x1xf32>
    %40 = tpu.reciprocal %39 {approx = true} : vector<128x1xf32> -> vector<128x1xf32>
    %cst_35 = arith.constant dense<0.000000e+00> : vector<128x32xf32>
    %41 = tpu.matmul %37, %31, %cst_35 {dimension_numbers = #tpu.dot_dimension_numbers<[1], [0], [0], [1], [0, 0, 1, 1], [], []>} : vector<128x128xf32>, vector<128x32xf32>, vector<128x32xf32> -> vector<128x32xf32>
    %42 = vector.broadcast %40 : vector<128x1xf32> to vector<128x32xf32>
    %43 = arith.mulf %41, %42 : vector<128x32xf32>
    %c0_36 = arith.constant 0 : index
    %c0_37 = arith.constant 0 : index
    %44 = vector.load %arg15[%c0_36, %c0_37] : memref<128x128xf32, #tpu.memory_space<vmem>>, vector<128x32xf32>
    tpu.vector_store %arg15[%c0_36, %c0_37], %43 {strides = array<i32>} : memref<128x128xf32, #tpu.memory_space<vmem>>, vector<128x32xf32>,
    %45 = vector.extract_strided_slice %10 {offsets = [0, 32], sizes = [128, 32], strides = [1, 1]} : vector<128x128xf32> to vector<128x32xf32>
    %46 = vector.broadcast %26 : f32 to vector<128x32xf32>
    %47 = arith.mulf %45, %46 : vector<128x32xf32>
    %48 = vector.extract_strided_slice %15 {offsets = [0, 32], sizes = [128, 32], strides = [1, 1]} : vector<128x128xf32> to vector<128x32xf32>
    %49 = vector.extract_strided_slice %20 {offsets = [0, 32], sizes = [128, 32], strides = [1, 1]} : vector<128x128xf32> to vector<128x32xf32>
    %cst_38 = arith.constant dense<0.000000e+00> : vector<128x128xf32>
    %50 = tpu.matmul %47, %48, %cst_38 {dimension_numbers = #tpu.dot_dimension_numbers<[1], [1], [0], [0], [0, 0, 1, 0], [], []>} : vector<128x32xf32>, vector<128x32xf32>, vector<128x128xf32> -> vector<128x128xf32>
    %cst_39 = arith.constant dense<0xFF800000> : vector<128xf32>
    %51 = vector.multi_reduction <maximumf>, %50, %cst_39 [1] : vector<128x128xf32> to vector<128xf32>
    %52 = vector.shape_cast %51 : vector<128xf32> to vector<128x1xf32>
    %53 = vector.broadcast %52 : vector<128x1xf32> to vector<128x128xf32>
    %54 = arith.subf %50, %53 : vector<128x128xf32>
    %55 = math.exp %54 : vector<128x128xf32>
    %cst_40 = arith.constant dense<0.000000e+00> : vector<128xf32>
    %56 = vector.multi_reduction <add>, %55, %cst_40 [1] : vector<128x128xf32> to vector<128xf32>
    %57 = vector.shape_cast %56 : vector<128xf32> to vector<128x1xf32>
    %58 = tpu.reciprocal %57 {approx = true} : vector<128x1xf32> -> vector<128x1xf32>
    %cst_41 = arith.constant dense<0.000000e+00> : vector<128x32xf32>
    %59 = tpu.matmul %55, %49, %cst_41 {dimension_numbers = #tpu.dot_dimension_numbers<[1], [0], [0], [1], [0, 0, 1, 1], [], []>} : vector<128x128xf32>, vector<128x32xf32>, vector<128x32xf32> -> vector<128x32xf32>
    %60 = vector.broadcast %58 : vector<128x1xf32> to vector<128x32xf32>
    %61 = arith.mulf %59, %60 : vector<128x32xf32>
    %c0_42 = arith.constant 0 : index
    %c32 = arith.constant 32 : index
    %62 = vector.load %arg15[%c0_42, %c32] : memref<128x128xf32, #tpu.memory_space<vmem>>, vector<128x32xf32>
    tpu.vector_store %arg15[%c0_42, %c32], %61 {strides = array<i32>} : memref<128x128xf32, #tpu.memory_space<vmem>>, vector<128x32xf32>,
    %63 = vector.extract_strided_slice %10 {offsets = [0, 64], sizes = [128, 32], strides = [1, 1]} : vector<128x128xf32> to vector<128x32xf32>
    %64 = vector.broadcast %26 : f32 to vector<128x32xf32>
    %65 = arith.mulf %63, %64 : vector<128x32xf32>
    %66 = vector.extract_strided_slice %15 {offsets = [0, 64], sizes = [128, 32], strides = [1, 1]} : vector<128x128xf32> to vector<128x32xf32>
    %67 = vector.extract_strided_slice %20 {offsets = [0, 64], sizes = [128, 32], strides = [1, 1]} : vector<128x128xf32> to vector<128x32xf32>
    %cst_43 = arith.constant dense<0.000000e+00> : vector<128x128xf32>
    %68 = tpu.matmul %65, %66, %cst_43 {dimension_numbers = #tpu.dot_dimension_numbers<[1], [1], [0], [0], [0, 0, 1, 0], [], []>} : vector<128x32xf32>, vector<128x32xf32>, vector<128x128xf32> -> vector<128x128xf32>
    %cst_44 = arith.constant dense<0xFF800000> : vector<128xf32>
    %69 = vector.multi_reduction <maximumf>, %68, %cst_44 [1] : vector<128x128xf32> to vector<128xf32>
    %70 = vector.shape_cast %69 : vector<128xf32> to vector<128x1xf32>
    %71 = vector.broadcast %70 : vector<128x1xf32> to vector<128x128xf32>
    %72 = arith.subf %68, %71 : vector<128x128xf32>
    %73 = math.exp %72 : vector<128x128xf32>
    %cst_45 = arith.constant dense<0.000000e+00> : vector<128xf32>
    %74 = vector.multi_reduction <add>, %73, %cst_45 [1] : vector<128x128xf32> to vector<128xf32>
    %75 = vector.shape_cast %74 : vector<128xf32> to vector<128x1xf32>
    %76 = tpu.reciprocal %75 {approx = true} : vector<128x1xf32> -> vector<128x1xf32>
    %cst_46 = arith.constant dense<0.000000e+00> : vector<128x32xf32>
    %77 = tpu.matmul %73, %67, %cst_46 {dimension_numbers = #tpu.dot_dimension_numbers<[1], [0], [0], [1], [0, 0, 1, 1], [], []>} : vector<128x128xf32>, vector<128x32xf32>, vector<128x32xf32> -> vector<128x32xf32>
    %78 = vector.broadcast %76 : vector<128x1xf32> to vector<128x32xf32>
    %79 = arith.mulf %77, %78 : vector<128x32xf32>
    %c0_47 = arith.constant 0 : index
    %c64 = arith.constant 64 : index
    %80 = vector.load %arg15[%c0_47, %c64] : memref<128x128xf32, #tpu.memory_space<vmem>>, vector<128x32xf32>
    tpu.vector_store %arg15[%c0_47, %c64], %79 {strides = array<i32>} : memref<128x128xf32, #tpu.memory_space<vmem>>, vector<128x32xf32>,
    %81 = vector.extract_strided_slice %10 {offsets = [0, 96], sizes = [128, 32], strides = [1, 1]} : vector<128x128xf32> to vector<128x32xf32>
    %82 = vector.broadcast %26 : f32 to vector<128x32xf32>
    %83 = arith.mulf %81, %82 : vector<128x32xf32>
    %84 = vector.extract_strided_slice %15 {offsets = [0, 96], sizes = [128, 32], strides = [1, 1]} : vector<128x128xf32> to vector<128x32xf32>
    %85 = vector.extract_strided_slice %20 {offsets = [0, 96], sizes = [128, 32], strides = [1, 1]} : vector<128x128xf32> to vector<128x32xf32>
    %cst_48 = arith.constant dense<0.000000e+00> : vector<128x128xf32>
    %86 = tpu.matmul %83, %84, %cst_48 {dimension_numbers = #tpu.dot_dimension_numbers<[1], [1], [0], [0], [0, 0, 1, 0], [], []>} : vector<128x32xf32>, vector<128x32xf32>, vector<128x128xf32> -> vector<128x128xf32>
    %cst_49 = arith.constant dense<0xFF800000> : vector<128xf32>
    %87 = vector.multi_reduction <maximumf>, %86, %cst_49 [1] : vector<128x128xf32> to vector<128xf32>
    %88 = vector.shape_cast %87 : vector<128xf32> to vector<128x1xf32>
    %89 = vector.broadcast %88 : vector<128x1xf32> to vector<128x128xf32>
    %90 = arith.subf %86, %89 : vector<128x128xf32>
    %91 = math.exp %90 : vector<128x128xf32>
    %cst_50 = arith.constant dense<0.000000e+00> : vector<128xf32>
    %92 = vector.multi_reduction <add>, %91, %cst_50 [1] : vector<128x128xf32> to vector<128xf32>
    %93 = vector.shape_cast %92 : vector<128xf32> to vector<128x1xf32>
    %94 = tpu.reciprocal %93 {approx = true} : vector<128x1xf32> -> vector<128x1xf32>
    %cst_51 = arith.constant dense<0.000000e+00> : vector<128x32xf32>
    %95 = tpu.matmul %91, %85, %cst_51 {dimension_numbers = #tpu.dot_dimension_numbers<[1], [0], [0], [1], [0, 0, 1, 1], [], []>} : vector<128x128xf32>, vector<128x32xf32>, vector<128x32xf32> -> vector<128x32xf32>
    %96 = vector.broadcast %94 : vector<128x1xf32> to vector<128x32xf32>
    %97 = arith.mulf %95, %96 : vector<128x32xf32>
    %c0_52 = arith.constant 0 : index
    %c96 = arith.constant 96 : index
    %98 = vector.load %arg15[%c0_52, %c96] : memref<128x128xf32, #tpu.memory_space<vmem>>, vector<128x32xf32>
    tpu.vector_store %arg15[%c0_52, %c96], %97 {strides = array<i32>} : memref<128x128xf32, #tpu.memory_space<vmem>>, vector<128x32xf32>,
    %99 = vector.broadcast %22 : vector<1x128xf32> to vector<128x128xf32>
    %100 = arith.addf %10, %99 : vector<128x128xf32>
    %c0_53 = arith.constant 0 : index
    %c0_54 = arith.constant 0 : index
    %101 = vector.load %arg15[%c0_53, %c0_54] : memref<128x128xf32, #tpu.memory_space<vmem>>, vector<128x128xf32>
    %cst_55 = arith.constant dense<0.000000e+00> : vector<128x128xf32>
    %102 = tpu.matmul %101, %21, %cst_55 {dimension_numbers = #tpu.dot_dimension_numbers<[1], [0], [0], [1], [0, 0, 1, 1], [], []>} : vector<128x128xf32>, vector<128x128xf32>, vector<128x128xf32> -> vector<128x128xf32>
    %103 = arith.addf %100, %102 : vector<128x128xf32>
    %cst_56 = arith.constant dense<0.000000e+00> : vector<128xf32>
    %104 = vector.multi_reduction <add>, %103, %cst_56 [1] : vector<128x128xf32> to vector<128xf32>
    %105 = vector.shape_cast %104 : vector<128xf32> to vector<128x1xf32>
    %cst_57 = arith.constant 1.280000e+02 : f32
    %106 = vector.broadcast %cst_57 : f32 to vector<128x1xf32>
    %107 = arith.divf %105, %106 : vector<128x1xf32>
    %108 = vector.broadcast %107 : vector<128x1xf32> to vector<128x128xf32>
    %109 = arith.subf %103, %108 : vector<128x128xf32>
    %110 = arith.mulf %109, %109 : vector<128x128xf32>
    %cst_58 = arith.constant dense<0.000000e+00> : vector<128xf32>
    %111 = vector.multi_reduction <add>, %110, %cst_58 [1] : vector<128x128xf32> to vector<128xf32>
    %112 = vector.shape_cast %111 : vector<128xf32> to vector<128x1xf32>
    %cst_59 = arith.constant 1.280000e+02 : f32
    %113 = vector.broadcast %cst_59 : f32 to vector<128x1xf32>
    %114 = arith.divf %112, %113 : vector<128x1xf32>
    %115 = vector.broadcast %107 : vector<128x1xf32> to vector<128x128xf32>
    %116 = arith.subf %103, %115 : vector<128x128xf32>
    %cst_60 = arith.constant 9.99999974E-6 : f32
    %117 = vector.broadcast %cst_60 : f32 to vector<128x1xf32>
    %118 = arith.addf %114, %117 : vector<128x1xf32>
    %119 = math.rsqrt %118 : vector<128x1xf32>
    %120 = vector.broadcast %119 : vector<128x1xf32> to vector<128x128xf32>
    %121 = arith.mulf %116, %120 : vector<128x128xf32>
    %122 = vector.broadcast %23 : vector<1x128xf32> to vector<128x128xf32>
    %123 = arith.mulf %121, %122 : vector<128x128xf32>
    %124 = vector.broadcast %24 : vector<1x128xf32> to vector<128x128xf32>
    %125 = arith.addf %123, %124 : vector<128x128xf32>
    %c0_61 = arith.constant 0 : index
    %c0_62 = arith.constant 0 : index
    %c0_63 = arith.constant 0 : index
    %126 = vector.load %arg14[%c0_61, %c0_62, %c0_63] : memref<1x128x128xf32, #tpu.memory_space<vmem>>, vector<1x128x128xf32>
    %127 = vector.shape_cast %126 : vector<1x128x128xf32> to vector<128x128xf32>
    %128 = vector.shape_cast %125 : vector<128x128xf32> to vector<1x128x128xf32>
    tpu.vector_store %arg14[%c0_61, %c0_62, %c0_63], %128 {strides = array<i32>} : memref<1x128x128xf32, #tpu.memory_space<vmem>>, vector<1x128x128xf32>,
    return
  }
  func.func @transform_0(%arg0: i32) -> (i32, i32, i32) {
    %c0_i32 = arith.constant 0 : i32
    %c0_i32_0 = arith.constant 0 : i32
    %c0_i32_1 = arith.constant 0 : i32
    return %arg0, %c0_i32, %c0_i32_0 : i32, i32, i32
  }
  func.func @transform_1(%arg0: i32) -> (i32, i32, i32) {
    %c0_i32 = arith.constant 0 : i32
    %c0_i32_0 = arith.constant 0 : i32
    %c0_i32_1 = arith.constant 0 : i32
    return %arg0, %c0_i32, %c0_i32_0 : i32, i32, i32
  }
  func.func @transform_2(%arg0: i32) -> (i32, i32, i32) {
    %c0_i32 = arith.constant 0 : i32
    %c0_i32_0 = arith.constant 0 : i32
    %c0_i32_1 = arith.constant 0 : i32
    return %arg0, %c0_i32, %c0_i32_0 : i32, i32, i32
  }
  func.func @transform_3(%arg0: i32) -> (i32, i32) {
    %c0_i32 = arith.constant 0 : i32
    %c0_i32_0 = arith.constant 0 : i32
    %c0_i32_1 = arith.constant 0 : i32
    return %c0_i32, %c0_i32_0 : i32, i32
  }
  func.func @transform_4(%arg0: i32) -> (i32, i32) {
    %c0_i32 = arith.constant 0 : i32
    %c0_i32_0 = arith.constant 0 : i32
    %c0_i32_1 = arith.constant 0 : i32
    return %c0_i32, %c0_i32_0 : i32, i32
  }
  func.func @transform_5(%arg0: i32) -> (i32, i32) {
    %c0_i32 = arith.constant 0 : i32
    %c0_i32_0 = arith.constant 0 : i32
    %c0_i32_1 = arith.constant 0 : i32
    return %c0_i32, %c0_i32_0 : i32, i32
  }
  func.func @transform_6(%arg0: i32) -> (i32, i32) {
    %c0_i32 = arith.constant 0 : i32
    %c0_i32_0 = arith.constant 0 : i32
    %c0_i32_1 = arith.constant 0 : i32
    return %c0_i32, %c0_i32_0 : i32, i32
  }
  func.func @transform_7(%arg0: i32) -> (i32, i32) {
    %c0_i32 = arith.constant 0 : i32
    %c0_i32_0 = arith.constant 0 : i32
    %c0_i32_1 = arith.constant 0 : i32
    return %c0_i32, %c0_i32_0 : i32, i32
  }
  func.func @transform_8(%arg0: i32) -> (i32, i32) {
    %c0_i32 = arith.constant 0 : i32
    %c0_i32_0 = arith.constant 0 : i32
    %c0_i32_1 = arith.constant 0 : i32
    return %c0_i32, %c0_i32_0 : i32, i32
  }
  func.func @transform_9(%arg0: i32) -> (i32, i32) {
    %c0_i32 = arith.constant 0 : i32
    %c0_i32_0 = arith.constant 0 : i32
    %c0_i32_1 = arith.constant 0 : i32
    return %c0_i32, %c0_i32_0 : i32, i32
  }
  func.func @transform_10(%arg0: i32) -> (i32, i32) {
    %c0_i32 = arith.constant 0 : i32
    %c0_i32_0 = arith.constant 0 : i32
    %c0_i32_1 = arith.constant 0 : i32
    return %c0_i32, %c0_i32_0 : i32, i32
  }
  func.func @transform_11(%arg0: i32) -> (i32, i32) {
    %c0_i32 = arith.constant 0 : i32
    %c0_i32_0 = arith.constant 0 : i32
    %c0_i32_1 = arith.constant 0 : i32
    return %c0_i32, %c0_i32_0 : i32, i32
  }
  func.func @transform_12(%arg0: i32) -> (i32, i32) {
    %c0_i32 = arith.constant 0 : i32
    %c0_i32_0 = arith.constant 0 : i32
    %c0_i32_1 = arith.constant 0 : i32
    return %c0_i32, %c0_i32_0 : i32, i32
  }
  func.func @transform_13(%arg0: i32) -> (i32, i32, i32) {
    %c0_i32 = arith.constant 0 : i32
    %c0_i32_0 = arith.constant 0 : i32
    %c0_i32_1 = arith.constant 0 : i32
    return %arg0, %c0_i32, %c0_i32_0 : i32, i32, i32
  }
}

</mosaic_0001>

<llo_original>
// kernel: tpu_custom_call.1
$region0: #{tpu_custom_call.1}
  #allocation0 [shape = 'u32[]', space=smem, size = 0x4, offset = 0x4, fixed_abs, tag = 'smem constant byte address 0x4 - core index']
  #allocation1 [shape = 'u32[144,128]{1,0:T(1,128)}', space=vmem, size = 0x12000, scoped, tag = 'internal scratch']
  #allocation2 [shape = 'f32[128,128]{1,0:T(8,128)}', space=vmem, size = 0x10000, scoped, tag = 'scratch operand']
  %s0 = inlined_call_operand.hbm [shape: f32[2,128,128], index: 0, kind: input, shape index: {}]
  %s1 = inlined_call_operand.hbm [shape: f32[2,128,128], index: 1, kind: input, shape index: {}]
  %s2 = inlined_call_operand.hbm [shape: f32[2,128,128], index: 2, kind: input, shape index: {}]
  %s3 = inlined_call_operand.hbm [shape: f32[128,128], index: 3, kind: input, shape index: {}]
  %s4 = inlined_call_operand.vmem [shape: f32[1,128], index: 4, kind: input, shape index: {}]
  %s5 = inlined_call_operand.hbm [shape: f32[128,128], index: 5, kind: input, shape index: {}]
  %s6 = inlined_call_operand.vmem [shape: f32[1,128], index: 6, kind: input, shape index: {}]
  %s7 = inlined_call_operand.hbm [shape: f32[128,128], index: 7, kind: input, shape index: {}]
  %s8 = inlined_call_operand.vmem [shape: f32[1,128], index: 8, kind: input, shape index: {}]
  %s9 = inlined_call_operand.hbm [shape: f32[128,128], index: 9, kind: input, shape index: {}]
  %s10 = inlined_call_operand.vmem [shape: f32[1,128], index: 10, kind: input, shape index: {}]
  %s11 = inlined_call_operand.vmem [shape: f32[1,128], index: 11, kind: input, shape index: {}]
  %s12 = inlined_call_operand.vmem [shape: f32[1,128], index: 12, kind: input, shape index: {}]
  %s13 = inlined_call_operand.hbm [shape: f32[2,128,128], index: 13, kind: output, shape index: {}]
  %s14 = sld [smem:[#allocation0]]
  $region113: #{tpu_custom_call.1} parent=0
    _
  %s16 = ssub.s32 1, %s14
  %s17 = scalar_select 0, %s16, %s14
  $region1: #{tpu_custom_call.1} parent=0
    #allocation3 [shape = 'u8[131072]{0}', space=vmem, size = 0x20000, scoped, tag = 'input window, operand 0']
    #allocation4 [shape = 's32[2]{0}', space=sflag, size = 0x8, scoped, tag = 'scoped memory for tpu_custom_call.1']
    #allocation5 [shape = 's32[2]{0}', space=sflag, size = 0x8, scoped, tag = 'scoped memory for tpu_custom_call.1']
    #allocation6 [shape = 'u8[131072]{0}', space=vmem, size = 0x20000, scoped, tag = 'input window, operand 1']
    #allocation7 [shape = 's32[2]{0}', space=sflag, size = 0x8, scoped, tag = 'scoped memory for tpu_custom_call.1']
    #allocation8 [shape = 'u8[131072]{0}', space=vmem, size = 0x20000, scoped, tag = 'input window, operand 2']
    #allocation9 [shape = 'u8[65536]{0}', space=vmem, size = 0x10000, scoped, tag = 'input window, operand 3, single buffered']
    #allocation10 [shape = 's32[1]{0}', space=sflag, size = 0x4, scoped, tag = 'scoped memory for tpu_custom_call.1']
    #allocation11 [shape = 'u8[65536]{0}', space=vmem, size = 0x10000, scoped, tag = 'input window, operand 5, single buffered']
    #allocation12 [shape = 'u8[65536]{0}', space=vmem, size = 0x10000, scoped, tag = 'input window, operand 7, single buffered']
    #allocation13 [shape = 's32[1]{0}', space=sflag, size = 0x4, scoped, tag = 'scoped memory for tpu_custom_call.1']
    #allocation14 [shape = 'u8[65536]{0}', space=vmem, size = 0x10000, scoped, tag = 'input window, operand 9, single buffered']
    #allocation15 [shape = 'u8[131072]{0}', space=vmem, size = 0x20000, scoped, tag = 'output window, operand 0']
    %18 = vsyncpa [#allocation4], 0
    %s19 = scalar_lea.sflag [#allocation4], 1
    %20 = vsyncpa %s19, 0
    %21 = vsyncpa [#allocation7], 0
    %s22 = scalar_lea.sflag [#allocation7], 1
    %23 = vsyncpa %s22, 0
    %24 = vsyncpa [#allocation10], 0
    %25 = vsyncpa [#allocation13], 0
    %26 = vsyncpa [#allocation5], 0
    %s27 = scalar_lea.sflag [#allocation5], 1
    %28 = vsyncpa %s27, 0
    loop: start=0, step=1, limit=4
    $region2: #{tpu_custom_call.1} parent=1 // loop_pre_header
      _
    $region3: #{tpu_custom_call.1} parent=1 // loop_header
      %s30 = sphi 0, %s34
      %p31 = scmp.ge.s32.totalorder %s30, 4
      %s40 = sphi 0, %s42
      %s43 = sphi 0, %s40
      %s44 = sphi 0, %s43
      %s60 = sphi 0, %s44
      %s66 = sphi 0, %s68
      %s69 = sphi 0, %s66
      %s70 = sphi 0, %s69
      %s86 = sphi 0, %s70
      %s92 = sphi 0, %s94
      %s95 = sphi 0, %s92
      %s96 = sphi 0, %s95
      %s112 = sphi 0, %s96
      %s116 = sphi 0, %s116
      %s118 = sphi 0, %s116
      %s119 = sphi 0, %s118
      %s133 = sphi 0, %s119
      %s137 = sphi 0, %s137
      %s139 = sphi 0, %s137
      %s140 = sphi 0, %s139
      %s154 = sphi 0, %s140
      %s158 = sphi 0, %s158
      %s160 = sphi 0, %s158
      %s161 = sphi 0, %s160
      %s175 = sphi 0, %s161
      %s179 = sphi 0, %s179
      %s181 = sphi 0, %s179
      %s182 = sphi 0, %s181
      %s196 = sphi 0, %s182
      %s200 = sphi 0, %s200
      %s202 = sphi 0, %s200
      %s203 = sphi 0, %s202
      %s217 = sphi 0, %s203
      %s221 = sphi 0, %s221
      %s223 = sphi 0, %s221
      %s224 = sphi 0, %s223
      %s238 = sphi 0, %s224
      %s242 = sphi 0, %s242
      %s244 = sphi 0, %s242
      %s245 = sphi 0, %s244
      %s259 = sphi 0, %s245
      %s263 = sphi 0, %s263
      %s265 = sphi 0, %s263
      %s266 = sphi 0, %s265
      %s280 = sphi 0, %s266
      %s284 = sphi 0, %s284
      %s286 = sphi 0, %s284
      %s287 = sphi 0, %s286
      %s301 = sphi 0, %s287
      %s305 = sphi 0, %s305
      %s307 = sphi 0, %s305
      %s308 = sphi 0, %s307
      %s322 = sphi 0, %s308
      %s328 = sphi 0, %s330
      %s331 = sphi 0, %s328
      %s332 = sphi 0, %s331
      %s348 = sphi 0, %s332
    $region4: #{tpu_custom_call.1} parent=1 // loop_header_branch
      %33 = sbr.rel (%p31) target = $region8
    $region5: #{tpu_custom_call.1} parent=1 // loop_body
      %s35 = ssub.s32 %s30, 1
      %s36 = ssub.s32 %s30, 2
      %s37 = sadd.s32 %s30, 1
      %s38 = ssub.s32 %s30, %s37
      %p39 = scmp.eq.s32.totalorder %s38, 0
      %s41 = sadd.s32 %s40, 1
      %s42 = scalar_select %p39, %s40, %s41
      %p45 = pneg %p39
      %p46 = scmp.eq.s32.totalorder %s30, 1
      %p47 = por %p45, %p46
      %p48 = scmp.ne.s32.totalorder %s40, %s43
      %p49 = scmp.eq.s32.totalorder %s30, 0
      %p50 = por %p48, %p49
      %p51 = scmp.ne.s32.totalorder %s40, %s43
      %p52 = scmp.eq.s32.totalorder %s35, 1
      %p53 = por %p51, %p52
      %p54 = scmp.ne.s32.totalorder %s43, %s44
      %p55 = scmp.eq.s32.totalorder %s35, 0
      %p56 = por %p54, %p55
      %p57 = scmp.ne.s32.totalorder %s43, %s44
      %p58 = scmp.eq.s32.totalorder %s36, 1
      %p59 = por %p57, %p58
      %p61 = scmp.ne.s32.totalorder %s44, %s60
      %p62 = scmp.eq.s32.totalorder %s36, 0
      %p63 = por %p61, %p62
      %s64 = ssub.s32 %s30, %s37
      %p65 = scmp.eq.s32.totalorder %s64, 0
      %s67 = sadd.s32 %s66, 1
      %s68 = scalar_select %p65, %s66, %s67
      %p71 = pneg %p65
      %p72 = scmp.eq.s32.totalorder %s30, 1
      %p73 = por %p71, %p72
      %p74 = scmp.ne.s32.totalorder %s66, %s69
      %p75 = scmp.eq.s32.totalorder %s30, 0
      %p76 = por %p74, %p75
      %p77 = scmp.ne.s32.totalorder %s66, %s69
      %p78 = scmp.eq.s32.totalorder %s35, 1
      %p79 = por %p77, %p78
      %p80 = scmp.ne.s32.totalorder %s69, %s70
      %p81 = scmp.eq.s32.totalorder %s35, 0
      %p82 = por %p80, %p81
      %p83 = scmp.ne.s32.totalorder %s69, %s70
      %p84 = scmp.eq.s32.totalorder %s36, 1
      %p85 = por %p83, %p84
      %p87 = scmp.ne.s32.totalorder %s70, %s86
      %p88 = scmp.eq.s32.totalorder %s36, 0
      %p89 = por %p87, %p88
      %s90 = ssub.s32 %s30, %s37
      %p91 = scmp.eq.s32.totalorder %s90, 0
      %s93 = sadd.s32 %s92, 1
      %s94 = scalar_select %p91, %s92, %s93
      %p97 = pneg %p91
      %p98 = scmp.eq.s32.totalorder %s30, 1
      %p99 = por %p97, %p98
      %p100 = scmp.ne.s32.totalorder %s92, %s95
      %p101 = scmp.eq.s32.totalorder %s30, 0
      %p102 = por %p100, %p101
      %p103 = scmp.ne.s32.totalorder %s92, %s95
      %p104 = scmp.eq.s32.totalorder %s35, 1
      %p105 = por %p103, %p104
      %p106 = scmp.ne.s32.totalorder %s95, %s96
      %p107 = scmp.eq.s32.totalorder %s35, 0
      %p108 = por %p106, %p107
      %p109 = scmp.ne.s32.totalorder %s95, %s96
      %p110 = scmp.eq.s32.totalorder %s36, 1
      %p111 = por %p109, %p110
      %p113 = scmp.ne.s32.totalorder %s96, %s112
      %p114 = scmp.eq.s32.totalorder %s36, 0
      %p115 = por %p113, %p114
      %s117 = sadd.s32 %s116, 1
      %p120 = scmp.eq.s32.totalorder %s30, 1
      %p121 = scmp.ne.s32.totalorder %s116, %s118
      %p122 = scmp.eq.s32.totalorder %s30, 0
      %p123 = por %p121, %p122
      %p124 = scmp.ne.s32.totalorder %s116, %s118
      %p125 = scmp.eq.s32.totalorder %s35, 1
      %p126 = por %p124, %p125
      %p127 = scmp.ne.s32.totalorder %s118, %s119
      %p128 = scmp.eq.s32.totalorder %s35, 0
      %p129 = por %p127, %p128
      %p130 = scmp.ne.s32.totalorder %s118, %s119
      %p131 = scmp.eq.s32.totalorder %s36, 1
      %p132 = por %p130, %p131
      %p134 = scmp.ne.s32.totalorder %s119, %s133
      %p135 = scmp.eq.s32.totalorder %s36, 0
      %p136 = por %p134, %p135
      %s138 = sadd.s32 %s137, 1
      %p141 = scmp.eq.s32.totalorder %s30, 1
      %p142 = scmp.ne.s32.totalorder %s137, %s139
      %p143 = scmp.eq.s32.totalorder %s30, 0
      %p144 = por %p142, %p143
      %p145 = scmp.ne.s32.totalorder %s137, %s139
      %p146 = scmp.eq.s32.totalorder %s35, 1
      %p147 = por %p145, %p146
      %p148 = scmp.ne.s32.totalorder %s139, %s140
      %p149 = scmp.eq.s32.totalorder %s35, 0
      %p150 = por %p148, %p149
      %p151 = scmp.ne.s32.totalorder %s139, %s140
      %p152 = scmp.eq.s32.totalorder %s36, 1
      %p153 = por %p151, %p152
      %p155 = scmp.ne.s32.totalorder %s140, %s154
      %p156 = scmp.eq.s32.totalorder %s36, 0
      %p157 = por %p155, %p156
      %s159 = sadd.s32 %s158, 1
      %p162 = scmp.eq.s32.totalorder %s30, 1
      %p163 = scmp.ne.s32.totalorder %s158, %s160
      %p164 = scmp.eq.s32.totalorder %s30, 0
      %p165 = por %p163, %p164
      %p166 = scmp.ne.s32.totalorder %s158, %s160
      %p167 = scmp.eq.s32.totalorder %s35, 1
      %p168 = por %p166, %p167
      %p169 = scmp.ne.s32.totalorder %s160, %s161
      %p170 = scmp.eq.s32.totalorder %s35, 0
      %p171 = por %p169, %p170
      %p172 = scmp.ne.s32.totalorder %s160, %s161
      %p173 = scmp.eq.s32.totalorder %s36, 1
      %p174 = por %p172, %p173
      %p176 = scmp.ne.s32.totalorder %s161, %s175
      %p177 = scmp.eq.s32.totalorder %s36, 0
      %p178 = por %p176, %p177
      %s180 = sadd.s32 %s179, 1
      %p183 = scmp.eq.s32.totalorder %s30, 1
      %p184 = scmp.ne.s32.totalorder %s179, %s181
      %p185 = scmp.eq.s32.totalorder %s30, 0
      %p186 = por %p184, %p185
      %p187 = scmp.ne.s32.totalorder %s179, %s181
      %p188 = scmp.eq.s32.totalorder %s35, 1
      %p189 = por %p187, %p188
      %p190 = scmp.ne.s32.totalorder %s181, %s182
      %p191 = scmp.eq.s32.totalorder %s35, 0
      %p192 = por %p190, %p191
      %p193 = scmp.ne.s32.totalorder %s181, %s182
      %p194 = scmp.eq.s32.totalorder %s36, 1
      %p195 = por %p193, %p194
      %p197 = scmp.ne.s32.totalorder %s182, %s196
      %p198 = scmp.eq.s32.totalorder %s36, 0
      %p199 = por %p197, %p198
      %s201 = sadd.s32 %s200, 1
      %p204 = scmp.eq.s32.totalorder %s30, 1
      %p205 = scmp.ne.s32.totalorder %s200, %s202
      %p206 = scmp.eq.s32.totalorder %s30, 0
      %p207 = por %p205, %p206
      %p208 = scmp.ne.s32.totalorder %s200, %s202
      %p209 = scmp.eq.s32.totalorder %s35, 1
      %p210 = por %p208, %p209
      %p211 = scmp.ne.s32.totalorder %s202, %s203
      %p212 = scmp.eq.s32.totalorder %s35, 0
      %p213 = por %p211, %p212
      %p214 = scmp.ne.s32.totalorder %s202, %s203
      %p215 = scmp.eq.s32.totalorder %s36, 1
      %p216 = por %p214, %p215
      %p218 = scmp.ne.s32.totalorder %s203, %s217
      %p219 = scmp.eq.s32.totalorder %s36, 0
      %p220 = por %p218, %p219
      %s222 = sadd.s32 %s221, 1
      %p225 = scmp.eq.s32.totalorder %s30, 1
      %p226 = scmp.ne.s32.totalorder %s221, %s223
      %p227 = scmp.eq.s32.totalorder %s30, 0
      %p228 = por %p226, %p227
      %p229 = scmp.ne.s32.totalorder %s221, %s223
      %p230 = scmp.eq.s32.totalorder %s35, 1
      %p231 = por %p229, %p230
      %p232 = scmp.ne.s32.totalorder %s223, %s224
      %p233 = scmp.eq.s32.totalorder %s35, 0
      %p234 = por %p232, %p233
      %p235 = scmp.ne.s32.totalorder %s223, %s224
      %p236 = scmp.eq.s32.totalorder %s36, 1
      %p237 = por %p235, %p236
      %p239 = scmp.ne.s32.totalorder %s224, %s238
      %p240 = scmp.eq.s32.totalorder %s36, 0
      %p241 = por %p239, %p240
      %s243 = sadd.s32 %s242, 1
      %p246 = scmp.eq.s32.totalorder %s30, 1
      %p247 = scmp.ne.s32.totalorder %s242, %s244
      %p248 = scmp.eq.s32.totalorder %s30, 0
      %p249 = por %p247, %p248
      %p250 = scmp.ne.s32.totalorder %s242, %s244
      %p251 = scmp.eq.s32.totalorder %s35, 1
      %p252 = por %p250, %p251
      %p253 = scmp.ne.s32.totalorder %s244, %s245
      %p254 = scmp.eq.s32.totalorder %s35, 0
      %p255 = por %p253, %p254
      %p256 = scmp.ne.s32.totalorder %s244, %s245
      %p257 = scmp.eq.s32.totalorder %s36, 1
      %p258 = por %p256, %p257
      %p260 = scmp.ne.s32.totalorder %s245, %s259
      %p261 = scmp.eq.s32.totalorder %s36, 0
      %p262 = por %p260, %p261
      %s264 = sadd.s32 %s263, 1
      %p267 = scmp.eq.s32.totalorder %s30, 1
      %p268 = scmp.ne.s32.totalorder %s263, %s265
      %p269 = scmp.eq.s32.totalorder %s30, 0
      %p270 = por %p268, %p269
      %p271 = scmp.ne.s32.totalorder %s263, %s265
      %p272 = scmp.eq.s32.totalorder %s35, 1
      %p273 = por %p271, %p272
      %p274 = scmp.ne.s32.totalorder %s265, %s266
      %p275 = scmp.eq.s32.totalorder %s35, 0
      %p276 = por %p274, %p275
      %p277 = scmp.ne.s32.totalorder %s265, %s266
      %p278 = scmp.eq.s32.totalorder %s36, 1
      %p279 = por %p277, %p278
      %p281 = scmp.ne.s32.totalorder %s266, %s280
      %p282 = scmp.eq.s32.totalorder %s36, 0
      %p283 = por %p281, %p282
      %s285 = sadd.s32 %s284, 1
      %p288 = scmp.eq.s32.totalorder %s30, 1
      %p289 = scmp.ne.s32.totalorder %s284, %s286
      %p290 = scmp.eq.s32.totalorder %s30, 0
      %p291 = por %p289, %p290
      %p292 = scmp.ne.s32.totalorder %s284, %s286
      %p293 = scmp.eq.s32.totalorder %s35, 1
      %p294 = por %p292, %p293
      %p295 = scmp.ne.s32.totalorder %s286, %s287
      %p296 = scmp.eq.s32.totalorder %s35, 0
      %p297 = por %p295, %p296
      %p298 = scmp.ne.s32.totalorder %s286, %s287
      %p299 = scmp.eq.s32.totalorder %s36, 1
      %p300 = por %p298, %p299
      %p302 = scmp.ne.s32.totalorder %s287, %s301
      %p303 = scmp.eq.s32.totalorder %s36, 0
      %p304 = por %p302, %p303
      %s306 = sadd.s32 %s305, 1
      %p309 = scmp.eq.s32.totalorder %s30, 1
      %p310 = scmp.ne.s32.totalorder %s305, %s307
      %p311 = scmp.eq.s32.totalorder %s30, 0
      %p312 = por %p310, %p311
      %p313 = scmp.ne.s32.totalorder %s305, %s307
      %p314 = scmp.eq.s32.totalorder %s35, 1
      %p315 = por %p313, %p314
      %p316 = scmp.ne.s32.totalorder %s307, %s308
      %p317 = scmp.eq.s32.totalorder %s35, 0
      %p318 = por %p316, %p317
      %p319 = scmp.ne.s32.totalorder %s307, %s308
      %p320 = scmp.eq.s32.totalorder %s36, 1
      %p321 = por %p319, %p320
      %p323 = scmp.ne.s32.totalorder %s308, %s322
      %p324 = scmp.eq.s32.totalorder %s36, 0
      %p325 = por %p323, %p324
      %s326 = ssub.s32 %s30, %s37
      %p327 = scmp.eq.s32.totalorder %s326, 0
      %s329 = sadd.s32 %s328, 1
      %s330 = scalar_select %p327, %s328, %s329
      %p333 = pneg %p327
      %p334 = scmp.eq.s32.totalorder %s30, 1
      %p335 = por %p333, %p334
      %p336 = scmp.ne.s32.totalorder %s328, %s331
      %p337 = scmp.eq.s32.totalorder %s30, 0
      %p338 = por %p336, %p337
      %p339 = scmp.ne.s32.totalorder %s328, %s331
      %p340 = scmp.eq.s32.totalorder %s35, 1
      %p341 = por %p339, %p340
      %p342 = scmp.ne.s32.totalorder %s331, %s332
      %p343 = scmp.eq.s32.totalorder %s35, 0
      %p344 = por %p342, %p343
      %p345 = scmp.ne.s32.totalorder %s331, %s332
      %p346 = scmp.eq.s32.totalorder %s36, 1
      %p347 = por %p345, %p346
      %p349 = scmp.ne.s32.totalorder %s332, %s348
      %p350 = scmp.eq.s32.totalorder %s36, 0
      %p351 = por %p349, %p350
      %p352 = scmp.le.s32.totalorder 1, %s30
      %p353 = scmp.lt.s32.totalorder %s30, 3
      %p354 = pnand %p352, %p353
      %p355 = pneg %p354
      // Predicated region
      $region9: #{tpu_custom_call.1} parent=5 // pred_check
        _
      $region10: #{tpu_custom_call.1} parent=5 // pred_check_branch
        %357 = sbr.rel (%p354) target = $region12
      $region11: #{tpu_custom_call.1} parent=5 // pred_region
        %s358 = ssub.s32 %s30, 1
        // Predicated region
        $region13: #{tpu_custom_call.1} parent=11 // pred_check
          %p359 = pneg %p129
        $region14: #{tpu_custom_call.1} parent=11 // pred_check_branch
          %361 = sbr.rel (%p359) target = $region16
        $region15: #{tpu_custom_call.1} parent=11 // pred_region
          %s363 = ssub.s32 2048, 2048
          %364 = vsyncadd [#allocation10], %s363
          %s365 = sshll.u32 [#allocation9], 4
          %s366 = int_to_ptr.vmem [resolvable:$true] %s365
          %371 = dma.hbm_to_vmem [thread:$0]  %s3, 2048, %s366, [#allocation10], 128, 128, 8
        $region16: #{tpu_custom_call.1} parent=11 // pred_fallthru
          _
        // Predicated region
        $region17: #{tpu_custom_call.1} parent=11 // pred_check
          %p372 = pneg %p150
        $region18: #{tpu_custom_call.1} parent=11 // pred_check_branch
          %374 = sbr.rel (%p372) target = $region20
        $region19: #{tpu_custom_call.1} parent=11 // pred_region
          _
        $region20: #{tpu_custom_call.1} parent=11 // pred_fallthru
          _
        // Predicated region
        $region21: #{tpu_custom_call.1} parent=11 // pred_check
          %p375 = pneg %p171
        $region22: #{tpu_custom_call.1} parent=11 // pred_check_branch
          %377 = sbr.rel (%p375) target = $region24
        $region23: #{tpu_custom_call.1} parent=11 // pred_region
          %s379 = ssub.s32 2048, 2048
          %380 = vsyncadd [#allocation10], %s379
          %s381 = sshll.u32 [#allocation11], 4
          %s382 = int_to_ptr.vmem [resolvable:$true] %s381
          %387 = dma.hbm_to_vmem [thread:$0]  %s5, 2048, %s382, [#allocation10], 128, 128, 8
        $region24: #{tpu_custom_call.1} parent=11 // pred_fallthru
          _
        // Predicated region
        $region25: #{tpu_custom_call.1} parent=11 // pred_check
          %p388 = pneg %p192
        $region26: #{tpu_custom_call.1} parent=11 // pred_check_branch
          %390 = sbr.rel (%p388) target = $region28
        $region27: #{tpu_custom_call.1} parent=11 // pred_region
          _
        $region28: #{tpu_custom_call.1} parent=11 // pred_fallthru
          _
        // Predicated region
        $region29: #{tpu_custom_call.1} parent=11 // pred_check
          %p391 = pneg %p213
        $region30: #{tpu_custom_call.1} parent=11 // pred_check_branch
          %393 = sbr.rel (%p391) target = $region32
        $region31: #{tpu_custom_call.1} parent=11 // pred_region
          %s395 = ssub.s32 2048, 2048
          %396 = vsyncadd [#allocation13], %s395
          %s397 = sshll.u32 [#allocation12], 4
          %s398 = int_to_ptr.vmem [resolvable:$true] %s397
          %403 = dma.hbm_to_vmem [thread:$0]  %s7, 2048, %s398, [#allocation13], 128, 128, 8
        $region32: #{tpu_custom_call.1} parent=11 // pred_fallthru
          _
        // Predicated region
        $region33: #{tpu_custom_call.1} parent=11 // pred_check
          %p404 = pneg %p234
        $region34: #{tpu_custom_call.1} parent=11 // pred_check_branch
          %406 = sbr.rel (%p404) target = $region36
        $region35: #{tpu_custom_call.1} parent=11 // pred_region
          _
        $region36: #{tpu_custom_call.1} parent=11 // pred_fallthru
          _
        // Predicated region
        $region37: #{tpu_custom_call.1} parent=11 // pred_check
          %p407 = pneg %p255
        $region38: #{tpu_custom_call.1} parent=11 // pred_check_branch
          %409 = sbr.rel (%p407) target = $region40
        $region39: #{tpu_custom_call.1} parent=11 // pred_region
          %s411 = ssub.s32 2048, 2048
          %412 = vsyncadd [#allocation13], %s411
          %s413 = sshll.u32 [#allocation14], 4
          %s414 = int_to_ptr.vmem [resolvable:$true] %s413
          %419 = dma.hbm_to_vmem [thread:$0]  %s9, 2048, %s414, [#allocation13], 128, 128, 8
        $region40: #{tpu_custom_call.1} parent=11 // pred_fallthru
          _
        // Predicated region
        $region41: #{tpu_custom_call.1} parent=11 // pred_check
          %p420 = pneg %p276
        $region42: #{tpu_custom_call.1} parent=11 // pred_check_branch
          %422 = sbr.rel (%p420) target = $region44
        $region43: #{tpu_custom_call.1} parent=11 // pred_region
          _
        $region44: #{tpu_custom_call.1} parent=11 // pred_fallthru
          _
        // Predicated region
        $region45: #{tpu_custom_call.1} parent=11 // pred_check
          %p423 = pneg %p297
        $region46: #{tpu_custom_call.1} parent=11 // pred_check_branch
          %425 = sbr.rel (%p423) target = $region48
        $region47: #{tpu_custom_call.1} parent=11 // pred_region
          _
        $region48: #{tpu_custom_call.1} parent=11 // pred_fallthru
          _
        // Predicated region
        $region49: #{tpu_custom_call.1} parent=11 // pred_check
          %p426 = pneg %p318
        $region50: #{tpu_custom_call.1} parent=11 // pred_check_branch
          %428 = sbr.rel (%p426) target = $region52
        $region51: #{tpu_custom_call.1} parent=11 // pred_region
          _
        $region52: #{tpu_custom_call.1} parent=11 // pred_fallthru
          _
      $region12: #{tpu_custom_call.1} parent=5 // pred_fallthru
        _
      %p429 = scmp.lt.s32.totalorder %s30, 2
      // Predicated region
      $region53: #{tpu_custom_call.1} parent=5 // pred_check
        %p430 = pneg %p429
      $region54: #{tpu_custom_call.1} parent=5 // pred_check_branch
        %432 = sbr.rel (%p430) target = $region56
      $region55: #{tpu_custom_call.1} parent=5 // pred_region
        // Predicated region
        $region57: #{tpu_custom_call.1} parent=55 // pred_check
          %p433 = pneg %p50
        $region58: #{tpu_custom_call.1} parent=55 // pred_check_branch
          %435 = sbr.rel (%p433) target = $region60
        $region59: #{tpu_custom_call.1} parent=55 // pred_region
          %s436 = sand.u32 %s40, 1
          %s437 = scalar_lea.sflag [#allocation4], %s436
          %s438 = sand.u32 %s40, 1
          %s439 = smul.addr %s438, 128
          %s440 = scalar_lea.vmem [#allocation3], %s439
          %s442 = ssub.s32 2048, 2048
          %443 = vsyncadd %s437, %s442
          %s444 = smul.addr %s30, 16
          %s445 = smul.addr %s444, 128
          %s446 = scalar_lea.hbm %s0, %s445
          %s447 = sshll.u32 %s440, 4
          %s448 = int_to_ptr.vmem [resolvable:$true] %s447
          %453 = dma.hbm_to_vmem [thread:$0]  %s446, 2048, %s448, %s437, 128, 128, 8
        $region60: #{tpu_custom_call.1} parent=55 // pred_fallthru
          _
        // Predicated region
        $region61: #{tpu_custom_call.1} parent=55 // pred_check
          %p454 = pneg %p76
        $region62: #{tpu_custom_call.1} parent=55 // pred_check_branch
          %456 = sbr.rel (%p454) target = $region64
        $region63: #{tpu_custom_call.1} parent=55 // pred_region
          %s457 = sand.u32 %s30, 1
          %s458 = scalar_lea.sflag [#allocation7], %s457
          %s459 = sand.u32 %s66, 1
          %s460 = smul.addr %s459, 128
          %s461 = scalar_lea.vmem [#allocation6], %s460
          %s463 = ssub.s32 2048, 2048
          %464 = vsyncadd %s458, %s463
          %s465 = smul.addr %s30, 16
          %s466 = smul.addr %s465, 128
          %s467 = scalar_lea.hbm %s1, %s466
          %s468 = sshll.u32 %s461, 4
          %s469 = int_to_ptr.vmem [resolvable:$true] %s468
          %474 = dma.hbm_to_vmem [thread:$0]  %s467, 2048, %s469, %s458, 128, 128, 8
        $region64: #{tpu_custom_call.1} parent=55 // pred_fallthru
          _
        // Predicated region
        $region65: #{tpu_custom_call.1} parent=55 // pred_check
          %p475 = pneg %p102
        $region66: #{tpu_custom_call.1} parent=55 // pred_check_branch
          %477 = sbr.rel (%p475) target = $region68
        $region67: #{tpu_custom_call.1} parent=55 // pred_region
          %s478 = sand.u32 %s30, 1
          %s479 = scalar_lea.sflag [#allocation7], %s478
          %s480 = sand.u32 %s92, 1
          %s481 = smul.addr %s480, 128
          %s482 = scalar_lea.vmem [#allocation8], %s481
          %s484 = ssub.s32 2048, 2048
          %485 = vsyncadd %s479, %s484
          %s486 = smul.addr %s30, 16
          %s487 = smul.addr %s486, 128
          %s488 = scalar_lea.hbm %s2, %s487
          %s489 = sshll.u32 %s482, 4
          %s490 = int_to_ptr.vmem [resolvable:$true] %s489
          %495 = dma.hbm_to_vmem [thread:$0]  %s488, 2048, %s490, %s479, 128, 128, 8
        $region68: #{tpu_custom_call.1} parent=55 // pred_fallthru
          _
      $region56: #{tpu_custom_call.1} parent=5 // pred_fallthru
        _
      %p496 = scmp.le.s32.totalorder 1, %s30
      %p497 = scmp.lt.s32.totalorder %s30, 3
      %p498 = pnand %p496, %p497
      %p499 = pneg %p498
      // Predicated region
      $region69: #{tpu_custom_call.1} parent=5 // pred_check
        _
      $region70: #{tpu_custom_call.1} parent=5 // pred_check_branch
        %501 = sbr.rel (%p498) target = $region72
      $region71: #{tpu_custom_call.1} parent=5 // pred_region
        %s502 = ssub.s32 %s30, 1
        %s503 = sand.u32 %s43, 1
        %s504 = scalar_lea.sflag [#allocation4], %s503
        %s505 = sand.u32 %s43, 1
        %s506 = smul.addr %s505, 128
        %s507 = scalar_lea.vmem [#allocation3], %s506
        // Predicated region
        $region73: #{tpu_custom_call.1} parent=71 // pred_check
          %p508 = pneg %p56
        $region74: #{tpu_custom_call.1} parent=71 // pred_check_branch
          %510 = sbr.rel (%p508) target = $region76
        $region75: #{tpu_custom_call.1} parent=71 // pred_region
          %511 = dma.done %s504, 2048
        $region76: #{tpu_custom_call.1} parent=71 // pred_fallthru
          _
        %s512 = sand.u32 %s35, 1
        %s513 = scalar_lea.sflag [#allocation7], %s512
        %s514 = sand.u32 %s69, 1
        %s515 = smul.addr %s514, 128
        %s516 = scalar_lea.vmem [#allocation6], %s515
        // Predicated region
        $region77: #{tpu_custom_call.1} parent=71 // pred_check
          %p517 = pneg %p82
        $region78: #{tpu_custom_call.1} parent=71 // pred_check_branch
          %519 = sbr.rel (%p517) target = $region80
        $region79: #{tpu_custom_call.1} parent=71 // pred_region
          %520 = dma.done %s513, 2048
        $region80: #{tpu_custom_call.1} parent=71 // pred_fallthru
          _
        %s521 = sand.u32 %s35, 1
        %s522 = scalar_lea.sflag [#allocation7], %s521
        %s523 = sand.u32 %s95, 1
        %s524 = smul.addr %s523, 128
        %s525 = scalar_lea.vmem [#allocation8], %s524
        // Predicated region
        $region81: #{tpu_custom_call.1} parent=71 // pred_check
          %p526 = pneg %p108
        $region82: #{tpu_custom_call.1} parent=71 // pred_check_branch
          %528 = sbr.rel (%p526) target = $region84
        $region83: #{tpu_custom_call.1} parent=71 // pred_region
          %529 = dma.done %s522, 2048
        $region84: #{tpu_custom_call.1} parent=71 // pred_fallthru
          _
        // Predicated region
        $region85: #{tpu_custom_call.1} parent=71 // pred_check
          %p530 = pneg %p129
        $region86: #{tpu_custom_call.1} parent=71 // pred_check_branch
          %532 = sbr.rel (%p530) target = $region88
        $region87: #{tpu_custom_call.1} parent=71 // pred_region
          %533 = dma.done [#allocation10], 2048
        $region88: #{tpu_custom_call.1} parent=71 // pred_fallthru
          _
        // Predicated region
        $region89: #{tpu_custom_call.1} parent=71 // pred_check
          %p534 = pneg %p171
        $region90: #{tpu_custom_call.1} parent=71 // pred_check_branch
          %536 = sbr.rel (%p534) target = $region92
        $region91: #{tpu_custom_call.1} parent=71 // pred_region
          %537 = dma.done [#allocation10], 2048
        $region92: #{tpu_custom_call.1} parent=71 // pred_fallthru
          _
        // Predicated region
        $region93: #{tpu_custom_call.1} parent=71 // pred_check
          %p538 = pneg %p213
        $region94: #{tpu_custom_call.1} parent=71 // pred_check_branch
          %540 = sbr.rel (%p538) target = $region96
        $region95: #{tpu_custom_call.1} parent=71 // pred_region
          %541 = dma.done [#allocation13], 2048
        $region96: #{tpu_custom_call.1} parent=71 // pred_fallthru
          _
        // Predicated region
        $region97: #{tpu_custom_call.1} parent=71 // pred_check
          %p542 = pneg %p255
        $region98: #{tpu_custom_call.1} parent=71 // pred_check_branch
          %544 = sbr.rel (%p542) target = $region100
        $region99: #{tpu_custom_call.1} parent=71 // pred_region
          %545 = dma.done [#allocation13], 2048
        $region100: #{tpu_custom_call.1} parent=71 // pred_fallthru
          _
        %s546 = sand.u32 %s43, 1
        %s547 = scalar_lea.sflag [#allocation4], %s546
        %s548 = sand.u32 %s43, 1
        %s549 = smul.addr %s548, 128
        %s550 = scalar_lea.vmem [#allocation3], %s549
        %p551 = pneg %p56
        %p552 = pneg %p53
        %s553 = sand.u32 %s35, 1
        %s554 = scalar_lea.sflag [#allocation7], %s553
        %s555 = sand.u32 %s69, 1
        %s556 = smul.addr %s555, 128
        %s557 = scalar_lea.vmem [#allocation6], %s556
        %p558 = pneg %p82
        %p559 = pneg %p79
        %s560 = sand.u32 %s35, 1
        %s561 = scalar_lea.sflag [#allocation7], %s560
        %s562 = sand.u32 %s95, 1
        %s563 = smul.addr %s562, 128
        %s564 = scalar_lea.vmem [#allocation8], %s563
        %p565 = pneg %p108
        %p566 = pneg %p105
        %p567 = pneg %p129
        %p568 = pneg %p126
        %p569 = pneg %p150
        %p570 = pneg %p147
        %p571 = pneg %p171
        %p572 = pneg %p168
        %p573 = pneg %p192
        %p574 = pneg %p189
        %p575 = pneg %p213
        %p576 = pneg %p210
        %p577 = pneg %p234
        %p578 = pneg %p231
        %p579 = pneg %p255
        %p580 = pneg %p252
        %p581 = pneg %p276
        %p582 = pneg %p273
        %p583 = pneg %p297
        %p584 = pneg %p294
        %p585 = pneg %p318
        %p586 = pneg %p315
        %p587 = pneg %p344
        %p588 = pneg %p341
        %s589 = sand.u32 %s331, 1
        %s590 = scalar_lea.sflag [#allocation5], %s589
        %s591 = sand.u32 %s331, 1
        %s592 = smul.addr %s591, 128
        %s593 = scalar_lea.vmem [#allocation15], %s592
        %v594 = vld [vmem:[%s507] sm:$0xff]
        %v595 = vld [vmem:[%s507 + $0x8] sm:$0xff]
        %v596 = vld [vmem:[%s507 + $0x10] sm:$0xff]
        %v597 = vld [vmem:[%s507 + $0x18] sm:$0xff]
        %v598 = vld [vmem:[%s507 + $0x20] sm:$0xff]
        %v599 = vld [vmem:[%s507 + $0x28] sm:$0xff]
        %v600 = vld [vmem:[%s507 + $0x30] sm:$0xff]
        %v601 = vld [vmem:[%s507 + $0x38] sm:$0xff]
        %v602 = vld [vmem:[%s507 + $0x40] sm:$0xff]
        %v603 = vld [vmem:[%s507 + $0x48] sm:$0xff]
        %v604 = vld [vmem:[%s507 + $0x50] sm:$0xff]
        %v605 = vld [vmem:[%s507 + $0x58] sm:$0xff]
        %v606 = vld [vmem:[%s507 + $0x60] sm:$0xff]
        %v607 = vld [vmem:[%s507 + $0x68] sm:$0xff]
        %v608 = vld [vmem:[%s507 + $0x70] sm:$0xff]
        %v609 = vld [vmem:[%s507 + $0x78] sm:$0xff]
        %v610 = vld [vmem:[%s516] sm:$0xff]
        %v611 = vld [vmem:[%s516 + $0x8] sm:$0xff]
        %v612 = vld [vmem:[%s516 + $0x10] sm:$0xff]
        %v613 = vld [vmem:[%s516 + $0x18] sm:$0xff]
        %v614 = vld [vmem:[%s516 + $0x20] sm:$0xff]
        %v615 = vld [vmem:[%s516 + $0x28] sm:$0xff]
        %v616 = vld [vmem:[%s516 + $0x30] sm:$0xff]
        %v617 = vld [vmem:[%s516 + $0x38] sm:$0xff]
        %v618 = vld [vmem:[%s516 + $0x40] sm:$0xff]
        %v619 = vld [vmem:[%s516 + $0x48] sm:$0xff]
        %v620 = vld [vmem:[%s516 + $0x50] sm:$0xff]
        %v621 = vld [vmem:[%s516 + $0x58] sm:$0xff]
        %v622 = vld [vmem:[%s516 + $0x60] sm:$0xff]
        %v623 = vld [vmem:[%s516 + $0x68] sm:$0xff]
        %v624 = vld [vmem:[%s516 + $0x70] sm:$0xff]
        %v625 = vld [vmem:[%s516 + $0x78] sm:$0xff]
        %v626 = vld [vmem:[%s525] sm:$0xff]
        %v627 = vld [vmem:[%s525 + $0x8] sm:$0xff]
        %v628 = vld [vmem:[%s525 + $0x10] sm:$0xff]
        %v629 = vld [vmem:[%s525 + $0x18] sm:$0xff]
        %v630 = vld [vmem:[%s525 + $0x20] sm:$0xff]
        %v631 = vld [vmem:[%s525 + $0x28] sm:$0xff]
        %v632 = vld [vmem:[%s525 + $0x30] sm:$0xff]
        %v633 = vld [vmem:[%s525 + $0x38] sm:$0xff]
        %v634 = vld [vmem:[%s525 + $0x40] sm:$0xff]
        %v635 = vld [vmem:[%s525 + $0x48] sm:$0xff]
        %v636 = vld [vmem:[%s525 + $0x50] sm:$0xff]
        %v637 = vld [vmem:[%s525 + $0x58] sm:$0xff]
        %v638 = vld [vmem:[%s525 + $0x60] sm:$0xff]
        %v639 = vld [vmem:[%s525 + $0x68] sm:$0xff]
        %v640 = vld [vmem:[%s525 + $0x70] sm:$0xff]
        %v641 = vld [vmem:[%s525 + $0x78] sm:$0xff]
        %v642 = vld [vmem:[#allocation9] sm:$0xff]
        %v643 = vld [vmem:[#allocation9 + $0x8] sm:$0xff]
        %v644 = vld [vmem:[#allocation9 + $0x10] sm:$0xff]
        %v645 = vld [vmem:[#allocation9 + $0x18] sm:$0xff]
        %v646 = vld [vmem:[#allocation9 + $0x20] sm:$0xff]
        %v647 = vld [vmem:[#allocation9 + $0x28] sm:$0xff]
        %v648 = vld [vmem:[#allocation9 + $0x30] sm:$0xff]
        %v649 = vld [vmem:[#allocation9 + $0x38] sm:$0xff]
        %v650 = vld [vmem:[#allocation9 + $0x40] sm:$0xff]
        %v651 = vld [vmem:[#allocation9 + $0x48] sm:$0xff]
        %v652 = vld [vmem:[#allocation9 + $0x50] sm:$0xff]
        %v653 = vld [vmem:[#allocation9 + $0x58] sm:$0xff]
        %v654 = vld [vmem:[#allocation9 + $0x60] sm:$0xff]
        %v655 = vld [vmem:[#allocation9 + $0x68] sm:$0xff]
        %v656 = vld [vmem:[#allocation9 + $0x70] sm:$0xff]
        %v657 = vld [vmem:[#allocation9 + $0x78] sm:$0xff]
        %v658 = vld [vmem:[%s4] sm:$0x1]
        %v660 = vlaneseq
        %v661 = vshrl.u32 %v660, 7
        %v662 = vsub.s32 0, %v661
        %v663 = vrot.slane %v658, %v662
        %665 = vmatprep.subr.mxu0 0.0
        %666 = vmatpush1.msra.mxu0 %v657
        %667 = vmatprep.subr.mxu0 0.0
        %668 = vmatpush1.msra.mxu0 %v656
        %669 = vmatprep.subr.mxu0 0.0
        %670 = vmatpush1.msra.mxu0 %v655
        %671 = vmatprep.subr.mxu0 0.0
        %672 = vmatpush1.msra.mxu0 %v654
        %673 = vmatprep.subr.mxu0 0.0
        %674 = vmatpush1.msra.mxu0 %v653
        %675 = vmatprep.subr.mxu0 0.0
        %676 = vmatpush1.msra.mxu0 %v652
        %677 = vmatprep.subr.mxu0 0.0
        %678 = vmatpush1.msra.mxu0 %v651
        %679 = vmatprep.subr.mxu0 0.0
        %680 = vmatpush1.msra.mxu0 %v650
        %681 = vmatprep.subr.mxu0 0.0
        %682 = vmatpush1.msra.mxu0 %v649
        %683 = vmatprep.subr.mxu0 0.0
        %684 = vmatpush1.msra.mxu0 %v648
        %685 = vmatprep.subr.mxu0 0.0
        %686 = vmatpush1.msra.mxu0 %v647
        %687 = vmatprep.subr.mxu0 0.0
        %688 = vmatpush1.msra.mxu0 %v646
        %689 = vmatprep.subr.mxu0 0.0
        %690 = vmatpush1.msra.mxu0 %v645
        %691 = vmatprep.subr.mxu0 0.0
        %692 = vmatpush1.msra.mxu0 %v644
        %693 = vmatprep.subr.mxu0 0.0
        %694 = vmatpush1.msra.mxu0 %v643
        %695 = vmatprep.subr.mxu0 0.0
        %696 = vmatpush1.msra.mxu0 %v642
        %697 = vmatprep.subr.mxu0 0.0
        %698 = vmatpush2.msra.mxu0 0.0
        %699 = vmatprep.subr.mxu0 0.0
        %700 = vmatpush2.msra.mxu0 0.0
        %701 = vmatprep.subr.mxu0 0.0
        %702 = vmatpush2.msra.mxu0 0.0
        %703 = vmatprep.subr.mxu0 0.0
        %704 = vmatpush2.msra.mxu0 0.0
        %705 = vmatprep.subr.mxu0 0.0
        %706 = vmatpush2.msra.mxu0 0.0
        %707 = vmatprep.subr.mxu0 0.0
        %708 = vmatpush2.msra.mxu0 0.0
        %709 = vmatprep.subr.mxu0 0.0
        %710 = vmatpush2.msra.mxu0 0.0
        %711 = vmatprep.subr.mxu0 0.0
        %712 = vmatpush2.msra.mxu0 0.0
        %713 = vmatprep.subr.mxu0 0.0
        %714 = vmatpush2.msra.mxu0 0.0
        %715 = vmatprep.subr.mxu0 0.0
        %716 = vmatpush2.msra.mxu0 0.0
        %717 = vmatprep.subr.mxu0 0.0
        %718 = vmatpush2.msra.mxu0 0.0
        %719 = vmatprep.subr.mxu0 0.0
        %720 = vmatpush2.msra.mxu0 0.0
        %721 = vmatprep.subr.mxu0 0.0
        %722 = vmatpush2.msra.mxu0 0.0
        %723 = vmatprep.subr.mxu0 0.0
        %724 = vmatpush2.msra.mxu0 0.0
        %725 = vmatprep.subr.mxu0 0.0
        %726 = vmatpush2.msra.mxu0 0.0
        %727 = vmatprep.subr.mxu0 0.0
        %728 = vmatpush2.msra.mxu0 0.0
        %729 = vmatprep.mubr.f32.mxu0 0.0
        %730 = vmatmul.mubr.f32.gmra.mxu0 %v594
        %v731 = vpop.f32.mrf.mxu0
        %v732 = vadd.f32 %v663, %v731
        %v733 = vpop.f32.mrf.mxu0
        %734 = vmatprep.mubr.f32.mxu0 0.0
        %735 = vmatmul.mubr.f32.gmra.mxu0 %v595
        %v736 = vpop.f32.mrf.mxu0
        %v737 = vadd.f32 %v663, %v736
        %v738 = vpop.f32.mrf.mxu0
        %739 = vmatprep.mubr.f32.mxu0 0.0
        %740 = vmatmul.mubr.f32.gmra.mxu0 %v596
        %v741 = vpop.f32.mrf.mxu0
        %v742 = vadd.f32 %v663, %v741
        %v743 = vpop.f32.mrf.mxu0
        %744 = vmatprep.mubr.f32.mxu0 0.0
        %745 = vmatmul.mubr.f32.gmra.mxu0 %v597
        %v746 = vpop.f32.mrf.mxu0
        %v747 = vadd.f32 %v663, %v746
        %v748 = vpop.f32.mrf.mxu0
        %749 = vmatprep.mubr.f32.mxu0 0.0
        %750 = vmatmul.mubr.f32.gmra.mxu0 %v598
        %v751 = vpop.f32.mrf.mxu0
        %v752 = vadd.f32 %v663, %v751
        %v753 = vpop.f32.mrf.mxu0
        %754 = vmatprep.mubr.f32.mxu0 0.0
        %755 = vmatmul.mubr.f32.gmra.mxu0 %v599
        %v756 = vpop.f32.mrf.mxu0
        %v757 = vadd.f32 %v663, %v756
        %v758 = vpop.f32.mrf.mxu0
        %759 = vmatprep.mubr.f32.mxu0 0.0
        %760 = vmatmul.mubr.f32.gmra.mxu0 %v600
        %v761 = vpop.f32.mrf.mxu0
        %v762 = vadd.f32 %v663, %v761
        %v763 = vpop.f32.mrf.mxu0
        %764 = vmatprep.mubr.f32.mxu0 0.0
        %765 = vmatmul.mubr.f32.gmra.mxu0 %v601
        %v766 = vpop.f32.mrf.mxu0
        %v767 = vadd.f32 %v663, %v766
        %v768 = vpop.f32.mrf.mxu0
        %769 = vmatprep.mubr.f32.mxu0 0.0
        %770 = vmatmul.mubr.f32.gmra.mxu0 %v602
        %v771 = vpop.f32.mrf.mxu0
        %v772 = vadd.f32 %v663, %v771
        %v773 = vpop.f32.mrf.mxu0
        %774 = vmatprep.mubr.f32.mxu0 0.0
        %775 = vmatmul.mubr.f32.gmra.mxu0 %v603
        %v776 = vpop.f32.mrf.mxu0
        %v777 = vadd.f32 %v663, %v776
        %v778 = vpop.f32.mrf.mxu0
        %779 = vmatprep.mubr.f32.mxu0 0.0
        %780 = vmatmul.mubr.f32.gmra.mxu0 %v604
        %v781 = vpop.f32.mrf.mxu0
        %v782 = vadd.f32 %v663, %v781
        %v783 = vpop.f32.mrf.mxu0
        %784 = vmatprep.mubr.f32.mxu0 0.0
        %785 = vmatmul.mubr.f32.gmra.mxu0 %v605
        %v786 = vpop.f32.mrf.mxu0
        %v787 = vadd.f32 %v663, %v786
        %v788 = vpop.f32.mrf.mxu0
        %789 = vmatprep.mubr.f32.mxu0 0.0
        %790 = vmatmul.mubr.f32.gmra.mxu0 %v606
        %v791 = vpop.f32.mrf.mxu0
        %v792 = vadd.f32 %v663, %v791
        %v793 = vpop.f32.mrf.mxu0
        %794 = vmatprep.mubr.f32.mxu0 0.0
        %795 = vmatmul.mubr.f32.gmra.mxu0 %v607
        %v796 = vpop.f32.mrf.mxu0
        %v797 = vadd.f32 %v663, %v796
        %v798 = vpop.f32.mrf.mxu0
        %799 = vmatprep.mubr.f32.mxu0 0.0
        %800 = vmatmul.mubr.f32.gmra.mxu0 %v608
        %v801 = vpop.f32.mrf.mxu0
        %v802 = vadd.f32 %v663, %v801
        %v803 = vpop.f32.mrf.mxu0
        %804 = vmatprep.mubr.f32.mxu0 0.0
        %805 = vmatmul.mubr.f32.gmra.mxu0 %v609
        %v806 = vpop.f32.mrf.mxu0
        %v807 = vadd.f32 %v663, %v806
        %v808 = vpop.f32.mrf.mxu0
        %809 = vdwg.mxu0
        %v810 = vld [vmem:[#allocation11] sm:$0xff]
        %v811 = vld [vmem:[#allocation11 + $0x8] sm:$0xff]
        %v812 = vld [vmem:[#allocation11 + $0x10] sm:$0xff]
        %v813 = vld [vmem:[#allocation11 + $0x18] sm:$0xff]
        %v814 = vld [vmem:[#allocation11 + $0x20] sm:$0xff]
        %v815 = vld [vmem:[#allocation11 + $0x28] sm:$0xff]
        %v816 = vld [vmem:[#allocation11 + $0x30] sm:$0xff]
        %v817 = vld [vmem:[#allocation11 + $0x38] sm:$0xff]
        %v818 = vld [vmem:[#allocation11 + $0x40] sm:$0xff]
        %v819 = vld [vmem:[#allocation11 + $0x48] sm:$0xff]
        %v820 = vld [vmem:[#allocation11 + $0x50] sm:$0xff]
        %v821 = vld [vmem:[#allocation11 + $0x58] sm:$0xff]
        %v822 = vld [vmem:[#allocation11 + $0x60] sm:$0xff]
        %v823 = vld [vmem:[#allocation11 + $0x68] sm:$0xff]
        %v824 = vld [vmem:[#allocation11 + $0x70] sm:$0xff]
        %v825 = vld [vmem:[#allocation11 + $0x78] sm:$0xff]
        %v826 = vld [vmem:[%s6] sm:$0x1]
        %v828 = vlaneseq
        %v829 = vshrl.u32 %v828, 7
        %v830 = vsub.s32 0, %v829
        %v831 = vrot.slane %v826, %v830
        %833 = vmatprep.subr.mxu0 0.0
        %834 = vmatpush1.msra.mxu0 %v825
        %835 = vmatprep.subr.mxu0 0.0
        %836 = vmatpush1.msra.mxu0 %v824
        %837 = vmatprep.subr.mxu0 0.0
        %838 = vmatpush1.msra.mxu0 %v823
        %839 = vmatprep.subr.mxu0 0.0
        %840 = vmatpush1.msra.mxu0 %v822
        %841 = vmatprep.subr.mxu0 0.0
        %842 = vmatpush1.msra.mxu0 %v821
        %843 = vmatprep.subr.mxu0 0.0
        %844 = vmatpush1.msra.mxu0 %v820
        %845 = vmatprep.subr.mxu0 0.0
        %846 = vmatpush1.msra.mxu0 %v819
        %847 = vmatprep.subr.mxu0 0.0
        %848 = vmatpush1.msra.mxu0 %v818
        %849 = vmatprep.subr.mxu0 0.0
        %850 = vmatpush1.msra.mxu0 %v817
        %851 = vmatprep.subr.mxu0 0.0
        %852 = vmatpush1.msra.mxu0 %v816
        %853 = vmatprep.subr.mxu0 0.0
        %854 = vmatpush1.msra.mxu0 %v815
        %855 = vmatprep.subr.mxu0 0.0
        %856 = vmatpush1.msra.mxu0 %v814
        %857 = vmatprep.subr.mxu0 0.0
        %858 = vmatpush1.msra.mxu0 %v813
        %859 = vmatprep.subr.mxu0 0.0
        %860 = vmatpush1.msra.mxu0 %v812
        %861 = vmatprep.subr.mxu0 0.0
        %862 = vmatpush1.msra.mxu0 %v811
        %863 = vmatprep.subr.mxu0 0.0
        %864 = vmatpush1.msra.mxu0 %v810
        %865 = vmatprep.subr.mxu0 0.0
        %866 = vmatpush2.msra.mxu0 0.0
        %867 = vmatprep.subr.mxu0 0.0
        %868 = vmatpush2.msra.mxu0 0.0
        %869 = vmatprep.subr.mxu0 0.0
        %870 = vmatpush2.msra.mxu0 0.0
        %871 = vmatprep.subr.mxu0 0.0
        %872 = vmatpush2.msra.mxu0 0.0
        %873 = vmatprep.subr.mxu0 0.0
        %874 = vmatpush2.msra.mxu0 0.0
        %875 = vmatprep.subr.mxu0 0.0
        %876 = vmatpush2.msra.mxu0 0.0
        %877 = vmatprep.subr.mxu0 0.0
        %878 = vmatpush2.msra.mxu0 0.0
        %879 = vmatprep.subr.mxu0 0.0
        %880 = vmatpush2.msra.mxu0 0.0
        %881 = vmatprep.subr.mxu0 0.0
        %882 = vmatpush2.msra.mxu0 0.0
        %883 = vmatprep.subr.mxu0 0.0
        %884 = vmatpush2.msra.mxu0 0.0
        %885 = vmatprep.subr.mxu0 0.0
        %886 = vmatpush2.msra.mxu0 0.0
        %887 = vmatprep.subr.mxu0 0.0
        %888 = vmatpush2.msra.mxu0 0.0
        %889 = vmatprep.subr.mxu0 0.0
        %890 = vmatpush2.msra.mxu0 0.0
        %891 = vmatprep.subr.mxu0 0.0
        %892 = vmatpush2.msra.mxu0 0.0
        %893 = vmatprep.subr.mxu0 0.0
        %894 = vmatpush2.msra.mxu0 0.0
        %895 = vmatprep.subr.mxu0 0.0
        %896 = vmatpush2.msra.mxu0 0.0
        %897 = vmatprep.mubr.f32.mxu0 0.0
        %898 = vmatmul.mubr.f32.gmra.mxu0 %v610
        %v899 = vpop.f32.mrf.mxu0
        %v900 = vadd.f32 %v831, %v899
        %v901 = vpop.f32.mrf.mxu0
        %902 = vmatprep.mubr.f32.mxu0 0.0
        %903 = vmatmul.mubr.f32.gmra.mxu0 %v611
        %v904 = vpop.f32.mrf.mxu0
        %v905 = vadd.f32 %v831, %v904
        %v906 = vpop.f32.mrf.mxu0
        %907 = vmatprep.mubr.f32.mxu0 0.0
        %908 = vmatmul.mubr.f32.gmra.mxu0 %v612
        %v909 = vpop.f32.mrf.mxu0
        %v910 = vadd.f32 %v831, %v909
        %v911 = vpop.f32.mrf.mxu0
        %912 = vmatprep.mubr.f32.mxu0 0.0
        %913 = vmatmul.mubr.f32.gmra.mxu0 %v613
        %v914 = vpop.f32.mrf.mxu0
        %v915 = vadd.f32 %v831, %v914
        %v916 = vpop.f32.mrf.mxu0
        %917 = vmatprep.mubr.f32.mxu0 0.0
        %918 = vmatmul.mubr.f32.gmra.mxu0 %v614
        %v919 = vpop.f32.mrf.mxu0
        %v920 = vadd.f32 %v831, %v919
        %v921 = vpop.f32.mrf.mxu0
        %922 = vmatprep.mubr.f32.mxu0 0.0
        %923 = vmatmul.mubr.f32.gmra.mxu0 %v615
        %v924 = vpop.f32.mrf.mxu0
        %v925 = vadd.f32 %v831, %v924
        %v926 = vpop.f32.mrf.mxu0
        %927 = vmatprep.mubr.f32.mxu0 0.0
        %928 = vmatmul.mubr.f32.gmra.mxu0 %v616
        %v929 = vpop.f32.mrf.mxu0
        %v930 = vadd.f32 %v831, %v929
        %v931 = vpop.f32.mrf.mxu0
        %932 = vmatprep.mubr.f32.mxu0 0.0
        %933 = vmatmul.mubr.f32.gmra.mxu0 %v617
        %v934 = vpop.f32.mrf.mxu0
        %v935 = vadd.f32 %v831, %v934
        %v936 = vpop.f32.mrf.mxu0
        %937 = vmatprep.mubr.f32.mxu0 0.0
        %938 = vmatmul.mubr.f32.gmra.mxu0 %v618
        %v939 = vpop.f32.mrf.mxu0
        %v940 = vadd.f32 %v831, %v939
        %v941 = vpop.f32.mrf.mxu0
        %942 = vmatprep.mubr.f32.mxu0 0.0
        %943 = vmatmul.mubr.f32.gmra.mxu0 %v619
        %v944 = vpop.f32.mrf.mxu0
        %v945 = vadd.f32 %v831, %v944
        %v946 = vpop.f32.mrf.mxu0
        %947 = vmatprep.mubr.f32.mxu0 0.0
        %948 = vmatmul.mubr.f32.gmra.mxu0 %v620
        %v949 = vpop.f32.mrf.mxu0
        %v950 = vadd.f32 %v831, %v949
        %v951 = vpop.f32.mrf.mxu0
        %952 = vmatprep.mubr.f32.mxu0 0.0
        %953 = vmatmul.mubr.f32.gmra.mxu0 %v621
        %v954 = vpop.f32.mrf.mxu0
        %v955 = vadd.f32 %v831, %v954
        %v956 = vpop.f32.mrf.mxu0
        %957 = vmatprep.mubr.f32.mxu0 0.0
        %958 = vmatmul.mubr.f32.gmra.mxu0 %v622
        %v959 = vpop.f32.mrf.mxu0
        %v960 = vadd.f32 %v831, %v959
        %v961 = vpop.f32.mrf.mxu0
        %962 = vmatprep.mubr.f32.mxu0 0.0
        %963 = vmatmul.mubr.f32.gmra.mxu0 %v623
        %v964 = vpop.f32.mrf.mxu0
        %v965 = vadd.f32 %v831, %v964
        %v966 = vpop.f32.mrf.mxu0
        %967 = vmatprep.mubr.f32.mxu0 0.0
        %968 = vmatmul.mubr.f32.gmra.mxu0 %v624
        %v969 = vpop.f32.mrf.mxu0
        %v970 = vadd.f32 %v831, %v969
        %v971 = vpop.f32.mrf.mxu0
        %972 = vmatprep.mubr.f32.mxu0 0.0
        %973 = vmatmul.mubr.f32.gmra.mxu0 %v625
        %v974 = vpop.f32.mrf.mxu0
        %v975 = vadd.f32 %v831, %v974
        %v976 = vpop.f32.mrf.mxu0
        %977 = vdwg.mxu0
        %v978 = vld [vmem:[#allocation12] sm:$0xff]
        %v979 = vld [vmem:[#allocation12 + $0x8] sm:$0xff]
        %v980 = vld [vmem:[#allocation12 + $0x10] sm:$0xff]
        %v981 = vld [vmem:[#allocation12 + $0x18] sm:$0xff]
        %v982 = vld [vmem:[#allocation12 + $0x20] sm:$0xff]
        %v983 = vld [vmem:[#allocation12 + $0x28] sm:$0xff]
        %v984 = vld [vmem:[#allocation12 + $0x30] sm:$0xff]
        %v985 = vld [vmem:[#allocation12 + $0x38] sm:$0xff]
        %v986 = vld [vmem:[#allocation12 + $0x40] sm:$0xff]
        %v987 = vld [vmem:[#allocation12 + $0x48] sm:$0xff]
        %v988 = vld [vmem:[#allocation12 + $0x50] sm:$0xff]
        %v989 = vld [vmem:[#allocation12 + $0x58] sm:$0xff]
        %v990 = vld [vmem:[#allocation12 + $0x60] sm:$0xff]
        %v991 = vld [vmem:[#allocation12 + $0x68] sm:$0xff]
        %v992 = vld [vmem:[#allocation12 + $0x70] sm:$0xff]
        %v993 = vld [vmem:[#allocation12 + $0x78] sm:$0xff]
        %v994 = vld [vmem:[%s8] sm:$0x1]
        %v996 = vlaneseq
        %v997 = vshrl.u32 %v996, 7
        %v998 = vsub.s32 0, %v997
        %v999 = vrot.slane %v994, %v998
        %1001 = vmatprep.subr.mxu0 0.0
        %1002 = vmatpush1.msra.mxu0 %v993
        %1003 = vmatprep.subr.mxu0 0.0
        %1004 = vmatpush1.msra.mxu0 %v992
        %1005 = vmatprep.subr.mxu0 0.0
        %1006 = vmatpush1.msra.mxu0 %v991
        %1007 = vmatprep.subr.mxu0 0.0
        %1008 = vmatpush1.msra.mxu0 %v990
        %1009 = vmatprep.subr.mxu0 0.0
        %1010 = vmatpush1.msra.mxu0 %v989
        %1011 = vmatprep.subr.mxu0 0.0
        %1012 = vmatpush1.msra.mxu0 %v988
        %1013 = vmatprep.subr.mxu0 0.0
        %1014 = vmatpush1.msra.mxu0 %v987
        %1015 = vmatprep.subr.mxu0 0.0
        %1016 = vmatpush1.msra.mxu0 %v986
        %1017 = vmatprep.subr.mxu0 0.0
        %1018 = vmatpush1.msra.mxu0 %v985
        %1019 = vmatprep.subr.mxu0 0.0
        %1020 = vmatpush1.msra.mxu0 %v984
        %1021 = vmatprep.subr.mxu0 0.0
        %1022 = vmatpush1.msra.mxu0 %v983
        %1023 = vmatprep.subr.mxu0 0.0
        %1024 = vmatpush1.msra.mxu0 %v982
        %1025 = vmatprep.subr.mxu0 0.0
        %1026 = vmatpush1.msra.mxu0 %v981
        %1027 = vmatprep.subr.mxu0 0.0
        %1028 = vmatpush1.msra.mxu0 %v980
        %1029 = vmatprep.subr.mxu0 0.0
        %1030 = vmatpush1.msra.mxu0 %v979
        %1031 = vmatprep.subr.mxu0 0.0
        %1032 = vmatpush1.msra.mxu0 %v978
        %1033 = vmatprep.subr.mxu0 0.0
        %1034 = vmatpush2.msra.mxu0 0.0
        %1035 = vmatprep.subr.mxu0 0.0
        %1036 = vmatpush2.msra.mxu0 0.0
        %1037 = vmatprep.subr.mxu0 0.0
        %1038 = vmatpush2.msra.mxu0 0.0
        %1039 = vmatprep.subr.mxu0 0.0
        %1040 = vmatpush2.msra.mxu0 0.0
        %1041 = vmatprep.subr.mxu0 0.0
        %1042 = vmatpush2.msra.mxu0 0.0
        %1043 = vmatprep.subr.mxu0 0.0
        %1044 = vmatpush2.msra.mxu0 0.0
        %1045 = vmatprep.subr.mxu0 0.0
        %1046 = vmatpush2.msra.mxu0 0.0
        %1047 = vmatprep.subr.mxu0 0.0
        %1048 = vmatpush2.msra.mxu0 0.0
        %1049 = vmatprep.subr.mxu0 0.0
        %1050 = vmatpush2.msra.mxu0 0.0
        %1051 = vmatprep.subr.mxu0 0.0
        %1052 = vmatpush2.msra.mxu0 0.0
        %1053 = vmatprep.subr.mxu0 0.0
        %1054 = vmatpush2.msra.mxu0 0.0
        %1055 = vmatprep.subr.mxu0 0.0
        %1056 = vmatpush2.msra.mxu0 0.0
        %1057 = vmatprep.subr.mxu0 0.0
        %1058 = vmatpush2.msra.mxu0 0.0
        %1059 = vmatprep.subr.mxu0 0.0
        %1060 = vmatpush2.msra.mxu0 0.0
        %1061 = vmatprep.subr.mxu0 0.0
        %1062 = vmatpush2.msra.mxu0 0.0
        %1063 = vmatprep.subr.mxu0 0.0
        %1064 = vmatpush2.msra.mxu0 0.0
        %1065 = vmatprep.mubr.f32.mxu0 0.0
        %1066 = vmatmul.mubr.f32.gmra.mxu0 %v626
        %v1067 = vpop.f32.mrf.mxu0
        %v1068 = vadd.f32 %v999, %v1067
        %v1069 = vpop.f32.mrf.mxu0
        %1070 = vmatprep.mubr.f32.mxu0 0.0
        %1071 = vmatmul.mubr.f32.gmra.mxu0 %v627
        %v1072 = vpop.f32.mrf.mxu0
        %v1073 = vadd.f32 %v999, %v1072
        %v1074 = vpop.f32.mrf.mxu0
        %1075 = vmatprep.mubr.f32.mxu0 0.0
        %1076 = vmatmul.mubr.f32.gmra.mxu0 %v628
        %v1077 = vpop.f32.mrf.mxu0
        %v1078 = vadd.f32 %v999, %v1077
        %v1079 = vpop.f32.mrf.mxu0
        %1080 = vmatprep.mubr.f32.mxu0 0.0
        %1081 = vmatmul.mubr.f32.gmra.mxu0 %v629
        %v1082 = vpop.f32.mrf.mxu0
        %v1083 = vadd.f32 %v999, %v1082
        %v1084 = vpop.f32.mrf.mxu0
        %1085 = vmatprep.mubr.f32.mxu0 0.0
        %1086 = vmatmul.mubr.f32.gmra.mxu0 %v630
        %v1087 = vpop.f32.mrf.mxu0
        %v1088 = vadd.f32 %v999, %v1087
        %v1089 = vpop.f32.mrf.mxu0
        %1090 = vmatprep.mubr.f32.mxu0 0.0
        %1091 = vmatmul.mubr.f32.gmra.mxu0 %v631
        %v1092 = vpop.f32.mrf.mxu0
        %v1093 = vadd.f32 %v999, %v1092
        %v1094 = vpop.f32.mrf.mxu0
        %1095 = vmatprep.mubr.f32.mxu0 0.0
        %1096 = vmatmul.mubr.f32.gmra.mxu0 %v632
        %v1097 = vpop.f32.mrf.mxu0
        %v1098 = vadd.f32 %v999, %v1097
        %v1099 = vpop.f32.mrf.mxu0
        %1100 = vmatprep.mubr.f32.mxu0 0.0
        %1101 = vmatmul.mubr.f32.gmra.mxu0 %v633
        %v1102 = vpop.f32.mrf.mxu0
        %v1103 = vadd.f32 %v999, %v1102
        %v1104 = vpop.f32.mrf.mxu0
        %1105 = vmatprep.mubr.f32.mxu0 0.0
        %1106 = vmatmul.mubr.f32.gmra.mxu0 %v634
        %v1107 = vpop.f32.mrf.mxu0
        %v1108 = vadd.f32 %v999, %v1107
        %v1109 = vpop.f32.mrf.mxu0
        %1110 = vmatprep.mubr.f32.mxu0 0.0
        %1111 = vmatmul.mubr.f32.gmra.mxu0 %v635
        %v1112 = vpop.f32.mrf.mxu0
        %v1113 = vadd.f32 %v999, %v1112
        %v1114 = vpop.f32.mrf.mxu0
        %1115 = vmatprep.mubr.f32.mxu0 0.0
        %1116 = vmatmul.mubr.f32.gmra.mxu0 %v636
        %v1117 = vpop.f32.mrf.mxu0
        %v1118 = vadd.f32 %v999, %v1117
        %v1119 = vpop.f32.mrf.mxu0
        %1120 = vmatprep.mubr.f32.mxu0 0.0
        %1121 = vmatmul.mubr.f32.gmra.mxu0 %v637
        %v1122 = vpop.f32.mrf.mxu0
        %v1123 = vadd.f32 %v999, %v1122
        %v1124 = vpop.f32.mrf.mxu0
        %1125 = vmatprep.mubr.f32.mxu0 0.0
        %1126 = vmatmul.mubr.f32.gmra.mxu0 %v638
        %v1127 = vpop.f32.mrf.mxu0
        %v1128 = vadd.f32 %v999, %v1127
        %v1129 = vpop.f32.mrf.mxu0
        %1130 = vmatprep.mubr.f32.mxu0 0.0
        %1131 = vmatmul.mubr.f32.gmra.mxu0 %v639
        %v1132 = vpop.f32.mrf.mxu0
        %v1133 = vadd.f32 %v999, %v1132
        %v1134 = vpop.f32.mrf.mxu0
        %1135 = vmatprep.mubr.f32.mxu0 0.0
        %1136 = vmatmul.mubr.f32.gmra.mxu0 %v640
        %v1137 = vpop.f32.mrf.mxu0
        %v1138 = vadd.f32 %v999, %v1137
        %v1139 = vpop.f32.mrf.mxu0
        %1140 = vmatprep.mubr.f32.mxu0 0.0
        %1141 = vmatmul.mubr.f32.gmra.mxu0 %v641
        %v1142 = vpop.f32.mrf.mxu0
        %v1143 = vadd.f32 %v999, %v1142
        %v1144 = vpop.f32.mrf.mxu0
        %1145 = vdwg.mxu0
        %v1146 = vld [vmem:[#allocation14] sm:$0xff]
        %v1147 = vld [vmem:[#allocation14 + $0x8] sm:$0xff]
        %v1148 = vld [vmem:[#allocation14 + $0x10] sm:$0xff]
        %v1149 = vld [vmem:[#allocation14 + $0x18] sm:$0xff]
        %v1150 = vld [vmem:[#allocation14 + $0x20] sm:$0xff]
        %v1151 = vld [vmem:[#allocation14 + $0x28] sm:$0xff]
        %v1152 = vld [vmem:[#allocation14 + $0x30] sm:$0xff]
        %v1153 = vld [vmem:[#allocation14 + $0x38] sm:$0xff]
        %v1154 = vld [vmem:[#allocation14 + $0x40] sm:$0xff]
        %v1155 = vld [vmem:[#allocation14 + $0x48] sm:$0xff]
        %v1156 = vld [vmem:[#allocation14 + $0x50] sm:$0xff]
        %v1157 = vld [vmem:[#allocation14 + $0x58] sm:$0xff]
        %v1158 = vld [vmem:[#allocation14 + $0x60] sm:$0xff]
        %v1159 = vld [vmem:[#allocation14 + $0x68] sm:$0xff]
        %v1160 = vld [vmem:[#allocation14 + $0x70] sm:$0xff]
        %v1161 = vld [vmem:[#allocation14 + $0x78] sm:$0xff]
        %v1162 = vld [vmem:[%s10] sm:$0x1]
        %v1163 = vld [vmem:[%s11] sm:$0x1]
        %v1164 = vld [vmem:[%s12] sm:$0x1]
        %v1165 = vmul.f32 %v732, 0.17677669
        %v1166 = vmul.f32 %v737, 0.17677669
        %v1167 = vmul.f32 %v742, 0.17677669
        %v1168 = vmul.f32 %v747, 0.17677669
        %v1169 = vmul.f32 %v752, 0.17677669
        %v1170 = vmul.f32 %v757, 0.17677669
        %v1171 = vmul.f32 %v762, 0.17677669
        %v1172 = vmul.f32 %v767, 0.17677669
        %v1173 = vmul.f32 %v772, 0.17677669
        %v1174 = vmul.f32 %v777, 0.17677669
        %v1175 = vmul.f32 %v782, 0.17677669
        %v1176 = vmul.f32 %v787, 0.17677669
        %v1177 = vmul.f32 %v792, 0.17677669
        %v1178 = vmul.f32 %v797, 0.17677669
        %v1179 = vmul.f32 %v802, 0.17677669
        %v1180 = vmul.f32 %v807, 0.17677669
        %vm1181 = vcmask 261120
        %v1183 = vsel %vm1181, %v1165, 0
        %v1186 = vsel %vm1181, %v1166, 0
        %v1189 = vsel %vm1181, %v1167, 0
        %v1192 = vsel %vm1181, %v1168, 0
        %v1195 = vsel %vm1181, %v1169, 0
        %v1198 = vsel %vm1181, %v1170, 0
        %v1201 = vsel %vm1181, %v1171, 0
        %v1204 = vsel %vm1181, %v1172, 0
        %v1207 = vsel %vm1181, %v1173, 0
        %v1210 = vsel %vm1181, %v1174, 0
        %v1213 = vsel %vm1181, %v1175, 0
        %v1216 = vsel %vm1181, %v1176, 0
        %v1219 = vsel %vm1181, %v1177, 0
        %v1222 = vsel %vm1181, %v1178, 0
        %v1225 = vsel %vm1181, %v1179, 0
        %v1228 = vsel %vm1181, %v1180, 0
        %v1231 = vsel %vm1181, %v900, 0
        %v1234 = vsel %vm1181, %v905, 0
        %v1237 = vsel %vm1181, %v910, 0
        %v1240 = vsel %vm1181, %v915, 0
        %v1243 = vsel %vm1181, %v920, 0
        %v1246 = vsel %vm1181, %v925, 0
        %v1249 = vsel %vm1181, %v930, 0
        %v1252 = vsel %vm1181, %v935, 0
        %v1255 = vsel %vm1181, %v940, 0
        %v1258 = vsel %vm1181, %v945, 0
        %v1261 = vsel %vm1181, %v950, 0
        %v1264 = vsel %vm1181, %v955, 0
        %v1267 = vsel %vm1181, %v960, 0
        %v1270 = vsel %vm1181, %v965, 0
        %v1273 = vsel %vm1181, %v970, 0
        %v1276 = vsel %vm1181, %v975, 0
        %1278 = vmatprep.subr.mxu0 0.0
        %1279 = vmatpush1.xpose.msra.mxu0 %v1276
        %1280 = vmatprep.subr.mxu0 0.0
        %1281 = vmatpush1.xpose.msra.mxu0 %v1273
        %1282 = vmatprep.subr.mxu0 0.0
        %1283 = vmatpush1.xpose.msra.mxu0 %v1270
        %1284 = vmatprep.subr.mxu0 0.0
        %1285 = vmatpush1.xpose.msra.mxu0 %v1267
        %1286 = vmatprep.subr.mxu0 0.0
        %1287 = vmatpush1.xpose.msra.mxu0 %v1264
        %1288 = vmatprep.subr.mxu0 0.0
        %1289 = vmatpush1.xpose.msra.mxu0 %v1261
        %1290 = vmatprep.subr.mxu0 0.0
        %1291 = vmatpush1.xpose.msra.mxu0 %v1258
        %1292 = vmatprep.subr.mxu0 0.0
        %1293 = vmatpush1.xpose.msra.mxu0 %v1255
        %1294 = vmatprep.subr.mxu0 0.0
        %1295 = vmatpush1.xpose.msra.mxu0 %v1252
        %1296 = vmatprep.subr.mxu0 0.0
        %1297 = vmatpush1.xpose.msra.mxu0 %v1249
        %1298 = vmatprep.subr.mxu0 0.0
        %1299 = vmatpush1.xpose.msra.mxu0 %v1246
        %1300 = vmatprep.subr.mxu0 0.0
        %1301 = vmatpush1.xpose.msra.mxu0 %v1243
        %1302 = vmatprep.subr.mxu0 0.0
        %1303 = vmatpush1.xpose.msra.mxu0 %v1240
        %1304 = vmatprep.subr.mxu0 0.0
        %1305 = vmatpush1.xpose.msra.mxu0 %v1237
        %1306 = vmatprep.subr.mxu0 0.0
        %1307 = vmatpush1.xpose.msra.mxu0 %v1234
        %1308 = vmatprep.subr.mxu0 0.0
        %1309 = vmatpush1.xpose.msra.mxu0 %v1231
        %1310 = vmatprep.subr.mxu0 0.0
        %1311 = vmatpush2.xpose.msra.mxu0 0.0
        %1312 = vmatprep.subr.mxu0 0.0
        %1313 = vmatpush2.xpose.msra.mxu0 0.0
        %1314 = vmatprep.subr.mxu0 0.0
        %1315 = vmatpush2.xpose.msra.mxu0 0.0
        %1316 = vmatprep.subr.mxu0 0.0
        %1317 = vmatpush2.xpose.msra.mxu0 0.0
        %1318 = vmatprep.subr.mxu0 0.0
        %1319 = vmatpush2.xpose.msra.mxu0 0.0
        %1320 = vmatprep.subr.mxu0 0.0
        %1321 = vmatpush2.xpose.msra.mxu0 0.0
        %1322 = vmatprep.subr.mxu0 0.0
        %1323 = vmatpush2.xpose.msra.mxu0 0.0
        %1324 = vmatprep.subr.mxu0 0.0
        %1325 = vmatpush2.xpose.msra.mxu0 0.0
        %1326 = vmatprep.subr.mxu0 0.0
        %1327 = vmatpush2.xpose.msra.mxu0 0.0
        %1328 = vmatprep.subr.mxu0 0.0
        %1329 = vmatpush2.xpose.msra.mxu0 0.0
        %1330 = vmatprep.subr.mxu0 0.0
        %1331 = vmatpush2.xpose.msra.mxu0 0.0
        %1332 = vmatprep.subr.mxu0 0.0
        %1333 = vmatpush2.xpose.msra.mxu0 0.0
        %1334 = vmatprep.subr.mxu0 0.0
        %1335 = vmatpush2.xpose.msra.mxu0 0.0
        %1336 = vmatprep.subr.mxu0 0.0
        %1337 = vmatpush2.xpose.msra.mxu0 0.0
        %1338 = vmatprep.subr.mxu0 0.0
        %1339 = vmatpush2.xpose.msra.mxu0 0.0
        %1340 = vmatprep.subr.mxu0 0.0
        %1341 = vmatpush2.xpose.msra.mxu0 0.0
        %1342 = vmatprep.mubr.f32.mxu0 0.0
        %1343 = vmatmul.mubr.f32.gmra.mxu0 %v1183
        %v1344 = vpop.f32.mrf.mxu0
        %v1345 = vadd.f32 0.0, %v1344
        %v1346 = vpop.f32.mrf.mxu0
        %1347 = vmatprep.mubr.f32.mxu0 0.0
        %1348 = vmatmul.mubr.f32.gmra.mxu0 %v1186
        %v1349 = vpop.f32.mrf.mxu0
        %v1350 = vadd.f32 0.0, %v1349
        %v1351 = vpop.f32.mrf.mxu0
        %1352 = vmatprep.mubr.f32.mxu0 0.0
        %1353 = vmatmul.mubr.f32.gmra.mxu0 %v1189
        %v1354 = vpop.f32.mrf.mxu0
        %v1355 = vadd.f32 0.0, %v1354
        %v1356 = vpop.f32.mrf.mxu0
        %1357 = vmatprep.mubr.f32.mxu0 0.0
        %1358 = vmatmul.mubr.f32.gmra.mxu0 %v1192
        %v1359 = vpop.f32.mrf.mxu0
        %v1360 = vadd.f32 0.0, %v1359
        %v1361 = vpop.f32.mrf.mxu0
        %1362 = vmatprep.mubr.f32.mxu0 0.0
        %1363 = vmatmul.mubr.f32.gmra.mxu0 %v1195
        %v1364 = vpop.f32.mrf.mxu0
        %v1365 = vadd.f32 0.0, %v1364
        %v1366 = vpop.f32.mrf.mxu0
        %1367 = vmatprep.mubr.f32.mxu0 0.0
        %1368 = vmatmul.mubr.f32.gmra.mxu0 %v1198
        %v1369 = vpop.f32.mrf.mxu0
        %v1370 = vadd.f32 0.0, %v1369
        %v1371 = vpop.f32.mrf.mxu0
        %1372 = vmatprep.mubr.f32.mxu0 0.0
        %1373 = vmatmul.mubr.f32.gmra.mxu0 %v1201
        %v1374 = vpop.f32.mrf.mxu0
        %v1375 = vadd.f32 0.0, %v1374
        %v1376 = vpop.f32.mrf.mxu0
        %1377 = vmatprep.mubr.f32.mxu0 0.0
        %1378 = vmatmul.mubr.f32.gmra.mxu0 %v1204
        %v1379 = vpop.f32.mrf.mxu0
        %v1380 = vadd.f32 0.0, %v1379
        %v1381 = vpop.f32.mrf.mxu0
        %1382 = vmatprep.mubr.f32.mxu0 0.0
        %1383 = vmatmul.mubr.f32.gmra.mxu0 %v1207
        %v1384 = vpop.f32.mrf.mxu0
        %v1385 = vadd.f32 0.0, %v1384
        %v1386 = vpop.f32.mrf.mxu0
        %1387 = vmatprep.mubr.f32.mxu0 0.0
        %1388 = vmatmul.mubr.f32.gmra.mxu0 %v1210
        %v1389 = vpop.f32.mrf.mxu0
        %v1390 = vadd.f32 0.0, %v1389
        %v1391 = vpop.f32.mrf.mxu0
        %1392 = vmatprep.mubr.f32.mxu0 0.0
        %1393 = vmatmul.mubr.f32.gmra.mxu0 %v1213
        %v1394 = vpop.f32.mrf.mxu0
        %v1395 = vadd.f32 0.0, %v1394
        %v1396 = vpop.f32.mrf.mxu0
        %1397 = vmatprep.mubr.f32.mxu0 0.0
        %1398 = vmatmul.mubr.f32.gmra.mxu0 %v1216
        %v1399 = vpop.f32.mrf.mxu0
        %v1400 = vadd.f32 0.0, %v1399
        %v1401 = vpop.f32.mrf.mxu0
        %1402 = vmatprep.mubr.f32.mxu0 0.0
        %1403 = vmatmul.mubr.f32.gmra.mxu0 %v1219
        %v1404 = vpop.f32.mrf.mxu0
        %v1405 = vadd.f32 0.0, %v1404
        %v1406 = vpop.f32.mrf.mxu0
        %1407 = vmatprep.mubr.f32.mxu0 0.0
        %1408 = vmatmul.mubr.f32.gmra.mxu0 %v1222
        %v1409 = vpop.f32.mrf.mxu0
        %v1410 = vadd.f32 0.0, %v1409
        %v1411 = vpop.f32.mrf.mxu0
        %1412 = vmatprep.mubr.f32.mxu0 0.0
        %1413 = vmatmul.mubr.f32.gmra.mxu0 %v1225
        %v1414 = vpop.f32.mrf.mxu0
        %v1415 = vadd.f32 0.0, %v1414
        %v1416 = vpop.f32.mrf.mxu0
        %1417 = vmatprep.mubr.f32.mxu0 0.0
        %1418 = vmatmul.mubr.f32.gmra.mxu0 %v1228
        %v1419 = vpop.f32.mrf.mxu0
        %v1420 = vadd.f32 0.0, %v1419
        %v1421 = vpop.f32.mrf.mxu0
        %1422 = vdwg.mxu0
        %1423 = vmax.xlane.f32.xlu0 %v1345
        %v1424 = vpop.xlane.xlu0 %1423
        %1425 = vmax.xlane.f32.xlu0 %v1350
        %v1426 = vpop.xlane.xlu0 %1425
        %1427 = vmax.xlane.f32.xlu0 %v1355
        %v1428 = vpop.xlane.xlu0 %1427
        %1429 = vmax.xlane.f32.xlu0 %v1360
        %v1430 = vpop.xlane.xlu0 %1429
        %1431 = vmax.xlane.f32.xlu0 %v1365
        %v1432 = vpop.xlane.xlu0 %1431
        %1433 = vmax.xlane.f32.xlu0 %v1370
        %v1434 = vpop.xlane.xlu0 %1433
        %1435 = vmax.xlane.f32.xlu0 %v1375
        %v1436 = vpop.xlane.xlu0 %1435
        %1437 = vmax.xlane.f32.xlu0 %v1380
        %v1438 = vpop.xlane.xlu0 %1437
        %1439 = vmax.xlane.f32.xlu0 %v1385
        %v1440 = vpop.xlane.xlu0 %1439
        %1441 = vmax.xlane.f32.xlu0 %v1390
        %v1442 = vpop.xlane.xlu0 %1441
        %1443 = vmax.xlane.f32.xlu0 %v1395
        %v1444 = vpop.xlane.xlu0 %1443
        %1445 = vmax.xlane.f32.xlu0 %v1400
        %v1446 = vpop.xlane.xlu0 %1445
        %1447 = vmax.xlane.f32.xlu0 %v1405
        %v1448 = vpop.xlane.xlu0 %1447
        %1449 = vmax.xlane.f32.xlu0 %v1410
        %v1450 = vpop.xlane.xlu0 %1449
        %1451 = vmax.xlane.f32.xlu0 %v1415
        %v1452 = vpop.xlane.xlu0 %1451
        %1453 = vmax.xlane.f32.xlu0 %v1420
        %v1454 = vpop.xlane.xlu0 %1453
        %v1455 = vsub.f32 %v1345, %v1424
        %v1456 = vsub.f32 %v1350, %v1426
        %v1457 = vsub.f32 %v1355, %v1428
        %v1458 = vsub.f32 %v1360, %v1430
        %v1459 = vsub.f32 %v1365, %v1432
        %v1460 = vsub.f32 %v1370, %v1434
        %v1461 = vsub.f32 %v1375, %v1436
        %v1462 = vsub.f32 %v1380, %v1438
        %v1463 = vsub.f32 %v1385, %v1440
        %v1464 = vsub.f32 %v1390, %v1442
        %v1465 = vsub.f32 %v1395, %v1444
        %v1466 = vsub.f32 %v1400, %v1446
        %v1467 = vsub.f32 %v1405, %v1448
        %v1468 = vsub.f32 %v1410, %v1450
        %v1469 = vsub.f32 %v1415, %v1452
        %v1470 = vsub.f32 %v1420, %v1454
        %v1471 = vmul.f32 %v1455, 1.442695
        %v1472 = vpow.pop %v1471
        %v1473 = vmul.f32 %v1456, 1.442695
        %v1474 = vpow.pop %v1473
        %v1475 = vmul.f32 %v1457, 1.442695
        %v1476 = vpow.pop %v1475
        %v1477 = vmul.f32 %v1458, 1.442695
        %v1478 = vpow.pop %v1477
        %v1479 = vmul.f32 %v1459, 1.442695
        %v1480 = vpow.pop %v1479
        %v1481 = vmul.f32 %v1460, 1.442695
        %v1482 = vpow.pop %v1481
        %v1483 = vmul.f32 %v1461, 1.442695
        %v1484 = vpow.pop %v1483
        %v1485 = vmul.f32 %v1462, 1.442695
        %v1486 = vpow.pop %v1485
        %v1487 = vmul.f32 %v1463, 1.442695
        %v1488 = vpow.pop %v1487
        %v1489 = vmul.f32 %v1464, 1.442695
        %v1490 = vpow.pop %v1489
        %v1491 = vmul.f32 %v1465, 1.442695
        %v1492 = vpow.pop %v1491
        %v1493 = vmul.f32 %v1466, 1.442695
        %v1494 = vpow.pop %v1493
        %v1495 = vmul.f32 %v1467, 1.442695
        %v1496 = vpow.pop %v1495
        %v1497 = vmul.f32 %v1468, 1.442695
        %v1498 = vpow.pop %v1497
        %v1499 = vmul.f32 %v1469, 1.442695
        %v1500 = vpow.pop %v1499
        %v1501 = vmul.f32 %v1470, 1.442695
        %v1502 = vpow.pop %v1501
        %1503 = vadd.xlane.f32.xlu0 %v1472
        %v1504 = vpop.xlane.xlu0 %1503
        %1505 = vadd.xlane.f32.xlu0 %v1474
        %v1506 = vpop.xlane.xlu0 %1505
        %1507 = vadd.xlane.f32.xlu0 %v1476
        %v1508 = vpop.xlane.xlu0 %1507
        %1509 = vadd.xlane.f32.xlu0 %v1478
        %v1510 = vpop.xlane.xlu0 %1509
        %1511 = vadd.xlane.f32.xlu0 %v1480
        %v1512 = vpop.xlane.xlu0 %1511
        %1513 = vadd.xlane.f32.xlu0 %v1482
        %v1514 = vpop.xlane.xlu0 %1513
        %1515 = vadd.xlane.f32.xlu0 %v1484
        %v1516 = vpop.xlane.xlu0 %1515
        %1517 = vadd.xlane.f32.xlu0 %v1486
        %v1518 = vpop.xlane.xlu0 %1517
        %1519 = vadd.xlane.f32.xlu0 %v1488
        %v1520 = vpop.xlane.xlu0 %1519
        %1521 = vadd.xlane.f32.xlu0 %v1490
        %v1522 = vpop.xlane.xlu0 %1521
        %1523 = vadd.xlane.f32.xlu0 %v1492
        %v1524 = vpop.xlane.xlu0 %1523
        %1525 = vadd.xlane.f32.xlu0 %v1494
        %v1526 = vpop.xlane.xlu0 %1525
        %1527 = vadd.xlane.f32.xlu0 %v1496
        %v1528 = vpop.xlane.xlu0 %1527
        %1529 = vadd.xlane.f32.xlu0 %v1498
        %v1530 = vpop.xlane.xlu0 %1529
        %1531 = vadd.xlane.f32.xlu0 %v1500
        %v1532 = vpop.xlane.xlu0 %1531
        %1533 = vadd.xlane.f32.xlu0 %v1502
        %v1534 = vpop.xlane.xlu0 %1533
        %v1535 = vrcp.pop %v1504
        %v1536 = vrcp.pop %v1506
        %v1537 = vrcp.pop %v1508
        %v1538 = vrcp.pop %v1510
        %v1539 = vrcp.pop %v1512
        %v1540 = vrcp.pop %v1514
        %v1541 = vrcp.pop %v1516
        %v1542 = vrcp.pop %v1518
        %v1543 = vrcp.pop %v1520
        %v1544 = vrcp.pop %v1522
        %v1545 = vrcp.pop %v1524
        %v1546 = vrcp.pop %v1526
        %v1547 = vrcp.pop %v1528
        %v1548 = vrcp.pop %v1530
        %v1549 = vrcp.pop %v1532
        %v1550 = vrcp.pop %v1534
        %1551 = vmatprep.subr.mxu0 0.0
        %1552 = vmatpush1.msra.mxu0 %v1143
        %1553 = vmatprep.subr.mxu0 0.0
        %1554 = vmatpush1.msra.mxu0 %v1138
        %1555 = vmatprep.subr.mxu0 0.0
        %1556 = vmatpush1.msra.mxu0 %v1133
        %1557 = vmatprep.subr.mxu0 0.0
        %1558 = vmatpush1.msra.mxu0 %v1128
        %1559 = vmatprep.subr.mxu0 0.0
        %1560 = vmatpush1.msra.mxu0 %v1123
        %1561 = vmatprep.subr.mxu0 0.0
        %1562 = vmatpush1.msra.mxu0 %v1118
        %1563 = vmatprep.subr.mxu0 0.0
        %1564 = vmatpush1.msra.mxu0 %v1113
        %1565 = vmatprep.subr.mxu0 0.0
        %1566 = vmatpush1.msra.mxu0 %v1108
        %1567 = vmatprep.subr.mxu0 0.0
        %1568 = vmatpush1.msra.mxu0 %v1103
        %1569 = vmatprep.subr.mxu0 0.0
        %1570 = vmatpush1.msra.mxu0 %v1098
        %1571 = vmatprep.subr.mxu0 0.0
        %1572 = vmatpush1.msra.mxu0 %v1093
        %1573 = vmatprep.subr.mxu0 0.0
        %1574 = vmatpush1.msra.mxu0 %v1088
        %1575 = vmatprep.subr.mxu0 0.0
        %1576 = vmatpush1.msra.mxu0 %v1083
        %1577 = vmatprep.subr.mxu0 0.0
        %1578 = vmatpush1.msra.mxu0 %v1078
        %1579 = vmatprep.subr.mxu0 0.0
        %1580 = vmatpush1.msra.mxu0 %v1073
        %1581 = vmatprep.subr.mxu0 0.0
        %1582 = vmatpush1.msra.mxu0 %v1068
        %1583 = vmatprep.subr.mxu0 0.0
        %1584 = vmatpush2.msra.mxu0 0.0
        %1585 = vmatprep.subr.mxu0 0.0
        %1586 = vmatpush2.msra.mxu0 0.0
        %1587 = vmatprep.subr.mxu0 0.0
        %1588 = vmatpush2.msra.mxu0 0.0
        %1589 = vmatprep.subr.mxu0 0.0
        %1590 = vmatpush2.msra.mxu0 0.0
        %1591 = vmatprep.subr.mxu0 0.0
        %1592 = vmatpush2.msra.mxu0 0.0
        %1593 = vmatprep.subr.mxu0 0.0
        %1594 = vmatpush2.msra.mxu0 0.0
        %1595 = vmatprep.subr.mxu0 0.0
        %1596 = vmatpush2.msra.mxu0 0.0
        %1597 = vmatprep.subr.mxu0 0.0
        %1598 = vmatpush2.msra.mxu0 0.0
        %1599 = vmatprep.subr.mxu0 0.0
        %1600 = vmatpush2.msra.mxu0 0.0
        %1601 = vmatprep.subr.mxu0 0.0
        %1602 = vmatpush2.msra.mxu0 0.0
        %1603 = vmatprep.subr.mxu0 0.0
        %1604 = vmatpush2.msra.mxu0 0.0
        %1605 = vmatprep.subr.mxu0 0.0
        %1606 = vmatpush2.msra.mxu0 0.0
        %1607 = vmatprep.subr.mxu0 0.0
        %1608 = vmatpush2.msra.mxu0 0.0
        %1609 = vmatprep.subr.mxu0 0.0
        %1610 = vmatpush2.msra.mxu0 0.0
        %1611 = vmatprep.subr.mxu0 0.0
        %1612 = vmatpush2.msra.mxu0 0.0
        %1613 = vmatprep.subr.mxu0 0.0
        %1614 = vmatpush2.msra.mxu0 0.0
        %1615 = vmatprep.mubr.f32.mxu0 0.0
        %1616 = vmatmul.mubr.f32.gmra.mxu0 %v1472
        %v1617 = vpop.f32.mrf.mxu0
        %v1618 = vadd.f32 0.0, %v1617
        %v1619 = vpop.f32.mrf.mxu0
        %1620 = vmatprep.mubr.f32.mxu0 0.0
        %1621 = vmatmul.mubr.f32.gmra.mxu0 %v1474
        %v1622 = vpop.f32.mrf.mxu0
        %v1623 = vadd.f32 0.0, %v1622
        %v1624 = vpop.f32.mrf.mxu0
        %1625 = vmatprep.mubr.f32.mxu0 0.0
        %1626 = vmatmul.mubr.f32.gmra.mxu0 %v1476
        %v1627 = vpop.f32.mrf.mxu0
        %v1628 = vadd.f32 0.0, %v1627
        %v1629 = vpop.f32.mrf.mxu0
        %1630 = vmatprep.mubr.f32.mxu0 0.0
        %1631 = vmatmul.mubr.f32.gmra.mxu0 %v1478
        %v1632 = vpop.f32.mrf.mxu0
        %v1633 = vadd.f32 0.0, %v1632
        %v1634 = vpop.f32.mrf.mxu0
        %1635 = vmatprep.mubr.f32.mxu0 0.0
        %1636 = vmatmul.mubr.f32.gmra.mxu0 %v1480
        %v1637 = vpop.f32.mrf.mxu0
        %v1638 = vadd.f32 0.0, %v1637
        %v1639 = vpop.f32.mrf.mxu0
        %1640 = vmatprep.mubr.f32.mxu0 0.0
        %1641 = vmatmul.mubr.f32.gmra.mxu0 %v1482
        %v1642 = vpop.f32.mrf.mxu0
        %v1643 = vadd.f32 0.0, %v1642
        %v1644 = vpop.f32.mrf.mxu0
        %1645 = vmatprep.mubr.f32.mxu0 0.0
        %1646 = vmatmul.mubr.f32.gmra.mxu0 %v1484
        %v1647 = vpop.f32.mrf.mxu0
        %v1648 = vadd.f32 0.0, %v1647
        %v1649 = vpop.f32.mrf.mxu0
        %1650 = vmatprep.mubr.f32.mxu0 0.0
        %1651 = vmatmul.mubr.f32.gmra.mxu0 %v1486
        %v1652 = vpop.f32.mrf.mxu0
        %v1653 = vadd.f32 0.0, %v1652
        %v1654 = vpop.f32.mrf.mxu0
        %1655 = vmatprep.mubr.f32.mxu0 0.0
        %1656 = vmatmul.mubr.f32.gmra.mxu0 %v1488
        %v1657 = vpop.f32.mrf.mxu0
        %v1658 = vadd.f32 0.0, %v1657
        %v1659 = vpop.f32.mrf.mxu0
        %1660 = vmatprep.mubr.f32.mxu0 0.0
        %1661 = vmatmul.mubr.f32.gmra.mxu0 %v1490
        %v1662 = vpop.f32.mrf.mxu0
        %v1663 = vadd.f32 0.0, %v1662
        %v1664 = vpop.f32.mrf.mxu0
        %1665 = vmatprep.mubr.f32.mxu0 0.0
        %1666 = vmatmul.mubr.f32.gmra.mxu0 %v1492
        %v1667 = vpop.f32.mrf.mxu0
        %v1668 = vadd.f32 0.0, %v1667
        %v1669 = vpop.f32.mrf.mxu0
        %1670 = vmatprep.mubr.f32.mxu0 0.0
        %1671 = vmatmul.mubr.f32.gmra.mxu0 %v1494
        %v1672 = vpop.f32.mrf.mxu0
        %v1673 = vadd.f32 0.0, %v1672
        %v1674 = vpop.f32.mrf.mxu0
        %1675 = vmatprep.mubr.f32.mxu0 0.0
        %1676 = vmatmul.mubr.f32.gmra.mxu0 %v1496
        %v1677 = vpop.f32.mrf.mxu0
        %v1678 = vadd.f32 0.0, %v1677
        %v1679 = vpop.f32.mrf.mxu0
        %1680 = vmatprep.mubr.f32.mxu0 0.0
        %1681 = vmatmul.mubr.f32.gmra.mxu0 %v1498
        %v1682 = vpop.f32.mrf.mxu0
        %v1683 = vadd.f32 0.0, %v1682
        %v1684 = vpop.f32.mrf.mxu0
        %1685 = vmatprep.mubr.f32.mxu0 0.0
        %1686 = vmatmul.mubr.f32.gmra.mxu0 %v1500
        %v1687 = vpop.f32.mrf.mxu0
        %v1688 = vadd.f32 0.0, %v1687
        %v1689 = vpop.f32.mrf.mxu0
        %1690 = vmatprep.mubr.f32.mxu0 0.0
        %1691 = vmatmul.mubr.f32.gmra.mxu0 %v1502
        %v1692 = vpop.f32.mrf.mxu0
        %v1693 = vadd.f32 0.0, %v1692
        %v1694 = vpop.f32.mrf.mxu0
        %1695 = vdwg.mxu0
        %v1696 = vmul.f32 %v1618, %v1535
        %v1697 = vmul.f32 %v1623, %v1536
        %v1698 = vmul.f32 %v1628, %v1537
        %v1699 = vmul.f32 %v1633, %v1538
        %v1700 = vmul.f32 %v1638, %v1539
        %v1701 = vmul.f32 %v1643, %v1540
        %v1702 = vmul.f32 %v1648, %v1541
        %v1703 = vmul.f32 %v1653, %v1542
        %v1704 = vmul.f32 %v1658, %v1543
        %v1705 = vmul.f32 %v1663, %v1544
        %v1706 = vmul.f32 %v1668, %v1545
        %v1707 = vmul.f32 %v1673, %v1546
        %v1708 = vmul.f32 %v1678, %v1547
        %v1709 = vmul.f32 %v1683, %v1548
        %v1710 = vmul.f32 %v1688, %v1549
        %v1711 = vmul.f32 %v1693, %v1550
        %1712 = vst.msk [vmem:[#allocation2] sm:$0xff] %vm1181, %v1696
        %1713 = vst.msk [vmem:[#allocation2 + $0x8] sm:$0xff] %vm1181, %v1697
        %1714 = vst.msk [vmem:[#allocation2 + $0x10] sm:$0xff] %vm1181, %v1698
        %1715 = vst.msk [vmem:[#allocation2 + $0x18] sm:$0xff] %vm1181, %v1699
        %1716 = vst.msk [vmem:[#allocation2 + $0x20] sm:$0xff] %vm1181, %v1700
        %1717 = vst.msk [vmem:[#allocation2 + $0x28] sm:$0xff] %vm1181, %v1701
        %1718 = vst.msk [vmem:[#allocation2 + $0x30] sm:$0xff] %vm1181, %v1702
        %1719 = vst.msk [vmem:[#allocation2 + $0x38] sm:$0xff] %vm1181, %v1703
        %1720 = vst.msk [vmem:[#allocation2 + $0x40] sm:$0xff] %vm1181, %v1704
        %1721 = vst.msk [vmem:[#allocation2 + $0x48] sm:$0xff] %vm1181, %v1705
        %1722 = vst.msk [vmem:[#allocation2 + $0x50] sm:$0xff] %vm1181, %v1706
        %1723 = vst.msk [vmem:[#allocation2 + $0x58] sm:$0xff] %vm1181, %v1707
        %1724 = vst.msk [vmem:[#allocation2 + $0x60] sm:$0xff] %vm1181, %v1708
        %1725 = vst.msk [vmem:[#allocation2 + $0x68] sm:$0xff] %vm1181, %v1709
        %1726 = vst.msk [vmem:[#allocation2 + $0x70] sm:$0xff] %vm1181, %v1710
        %1727 = vst.msk [vmem:[#allocation2 + $0x78] sm:$0xff] %vm1181, %v1711
        %1728 = vrot.lane.b32.xlu0 %v1165, 96
        %v1729 = vpop.permute.xlu0 %1728
        %1730 = vrot.lane.b32.xlu0 %v1166, 96
        %v1731 = vpop.permute.xlu0 %1730
        %1732 = vrot.lane.b32.xlu0 %v1167, 96
        %v1733 = vpop.permute.xlu0 %1732
        %1734 = vrot.lane.b32.xlu0 %v1168, 96
        %v1735 = vpop.permute.xlu0 %1734
        %1736 = vrot.lane.b32.xlu0 %v1169, 96
        %v1737 = vpop.permute.xlu0 %1736
        %1738 = vrot.lane.b32.xlu0 %v1170, 96
        %v1739 = vpop.permute.xlu0 %1738
        %1740 = vrot.lane.b32.xlu0 %v1171, 96
        %v1741 = vpop.permute.xlu0 %1740
        %1742 = vrot.lane.b32.xlu0 %v1172, 96
        %v1743 = vpop.permute.xlu0 %1742
        %1744 = vrot.lane.b32.xlu0 %v1173, 96
        %v1745 = vpop.permute.xlu0 %1744
        %1746 = vrot.lane.b32.xlu0 %v1174, 96
        %v1747 = vpop.permute.xlu0 %1746
        %1748 = vrot.lane.b32.xlu0 %v1175, 96
        %v1749 = vpop.permute.xlu0 %1748
        %1750 = vrot.lane.b32.xlu0 %v1176, 96
        %v1751 = vpop.permute.xlu0 %1750
        %1752 = vrot.lane.b32.xlu0 %v1177, 96
        %v1753 = vpop.permute.xlu0 %1752
        %1754 = vrot.lane.b32.xlu0 %v1178, 96
        %v1755 = vpop.permute.xlu0 %1754
        %1756 = vrot.lane.b32.xlu0 %v1179, 96
        %v1757 = vpop.permute.xlu0 %1756
        %1758 = vrot.lane.b32.xlu0 %v1180, 96
        %v1759 = vpop.permute.xlu0 %1758
        %1760 = vrot.lane.b32.xlu0 %v900, 96
        %v1761 = vpop.permute.xlu0 %1760
        %1762 = vrot.lane.b32.xlu0 %v905, 96
        %v1763 = vpop.permute.xlu0 %1762
        %1764 = vrot.lane.b32.xlu0 %v910, 96
        %v1765 = vpop.permute.xlu0 %1764
        %1766 = vrot.lane.b32.xlu0 %v915, 96
        %v1767 = vpop.permute.xlu0 %1766
        %1768 = vrot.lane.b32.xlu0 %v920, 96
        %v1769 = vpop.permute.xlu0 %1768
        %1770 = vrot.lane.b32.xlu0 %v925, 96
        %v1771 = vpop.permute.xlu0 %1770
        %1772 = vrot.lane.b32.xlu0 %v930, 96
        %v1773 = vpop.permute.xlu0 %1772
        %1774 = vrot.lane.b32.xlu0 %v935, 96
        %v1775 = vpop.permute.xlu0 %1774
        %1776 = vrot.lane.b32.xlu0 %v940, 96
        %v1777 = vpop.permute.xlu0 %1776
        %1778 = vrot.lane.b32.xlu0 %v945, 96
        %v1779 = vpop.permute.xlu0 %1778
        %1780 = vrot.lane.b32.xlu0 %v950, 96
        %v1781 = vpop.permute.xlu0 %1780
        %1782 = vrot.lane.b32.xlu0 %v955, 96
        %v1783 = vpop.permute.xlu0 %1782
        %1784 = vrot.lane.b32.xlu0 %v960, 96
        %v1785 = vpop.permute.xlu0 %1784
        %1786 = vrot.lane.b32.xlu0 %v965, 96
        %v1787 = vpop.permute.xlu0 %1786
        %1788 = vrot.lane.b32.xlu0 %v970, 96
        %v1789 = vpop.permute.xlu0 %1788
        %1790 = vrot.lane.b32.xlu0 %v975, 96
        %v1791 = vpop.permute.xlu0 %1790
        %v1792 = vsel %vm1181, %v1729, 0
        %v1794 = vsel %vm1181, %v1731, 0
        %v1796 = vsel %vm1181, %v1733, 0
        %v1798 = vsel %vm1181, %v1735, 0
        %v1800 = vsel %vm1181, %v1737, 0
        %v1802 = vsel %vm1181, %v1739, 0
        %v1804 = vsel %vm1181, %v1741, 0
        %v1806 = vsel %vm1181, %v1743, 0
        %v1808 = vsel %vm1181, %v1745, 0
        %v1810 = vsel %vm1181, %v1747, 0
        %v1812 = vsel %vm1181, %v1749, 0
        %v1814 = vsel %vm1181, %v1751, 0
        %v1816 = vsel %vm1181, %v1753, 0
        %v1818 = vsel %vm1181, %v1755, 0
        %v1820 = vsel %vm1181, %v1757, 0
        %v1822 = vsel %vm1181, %v1759, 0
        %v1824 = vsel %vm1181, %v1761, 0
        %v1826 = vsel %vm1181, %v1763, 0
        %v1828 = vsel %vm1181, %v1765, 0
        %v1830 = vsel %vm1181, %v1767, 0
        %v1832 = vsel %vm1181, %v1769, 0
        %v1834 = vsel %vm1181, %v1771, 0
        %v1836 = vsel %vm1181, %v1773, 0
        %v1838 = vsel %vm1181, %v1775, 0
        %v1840 = vsel %vm1181, %v1777, 0
        %v1842 = vsel %vm1181, %v1779, 0
        %v1844 = vsel %vm1181, %v1781, 0
        %v1846 = vsel %vm1181, %v1783, 0
        %v1848 = vsel %vm1181, %v1785, 0
        %v1850 = vsel %vm1181, %v1787, 0
        %v1852 = vsel %vm1181, %v1789, 0
        %v1854 = vsel %vm1181, %v1791, 0
        %1856 = vmatprep.subr.mxu0 0.0
        %1857 = vmatpush1.xpose.msra.mxu0 %v1854
        %1858 = vmatprep.subr.mxu0 0.0
        %1859 = vmatpush1.xpose.msra.mxu0 %v1852
        %1860 = vmatprep.subr.mxu0 0.0
        %1861 = vmatpush1.xpose.msra.mxu0 %v1850
        %1862 = vmatprep.subr.mxu0 0.0
        %1863 = vmatpush1.xpose.msra.mxu0 %v1848
        %1864 = vmatprep.subr.mxu0 0.0
        %1865 = vmatpush1.xpose.msra.mxu0 %v1846
        %1866 = vmatprep.subr.mxu0 0.0
        %1867 = vmatpush1.xpose.msra.mxu0 %v1844
        %1868 = vmatprep.subr.mxu0 0.0
        %1869 = vmatpush1.xpose.msra.mxu0 %v1842
        %1870 = vmatprep.subr.mxu0 0.0
        %1871 = vmatpush1.xpose.msra.mxu0 %v1840
        %1872 = vmatprep.subr.mxu0 0.0
        %1873 = vmatpush1.xpose.msra.mxu0 %v1838
        %1874 = vmatprep.subr.mxu0 0.0
        %1875 = vmatpush1.xpose.msra.mxu0 %v1836
        %1876 = vmatprep.subr.mxu0 0.0
        %1877 = vmatpush1.xpose.msra.mxu0 %v1834
        %1878 = vmatprep.subr.mxu0 0.0
        %1879 = vmatpush1.xpose.msra.mxu0 %v1832
        %1880 = vmatprep.subr.mxu0 0.0
        %1881 = vmatpush1.xpose.msra.mxu0 %v1830
        %1882 = vmatprep.subr.mxu0 0.0
        %1883 = vmatpush1.xpose.msra.mxu0 %v1828
        %1884 = vmatprep.subr.mxu0 0.0
        %1885 = vmatpush1.xpose.msra.mxu0 %v1826
        %1886 = vmatprep.subr.mxu0 0.0
        %1887 = vmatpush1.xpose.msra.mxu0 %v1824
        %1888 = vmatprep.subr.mxu0 0.0
        %1889 = vmatpush2.xpose.msra.mxu0 0.0
        %1890 = vmatprep.subr.mxu0 0.0
        %1891 = vmatpush2.xpose.msra.mxu0 0.0
        %1892 = vmatprep.subr.mxu0 0.0
        %1893 = vmatpush2.xpose.msra.mxu0 0.0
        %1894 = vmatprep.subr.mxu0 0.0
        %1895 = vmatpush2.xpose.msra.mxu0 0.0
        %1896 = vmatprep.subr.mxu0 0.0
        %1897 = vmatpush2.xpose.msra.mxu0 0.0
        %1898 = vmatprep.subr.mxu0 0.0
        %1899 = vmatpush2.xpose.msra.mxu0 0.0
        %1900 = vmatprep.subr.mxu0 0.0
        %1901 = vmatpush2.xpose.msra.mxu0 0.0
        %1902 = vmatprep.subr.mxu0 0.0
        %1903 = vmatpush2.xpose.msra.mxu0 0.0
        %1904 = vmatprep.subr.mxu0 0.0
        %1905 = vmatpush2.xpose.msra.mxu0 0.0
        %1906 = vmatprep.subr.mxu0 0.0
        %1907 = vmatpush2.xpose.msra.mxu0 0.0
        %1908 = vmatprep.subr.mxu0 0.0
        %1909 = vmatpush2.xpose.msra.mxu0 0.0
        %1910 = vmatprep.subr.mxu0 0.0
        %1911 = vmatpush2.xpose.msra.mxu0 0.0
        %1912 = vmatprep.subr.mxu0 0.0
        %1913 = vmatpush2.xpose.msra.mxu0 0.0
        %1914 = vmatprep.subr.mxu0 0.0
        %1915 = vmatpush2.xpose.msra.mxu0 0.0
        %1916 = vmatprep.subr.mxu0 0.0
        %1917 = vmatpush2.xpose.msra.mxu0 0.0
        %1918 = vmatprep.subr.mxu0 0.0
        %1919 = vmatpush2.xpose.msra.mxu0 0.0
        %1920 = vmatprep.mubr.f32.mxu0 0.0
        %1921 = vmatmul.mubr.f32.gmra.mxu0 %v1792
        %v1922 = vpop.f32.mrf.mxu0
        %v1923 = vadd.f32 0.0, %v1922
        %v1924 = vpop.f32.mrf.mxu0
        %1925 = vmatprep.mubr.f32.mxu0 0.0
        %1926 = vmatmul.mubr.f32.gmra.mxu0 %v1794
        %v1927 = vpop.f32.mrf.mxu0
        %v1928 = vadd.f32 0.0, %v1927
        %v1929 = vpop.f32.mrf.mxu0
        %1930 = vmatprep.mubr.f32.mxu0 0.0
        %1931 = vmatmul.mubr.f32.gmra.mxu0 %v1796
        %v1932 = vpop.f32.mrf.mxu0
        %v1933 = vadd.f32 0.0, %v1932
        %v1934 = vpop.f32.mrf.mxu0
        %1935 = vmatprep.mubr.f32.mxu0 0.0
        %1936 = vmatmul.mubr.f32.gmra.mxu0 %v1798
        %v1937 = vpop.f32.mrf.mxu0
        %v1938 = vadd.f32 0.0, %v1937
        %v1939 = vpop.f32.mrf.mxu0
        %1940 = vmatprep.mubr.f32.mxu0 0.0
        %1941 = vmatmul.mubr.f32.gmra.mxu0 %v1800
        %v1942 = vpop.f32.mrf.mxu0
        %v1943 = vadd.f32 0.0, %v1942
        %v1944 = vpop.f32.mrf.mxu0
        %1945 = vmatprep.mubr.f32.mxu0 0.0
        %1946 = vmatmul.mubr.f32.gmra.mxu0 %v1802
        %v1947 = vpop.f32.mrf.mxu0
        %v1948 = vadd.f32 0.0, %v1947
        %v1949 = vpop.f32.mrf.mxu0
        %1950 = vmatprep.mubr.f32.mxu0 0.0
        %1951 = vmatmul.mubr.f32.gmra.mxu0 %v1804
        %v1952 = vpop.f32.mrf.mxu0
        %v1953 = vadd.f32 0.0, %v1952
        %v1954 = vpop.f32.mrf.mxu0
        %1955 = vmatprep.mubr.f32.mxu0 0.0
        %1956 = vmatmul.mubr.f32.gmra.mxu0 %v1806
        %v1957 = vpop.f32.mrf.mxu0
        %v1958 = vadd.f32 0.0, %v1957
        %v1959 = vpop.f32.mrf.mxu0
        %1960 = vmatprep.mubr.f32.mxu0 0.0
        %1961 = vmatmul.mubr.f32.gmra.mxu0 %v1808
        %v1962 = vpop.f32.mrf.mxu0
        %v1963 = vadd.f32 0.0, %v1962
        %v1964 = vpop.f32.mrf.mxu0
        %1965 = vmatprep.mubr.f32.mxu0 0.0
        %1966 = vmatmul.mubr.f32.gmra.mxu0 %v1810
        %v1967 = vpop.f32.mrf.mxu0
        %v1968 = vadd.f32 0.0, %v1967
        %v1969 = vpop.f32.mrf.mxu0
        %1970 = vmatprep.mubr.f32.mxu0 0.0
        %1971 = vmatmul.mubr.f32.gmra.mxu0 %v1812
        %v1972 = vpop.f32.mrf.mxu0
        %v1973 = vadd.f32 0.0, %v1972
        %v1974 = vpop.f32.mrf.mxu0
        %1975 = vmatprep.mubr.f32.mxu0 0.0
        %1976 = vmatmul.mubr.f32.gmra.mxu0 %v1814
        %v1977 = vpop.f32.mrf.mxu0
        %v1978 = vadd.f32 0.0, %v1977
        %v1979 = vpop.f32.mrf.mxu0
        %1980 = vmatprep.mubr.f32.mxu0 0.0
        %1981 = vmatmul.mubr.f32.gmra.mxu0 %v1816
        %v1982 = vpop.f32.mrf.mxu0
        %v1983 = vadd.f32 0.0, %v1982
        %v1984 = vpop.f32.mrf.mxu0
        %1985 = vmatprep.mubr.f32.mxu0 0.0
        %1986 = vmatmul.mubr.f32.gmra.mxu0 %v1818
        %v1987 = vpop.f32.mrf.mxu0
        %v1988 = vadd.f32 0.0, %v1987
        %v1989 = vpop.f32.mrf.mxu0
        %1990 = vmatprep.mubr.f32.mxu0 0.0
        %1991 = vmatmul.mubr.f32.gmra.mxu0 %v1820
        %v1992 = vpop.f32.mrf.mxu0
        %v1993 = vadd.f32 0.0, %v1992
        %v1994 = vpop.f32.mrf.mxu0
        %1995 = vmatprep.mubr.f32.mxu0 0.0
        %1996 = vmatmul.mubr.f32.gmra.mxu0 %v1822
        %v1997 = vpop.f32.mrf.mxu0
        %v1998 = vadd.f32 0.0, %v1997
        %v1999 = vpop.f32.mrf.mxu0
        %2000 = vdwg.mxu0
        %2001 = vmax.xlane.f32.xlu0 %v1923
        %v2002 = vpop.xlane.xlu0 %2001
        %2003 = vmax.xlane.f32.xlu0 %v1928
        %v2004 = vpop.xlane.xlu0 %2003
        %2005 = vmax.xlane.f32.xlu0 %v1933
        %v2006 = vpop.xlane.xlu0 %2005
        %2007 = vmax.xlane.f32.xlu0 %v1938
        %v2008 = vpop.xlane.xlu0 %2007
        %2009 = vmax.xlane.f32.xlu0 %v1943
        %v2010 = vpop.xlane.xlu0 %2009
        %2011 = vmax.xlane.f32.xlu0 %v1948
        %v2012 = vpop.xlane.xlu0 %2011
        %2013 = vmax.xlane.f32.xlu0 %v1953
        %v2014 = vpop.xlane.xlu0 %2013
        %2015 = vmax.xlane.f32.xlu0 %v1958
        %v2016 = vpop.xlane.xlu0 %2015
        %2017 = vmax.xlane.f32.xlu0 %v1963
        %v2018 = vpop.xlane.xlu0 %2017
        %2019 = vmax.xlane.f32.xlu0 %v1968
        %v2020 = vpop.xlane.xlu0 %2019
        %2021 = vmax.xlane.f32.xlu0 %v1973
        %v2022 = vpop.xlane.xlu0 %2021
        %2023 = vmax.xlane.f32.xlu0 %v1978
        %v2024 = vpop.xlane.xlu0 %2023
        %2025 = vmax.xlane.f32.xlu0 %v1983
        %v2026 = vpop.xlane.xlu0 %2025
        %2027 = vmax.xlane.f32.xlu0 %v1988
        %v2028 = vpop.xlane.xlu0 %2027
        %2029 = vmax.xlane.f32.xlu0 %v1993
        %v2030 = vpop.xlane.xlu0 %2029
        %2031 = vmax.xlane.f32.xlu0 %v1998
        %v2032 = vpop.xlane.xlu0 %2031
        %v2033 = vsub.f32 %v1923, %v2002
        %v2034 = vsub.f32 %v1928, %v2004
        %v2035 = vsub.f32 %v1933, %v2006
        %v2036 = vsub.f32 %v1938, %v2008
        %v2037 = vsub.f32 %v1943, %v2010
        %v2038 = vsub.f32 %v1948, %v2012
        %v2039 = vsub.f32 %v1953, %v2014
        %v2040 = vsub.f32 %v1958, %v2016
        %v2041 = vsub.f32 %v1963, %v2018
        %v2042 = vsub.f32 %v1968, %v2020
        %v2043 = vsub.f32 %v1973, %v2022
        %v2044 = vsub.f32 %v1978, %v2024
        %v2045 = vsub.f32 %v1983, %v2026
        %v2046 = vsub.f32 %v1988, %v2028
        %v2047 = vsub.f32 %v1993, %v2030
        %v2048 = vsub.f32 %v1998, %v2032
        %v2049 = vmul.f32 %v2033, 1.442695
        %v2050 = vpow.pop %v2049
        %v2051 = vmul.f32 %v2034, 1.442695
        %v2052 = vpow.pop %v2051
        %v2053 = vmul.f32 %v2035, 1.442695
        %v2054 = vpow.pop %v2053
        %v2055 = vmul.f32 %v2036, 1.442695
        %v2056 = vpow.pop %v2055
        %v2057 = vmul.f32 %v2037, 1.442695
        %v2058 = vpow.pop %v2057
        %v2059 = vmul.f32 %v2038, 1.442695
        %v2060 = vpow.pop %v2059
        %v2061 = vmul.f32 %v2039, 1.442695
        %v2062 = vpow.pop %v2061
        %v2063 = vmul.f32 %v2040, 1.442695
        %v2064 = vpow.pop %v2063
        %v2065 = vmul.f32 %v2041, 1.442695
        %v2066 = vpow.pop %v2065
        %v2067 = vmul.f32 %v2042, 1.442695
        %v2068 = vpow.pop %v2067
        %v2069 = vmul.f32 %v2043, 1.442695
        %v2070 = vpow.pop %v2069
        %v2071 = vmul.f32 %v2044, 1.442695
        %v2072 = vpow.pop %v2071
        %v2073 = vmul.f32 %v2045, 1.442695
        %v2074 = vpow.pop %v2073
        %v2075 = vmul.f32 %v2046, 1.442695
        %v2076 = vpow.pop %v2075
        %v2077 = vmul.f32 %v2047, 1.442695
        %v2078 = vpow.pop %v2077
        %v2079 = vmul.f32 %v2048, 1.442695
        %v2080 = vpow.pop %v2079
        %2081 = vadd.xlane.f32.xlu0 %v2050
        %v2082 = vpop.xlane.xlu0 %2081
        %2083 = vadd.xlane.f32.xlu0 %v2052
        %v2084 = vpop.xlane.xlu0 %2083
        %2085 = vadd.xlane.f32.xlu0 %v2054
        %v2086 = vpop.xlane.xlu0 %2085
        %2087 = vadd.xlane.f32.xlu0 %v2056
        %v2088 = vpop.xlane.xlu0 %2087
        %2089 = vadd.xlane.f32.xlu0 %v2058
        %v2090 = vpop.xlane.xlu0 %2089
        %2091 = vadd.xlane.f32.xlu0 %v2060
        %v2092 = vpop.xlane.xlu0 %2091
        %2093 = vadd.xlane.f32.xlu0 %v2062
        %v2094 = vpop.xlane.xlu0 %2093
        %2095 = vadd.xlane.f32.xlu0 %v2064
        %v2096 = vpop.xlane.xlu0 %2095
        %2097 = vadd.xlane.f32.xlu0 %v2066
        %v2098 = vpop.xlane.xlu0 %2097
        %2099 = vadd.xlane.f32.xlu0 %v2068
        %v2100 = vpop.xlane.xlu0 %2099
        %2101 = vadd.xlane.f32.xlu0 %v2070
        %v2102 = vpop.xlane.xlu0 %2101
        %2103 = vadd.xlane.f32.xlu0 %v2072
        %v2104 = vpop.xlane.xlu0 %2103
        %2105 = vadd.xlane.f32.xlu0 %v2074
        %v2106 = vpop.xlane.xlu0 %2105
        %2107 = vadd.xlane.f32.xlu0 %v2076
        %v2108 = vpop.xlane.xlu0 %2107
        %2109 = vadd.xlane.f32.xlu0 %v2078
        %v2110 = vpop.xlane.xlu0 %2109
        %2111 = vadd.xlane.f32.xlu0 %v2080
        %v2112 = vpop.xlane.xlu0 %2111
        %v2113 = vrcp.pop %v2082
        %v2114 = vrcp.pop %v2084
        %v2115 = vrcp.pop %v2086
        %v2116 = vrcp.pop %v2088
        %v2117 = vrcp.pop %v2090
        %v2118 = vrcp.pop %v2092
        %v2119 = vrcp.pop %v2094
        %v2120 = vrcp.pop %v2096
        %v2121 = vrcp.pop %v2098
        %v2122 = vrcp.pop %v2100
        %v2123 = vrcp.pop %v2102
        %v2124 = vrcp.pop %v2104
        %v2125 = vrcp.pop %v2106
        %v2126 = vrcp.pop %v2108
        %v2127 = vrcp.pop %v2110
        %v2128 = vrcp.pop %v2112
        %2145 = vrot.lane.b32.xlu0 %v1068, 96
        %v2146 = vpop.permute.xlu0 %2145
        %2147 = vrot.lane.b32.xlu0 %v1073, 96
        %v2148 = vpop.permute.xlu0 %2147
        %2149 = vrot.lane.b32.xlu0 %v1078, 96
        %v2150 = vpop.permute.xlu0 %2149
        %2151 = vrot.lane.b32.xlu0 %v1083, 96
        %v2152 = vpop.permute.xlu0 %2151
        %2153 = vrot.lane.b32.xlu0 %v1088, 96
        %v2154 = vpop.permute.xlu0 %2153
        %2155 = vrot.lane.b32.xlu0 %v1093, 96
        %v2156 = vpop.permute.xlu0 %2155
        %2157 = vrot.lane.b32.xlu0 %v1098, 96
        %v2158 = vpop.permute.xlu0 %2157
        %2159 = vrot.lane.b32.xlu0 %v1103, 96
        %v2160 = vpop.permute.xlu0 %2159
        %2161 = vrot.lane.b32.xlu0 %v1108, 96
        %v2162 = vpop.permute.xlu0 %2161
        %2163 = vrot.lane.b32.xlu0 %v1113, 96
        %v2164 = vpop.permute.xlu0 %2163
        %2165 = vrot.lane.b32.xlu0 %v1118, 96
        %v2166 = vpop.permute.xlu0 %2165
        %2167 = vrot.lane.b32.xlu0 %v1123, 96
        %v2168 = vpop.permute.xlu0 %2167
        %2169 = vrot.lane.b32.xlu0 %v1128, 96
        %v2170 = vpop.permute.xlu0 %2169
        %2171 = vrot.lane.b32.xlu0 %v1133, 96
        %v2172 = vpop.permute.xlu0 %2171
        %2173 = vrot.lane.b32.xlu0 %v1138, 96
        %v2174 = vpop.permute.xlu0 %2173
        %2175 = vrot.lane.b32.xlu0 %v1143, 96
        %v2176 = vpop.permute.xlu0 %2175
        %2193 = vmatprep.subr.mxu0 0.0
        %2194 = vmatpush1.msra.mxu0 %v2176
        %2195 = vmatprep.subr.mxu0 0.0
        %2196 = vmatpush1.msra.mxu0 %v2174
        %2197 = vmatprep.subr.mxu0 0.0
        %2198 = vmatpush1.msra.mxu0 %v2172
        %2199 = vmatprep.subr.mxu0 0.0
        %2200 = vmatpush1.msra.mxu0 %v2170
        %2201 = vmatprep.subr.mxu0 0.0
        %2202 = vmatpush1.msra.mxu0 %v2168
        %2203 = vmatprep.subr.mxu0 0.0
        %2204 = vmatpush1.msra.mxu0 %v2166
        %2205 = vmatprep.subr.mxu0 0.0
        %2206 = vmatpush1.msra.mxu0 %v2164
        %2207 = vmatprep.subr.mxu0 0.0
        %2208 = vmatpush1.msra.mxu0 %v2162
        %2209 = vmatprep.subr.mxu0 0.0
        %2210 = vmatpush1.msra.mxu0 %v2160
        %2211 = vmatprep.subr.mxu0 0.0
        %2212 = vmatpush1.msra.mxu0 %v2158
        %2213 = vmatprep.subr.mxu0 0.0
        %2214 = vmatpush1.msra.mxu0 %v2156
        %2215 = vmatprep.subr.mxu0 0.0
        %2216 = vmatpush1.msra.mxu0 %v2154
        %2217 = vmatprep.subr.mxu0 0.0
        %2218 = vmatpush1.msra.mxu0 %v2152
        %2219 = vmatprep.subr.mxu0 0.0
        %2220 = vmatpush1.msra.mxu0 %v2150
        %2221 = vmatprep.subr.mxu0 0.0
        %2222 = vmatpush1.msra.mxu0 %v2148
        %2223 = vmatprep.subr.mxu0 0.0
        %2224 = vmatpush1.msra.mxu0 %v2146
        %2225 = vmatprep.subr.mxu0 0.0
        %2226 = vmatpush2.msra.mxu0 0.0
        %2227 = vmatprep.subr.mxu0 0.0
        %2228 = vmatpush2.msra.mxu0 0.0
        %2229 = vmatprep.subr.mxu0 0.0
        %2230 = vmatpush2.msra.mxu0 0.0
        %2231 = vmatprep.subr.mxu0 0.0
        %2232 = vmatpush2.msra.mxu0 0.0
        %2233 = vmatprep.subr.mxu0 0.0
        %2234 = vmatpush2.msra.mxu0 0.0
        %2235 = vmatprep.subr.mxu0 0.0
        %2236 = vmatpush2.msra.mxu0 0.0
        %2237 = vmatprep.subr.mxu0 0.0
        %2238 = vmatpush2.msra.mxu0 0.0
        %2239 = vmatprep.subr.mxu0 0.0
        %2240 = vmatpush2.msra.mxu0 0.0
        %2241 = vmatprep.subr.mxu0 0.0
        %2242 = vmatpush2.msra.mxu0 0.0
        %2243 = vmatprep.subr.mxu0 0.0
        %2244 = vmatpush2.msra.mxu0 0.0
        %2245 = vmatprep.subr.mxu0 0.0
        %2246 = vmatpush2.msra.mxu0 0.0
        %2247 = vmatprep.subr.mxu0 0.0
        %2248 = vmatpush2.msra.mxu0 0.0
        %2249 = vmatprep.subr.mxu0 0.0
        %2250 = vmatpush2.msra.mxu0 0.0
        %2251 = vmatprep.subr.mxu0 0.0
        %2252 = vmatpush2.msra.mxu0 0.0
        %2253 = vmatprep.subr.mxu0 0.0
        %2254 = vmatpush2.msra.mxu0 0.0
        %2255 = vmatprep.subr.mxu0 0.0
        %2256 = vmatpush2.msra.mxu0 0.0
        %2257 = vmatprep.mubr.f32.mxu0 0.0
        %2258 = vmatmul.mubr.f32.gmra.mxu0 %v2050
        %v2259 = vpop.f32.mrf.mxu0
        %v2260 = vadd.f32 0.0, %v2259
        %v2261 = vpop.f32.mrf.mxu0
        %2262 = vmatprep.mubr.f32.mxu0 0.0
        %2263 = vmatmul.mubr.f32.gmra.mxu0 %v2052
        %v2264 = vpop.f32.mrf.mxu0
        %v2265 = vadd.f32 0.0, %v2264
        %v2266 = vpop.f32.mrf.mxu0
        %2267 = vmatprep.mubr.f32.mxu0 0.0
        %2268 = vmatmul.mubr.f32.gmra.mxu0 %v2054
        %v2269 = vpop.f32.mrf.mxu0
        %v2270 = vadd.f32 0.0, %v2269
        %v2271 = vpop.f32.mrf.mxu0
        %2272 = vmatprep.mubr.f32.mxu0 0.0
        %2273 = vmatmul.mubr.f32.gmra.mxu0 %v2056
        %v2274 = vpop.f32.mrf.mxu0
        %v2275 = vadd.f32 0.0, %v2274
        %v2276 = vpop.f32.mrf.mxu0
        %2277 = vmatprep.mubr.f32.mxu0 0.0
        %2278 = vmatmul.mubr.f32.gmra.mxu0 %v2058
        %v2279 = vpop.f32.mrf.mxu0
        %v2280 = vadd.f32 0.0, %v2279
        %v2281 = vpop.f32.mrf.mxu0
        %2282 = vmatprep.mubr.f32.mxu0 0.0
        %2283 = vmatmul.mubr.f32.gmra.mxu0 %v2060
        %v2284 = vpop.f32.mrf.mxu0
        %v2285 = vadd.f32 0.0, %v2284
        %v2286 = vpop.f32.mrf.mxu0
        %2287 = vmatprep.mubr.f32.mxu0 0.0
        %2288 = vmatmul.mubr.f32.gmra.mxu0 %v2062
        %v2289 = vpop.f32.mrf.mxu0
        %v2290 = vadd.f32 0.0, %v2289
        %v2291 = vpop.f32.mrf.mxu0
        %2292 = vmatprep.mubr.f32.mxu0 0.0
        %2293 = vmatmul.mubr.f32.gmra.mxu0 %v2064
        %v2294 = vpop.f32.mrf.mxu0
        %v2295 = vadd.f32 0.0, %v2294
        %v2296 = vpop.f32.mrf.mxu0
        %2297 = vmatprep.mubr.f32.mxu0 0.0
        %2298 = vmatmul.mubr.f32.gmra.mxu0 %v2066
        %v2299 = vpop.f32.mrf.mxu0
        %v2300 = vadd.f32 0.0, %v2299
        %v2301 = vpop.f32.mrf.mxu0
        %2302 = vmatprep.mubr.f32.mxu0 0.0
        %2303 = vmatmul.mubr.f32.gmra.mxu0 %v2068
        %v2304 = vpop.f32.mrf.mxu0
        %v2305 = vadd.f32 0.0, %v2304
        %v2306 = vpop.f32.mrf.mxu0
        %2307 = vmatprep.mubr.f32.mxu0 0.0
        %2308 = vmatmul.mubr.f32.gmra.mxu0 %v2070
        %v2309 = vpop.f32.mrf.mxu0
        %v2310 = vadd.f32 0.0, %v2309
        %v2311 = vpop.f32.mrf.mxu0
        %2312 = vmatprep.mubr.f32.mxu0 0.0
        %2313 = vmatmul.mubr.f32.gmra.mxu0 %v2072
        %v2314 = vpop.f32.mrf.mxu0
        %v2315 = vadd.f32 0.0, %v2314
        %v2316 = vpop.f32.mrf.mxu0
        %2317 = vmatprep.mubr.f32.mxu0 0.0
        %2318 = vmatmul.mubr.f32.gmra.mxu0 %v2074
        %v2319 = vpop.f32.mrf.mxu0
        %v2320 = vadd.f32 0.0, %v2319
        %v2321 = vpop.f32.mrf.mxu0
        %2322 = vmatprep.mubr.f32.mxu0 0.0
        %2323 = vmatmul.mubr.f32.gmra.mxu0 %v2076
        %v2324 = vpop.f32.mrf.mxu0
        %v2325 = vadd.f32 0.0, %v2324
        %v2326 = vpop.f32.mrf.mxu0
        %2327 = vmatprep.mubr.f32.mxu0 0.0
        %2328 = vmatmul.mubr.f32.gmra.mxu0 %v2078
        %v2329 = vpop.f32.mrf.mxu0
        %v2330 = vadd.f32 0.0, %v2329
        %v2331 = vpop.f32.mrf.mxu0
        %2332 = vmatprep.mubr.f32.mxu0 0.0
        %2333 = vmatmul.mubr.f32.gmra.mxu0 %v2080
        %v2334 = vpop.f32.mrf.mxu0
        %v2335 = vadd.f32 0.0, %v2334
        %v2336 = vpop.f32.mrf.mxu0
        %2337 = vdwg.mxu0
        %v2338 = vmul.f32 %v2260, %v2113
        %v2339 = vmul.f32 %v2265, %v2114
        %v2340 = vmul.f32 %v2270, %v2115
        %v2341 = vmul.f32 %v2275, %v2116
        %v2342 = vmul.f32 %v2280, %v2117
        %v2343 = vmul.f32 %v2285, %v2118
        %v2344 = vmul.f32 %v2290, %v2119
        %v2345 = vmul.f32 %v2295, %v2120
        %v2346 = vmul.f32 %v2300, %v2121
        %v2347 = vmul.f32 %v2305, %v2122
        %v2348 = vmul.f32 %v2310, %v2123
        %v2349 = vmul.f32 %v2315, %v2124
        %v2350 = vmul.f32 %v2320, %v2125
        %v2351 = vmul.f32 %v2325, %v2126
        %v2352 = vmul.f32 %v2330, %v2127
        %v2353 = vmul.f32 %v2335, %v2128
        %2370 = vrot.lane.b32.xlu0 %v2338, 32
        %v2371 = vpop.permute.xlu0 %2370
        %2372 = vrot.lane.b32.xlu0 %v2339, 32
        %v2373 = vpop.permute.xlu0 %2372
        %2374 = vrot.lane.b32.xlu0 %v2340, 32
        %v2375 = vpop.permute.xlu0 %2374
        %2376 = vrot.lane.b32.xlu0 %v2341, 32
        %v2377 = vpop.permute.xlu0 %2376
        %2378 = vrot.lane.b32.xlu0 %v2342, 32
        %v2379 = vpop.permute.xlu0 %2378
        %2380 = vrot.lane.b32.xlu0 %v2343, 32
        %v2381 = vpop.permute.xlu0 %2380
        %2382 = vrot.lane.b32.xlu0 %v2344, 32
        %v2383 = vpop.permute.xlu0 %2382
        %2384 = vrot.lane.b32.xlu0 %v2345, 32
        %v2385 = vpop.permute.xlu0 %2384
        %2386 = vrot.lane.b32.xlu0 %v2346, 32
        %v2387 = vpop.permute.xlu0 %2386
        %2388 = vrot.lane.b32.xlu0 %v2347, 32
        %v2389 = vpop.permute.xlu0 %2388
        %2390 = vrot.lane.b32.xlu0 %v2348, 32
        %v2391 = vpop.permute.xlu0 %2390
        %2392 = vrot.lane.b32.xlu0 %v2349, 32
        %v2393 = vpop.permute.xlu0 %2392
        %2394 = vrot.lane.b32.xlu0 %v2350, 32
        %v2395 = vpop.permute.xlu0 %2394
        %2396 = vrot.lane.b32.xlu0 %v2351, 32
        %v2397 = vpop.permute.xlu0 %2396
        %2398 = vrot.lane.b32.xlu0 %v2352, 32
        %v2399 = vpop.permute.xlu0 %2398
        %2400 = vrot.lane.b32.xlu0 %v2353, 32
        %v2401 = vpop.permute.xlu0 %2400
        %vm2418 = vcmask 523520
        %2419 = vst.msk [vmem:[#allocation2] sm:$0xff] %vm2418, %v2371
        %2420 = vst.msk [vmem:[#allocation2 + $0x8] sm:$0xff] %vm2418, %v2373
        %2421 = vst.msk [vmem:[#allocation2 + $0x10] sm:$0xff] %vm2418, %v2375
        %2422 = vst.msk [vmem:[#allocation2 + $0x18] sm:$0xff] %vm2418, %v2377
        %2423 = vst.msk [vmem:[#allocation2 + $0x20] sm:$0xff] %vm2418, %v2379
        %2424 = vst.msk [vmem:[#allocation2 + $0x28] sm:$0xff] %vm2418, %v2381
        %2425 = vst.msk [vmem:[#allocation2 + $0x30] sm:$0xff] %vm2418, %v2383
        %2426 = vst.msk [vmem:[#allocation2 + $0x38] sm:$0xff] %vm2418, %v2385
        %2427 = vst.msk [vmem:[#allocation2 + $0x40] sm:$0xff] %vm2418, %v2387
        %2428 = vst.msk [vmem:[#allocation2 + $0x48] sm:$0xff] %vm2418, %v2389
        %2429 = vst.msk [vmem:[#allocation2 + $0x50] sm:$0xff] %vm2418, %v2391
        %2430 = vst.msk [vmem:[#allocation2 + $0x58] sm:$0xff] %vm2418, %v2393
        %2431 = vst.msk [vmem:[#allocation2 + $0x60] sm:$0xff] %vm2418, %v2395
        %2432 = vst.msk [vmem:[#allocation2 + $0x68] sm:$0xff] %vm2418, %v2397
        %2433 = vst.msk [vmem:[#allocation2 + $0x70] sm:$0xff] %vm2418, %v2399
        %2434 = vst.msk [vmem:[#allocation2 + $0x78] sm:$0xff] %vm2418, %v2401
        %2435 = vrot.lane.b32.xlu0 %v1165, 64
        %v2436 = vpop.permute.xlu0 %2435
        %2437 = vrot.lane.b32.xlu0 %v1166, 64
        %v2438 = vpop.permute.xlu0 %2437
        %2439 = vrot.lane.b32.xlu0 %v1167, 64
        %v2440 = vpop.permute.xlu0 %2439
        %2441 = vrot.lane.b32.xlu0 %v1168, 64
        %v2442 = vpop.permute.xlu0 %2441
        %2443 = vrot.lane.b32.xlu0 %v1169, 64
        %v2444 = vpop.permute.xlu0 %2443
        %2445 = vrot.lane.b32.xlu0 %v1170, 64
        %v2446 = vpop.permute.xlu0 %2445
        %2447 = vrot.lane.b32.xlu0 %v1171, 64
        %v2448 = vpop.permute.xlu0 %2447
        %2449 = vrot.lane.b32.xlu0 %v1172, 64
        %v2450 = vpop.permute.xlu0 %2449
        %2451 = vrot.lane.b32.xlu0 %v1173, 64
        %v2452 = vpop.permute.xlu0 %2451
        %2453 = vrot.lane.b32.xlu0 %v1174, 64
        %v2454 = vpop.permute.xlu0 %2453
        %2455 = vrot.lane.b32.xlu0 %v1175, 64
        %v2456 = vpop.permute.xlu0 %2455
        %2457 = vrot.lane.b32.xlu0 %v1176, 64
        %v2458 = vpop.permute.xlu0 %2457
        %2459 = vrot.lane.b32.xlu0 %v1177, 64
        %v2460 = vpop.permute.xlu0 %2459
        %2461 = vrot.lane.b32.xlu0 %v1178, 64
        %v2462 = vpop.permute.xlu0 %2461
        %2463 = vrot.lane.b32.xlu0 %v1179, 64
        %v2464 = vpop.permute.xlu0 %2463
        %2465 = vrot.lane.b32.xlu0 %v1180, 64
        %v2466 = vpop.permute.xlu0 %2465
        %2467 = vrot.lane.b32.xlu0 %v900, 64
        %v2468 = vpop.permute.xlu0 %2467
        %2469 = vrot.lane.b32.xlu0 %v905, 64
        %v2470 = vpop.permute.xlu0 %2469
        %2471 = vrot.lane.b32.xlu0 %v910, 64
        %v2472 = vpop.permute.xlu0 %2471
        %2473 = vrot.lane.b32.xlu0 %v915, 64
        %v2474 = vpop.permute.xlu0 %2473
        %2475 = vrot.lane.b32.xlu0 %v920, 64
        %v2476 = vpop.permute.xlu0 %2475
        %2477 = vrot.lane.b32.xlu0 %v925, 64
        %v2478 = vpop.permute.xlu0 %2477
        %2479 = vrot.lane.b32.xlu0 %v930, 64
        %v2480 = vpop.permute.xlu0 %2479
        %2481 = vrot.lane.b32.xlu0 %v935, 64
        %v2482 = vpop.permute.xlu0 %2481
        %2483 = vrot.lane.b32.xlu0 %v940, 64
        %v2484 = vpop.permute.xlu0 %2483
        %2485 = vrot.lane.b32.xlu0 %v945, 64
        %v2486 = vpop.permute.xlu0 %2485
        %2487 = vrot.lane.b32.xlu0 %v950, 64
        %v2488 = vpop.permute.xlu0 %2487
        %2489 = vrot.lane.b32.xlu0 %v955, 64
        %v2490 = vpop.permute.xlu0 %2489
        %2491 = vrot.lane.b32.xlu0 %v960, 64
        %v2492 = vpop.permute.xlu0 %2491
        %2493 = vrot.lane.b32.xlu0 %v965, 64
        %v2494 = vpop.permute.xlu0 %2493
        %2495 = vrot.lane.b32.xlu0 %v970, 64
        %v2496 = vpop.permute.xlu0 %2495
        %2497 = vrot.lane.b32.xlu0 %v975, 64
        %v2498 = vpop.permute.xlu0 %2497
        %v2499 = vsel %vm1181, %v2436, 0
        %v2501 = vsel %vm1181, %v2438, 0
        %v2503 = vsel %vm1181, %v2440, 0
        %v2505 = vsel %vm1181, %v2442, 0
        %v2507 = vsel %vm1181, %v2444, 0
        %v2509 = vsel %vm1181, %v2446, 0
        %v2511 = vsel %vm1181, %v2448, 0
        %v2513 = vsel %vm1181, %v2450, 0
        %v2515 = vsel %vm1181, %v2452, 0
        %v2517 = vsel %vm1181, %v2454, 0
        %v2519 = vsel %vm1181, %v2456, 0
        %v2521 = vsel %vm1181, %v2458, 0
        %v2523 = vsel %vm1181, %v2460, 0
        %v2525 = vsel %vm1181, %v2462, 0
        %v2527 = vsel %vm1181, %v2464, 0
        %v2529 = vsel %vm1181, %v2466, 0
        %v2531 = vsel %vm1181, %v2468, 0
        %v2533 = vsel %vm1181, %v2470, 0
        %v2535 = vsel %vm1181, %v2472, 0
        %v2537 = vsel %vm1181, %v2474, 0
        %v2539 = vsel %vm1181, %v2476, 0
        %v2541 = vsel %vm1181, %v2478, 0
        %v2543 = vsel %vm1181, %v2480, 0
        %v2545 = vsel %vm1181, %v2482, 0
        %v2547 = vsel %vm1181, %v2484, 0
        %v2549 = vsel %vm1181, %v2486, 0
        %v2551 = vsel %vm1181, %v2488, 0
        %v2553 = vsel %vm1181, %v2490, 0
        %v2555 = vsel %vm1181, %v2492, 0
        %v2557 = vsel %vm1181, %v2494, 0
        %v2559 = vsel %vm1181, %v2496, 0
        %v2561 = vsel %vm1181, %v2498, 0
        %2563 = vmatprep.subr.mxu0 0.0
        %2564 = vmatpush1.xpose.msra.mxu0 %v2561
        %2565 = vmatprep.subr.mxu0 0.0
        %2566 = vmatpush1.xpose.msra.mxu0 %v2559
        %2567 = vmatprep.subr.mxu0 0.0
        %2568 = vmatpush1.xpose.msra.mxu0 %v2557
        %2569 = vmatprep.subr.mxu0 0.0
        %2570 = vmatpush1.xpose.msra.mxu0 %v2555
        %2571 = vmatprep.subr.mxu0 0.0
        %2572 = vmatpush1.xpose.msra.mxu0 %v2553
        %2573 = vmatprep.subr.mxu0 0.0
        %2574 = vmatpush1.xpose.msra.mxu0 %v2551
        %2575 = vmatprep.subr.mxu0 0.0
        %2576 = vmatpush1.xpose.msra.mxu0 %v2549
        %2577 = vmatprep.subr.mxu0 0.0
        %2578 = vmatpush1.xpose.msra.mxu0 %v2547
        %2579 = vmatprep.subr.mxu0 0.0
        %2580 = vmatpush1.xpose.msra.mxu0 %v2545
        %2581 = vmatprep.subr.mxu0 0.0
        %2582 = vmatpush1.xpose.msra.mxu0 %v2543
        %2583 = vmatprep.subr.mxu0 0.0
        %2584 = vmatpush1.xpose.msra.mxu0 %v2541
        %2585 = vmatprep.subr.mxu0 0.0
        %2586 = vmatpush1.xpose.msra.mxu0 %v2539
        %2587 = vmatprep.subr.mxu0 0.0
        %2588 = vmatpush1.xpose.msra.mxu0 %v2537
        %2589 = vmatprep.subr.mxu0 0.0
        %2590 = vmatpush1.xpose.msra.mxu0 %v2535
        %2591 = vmatprep.subr.mxu0 0.0
        %2592 = vmatpush1.xpose.msra.mxu0 %v2533
        %2593 = vmatprep.subr.mxu0 0.0
        %2594 = vmatpush1.xpose.msra.mxu0 %v2531
        %2595 = vmatprep.subr.mxu0 0.0
        %2596 = vmatpush2.xpose.msra.mxu0 0.0
        %2597 = vmatprep.subr.mxu0 0.0
        %2598 = vmatpush2.xpose.msra.mxu0 0.0
        %2599 = vmatprep.subr.mxu0 0.0
        %2600 = vmatpush2.xpose.msra.mxu0 0.0
        %2601 = vmatprep.subr.mxu0 0.0
        %2602 = vmatpush2.xpose.msra.mxu0 0.0
        %2603 = vmatprep.subr.mxu0 0.0
        %2604 = vmatpush2.xpose.msra.mxu0 0.0
        %2605 = vmatprep.subr.mxu0 0.0
        %2606 = vmatpush2.xpose.msra.mxu0 0.0
        %2607 = vmatprep.subr.mxu0 0.0
        %2608 = vmatpush2.xpose.msra.mxu0 0.0
        %2609 = vmatprep.subr.mxu0 0.0
        %2610 = vmatpush2.xpose.msra.mxu0 0.0
        %2611 = vmatprep.subr.mxu0 0.0
        %2612 = vmatpush2.xpose.msra.mxu0 0.0
        %2613 = vmatprep.subr.mxu0 0.0
        %2614 = vmatpush2.xpose.msra.mxu0 0.0
        %2615 = vmatprep.subr.mxu0 0.0
        %2616 = vmatpush2.xpose.msra.mxu0 0.0
        %2617 = vmatprep.subr.mxu0 0.0
        %2618 = vmatpush2.xpose.msra.mxu0 0.0
        %2619 = vmatprep.subr.mxu0 0.0
        %2620 = vmatpush2.xpose.msra.mxu0 0.0
        %2621 = vmatprep.subr.mxu0 0.0
        %2622 = vmatpush2.xpose.msra.mxu0 0.0
        %2623 = vmatprep.subr.mxu0 0.0
        %2624 = vmatpush2.xpose.msra.mxu0 0.0
        %2625 = vmatprep.subr.mxu0 0.0
        %2626 = vmatpush2.xpose.msra.mxu0 0.0
        %2627 = vmatprep.mubr.f32.mxu0 0.0
        %2628 = vmatmul.mubr.f32.gmra.mxu0 %v2499
        %v2629 = vpop.f32.mrf.mxu0
        %v2630 = vadd.f32 0.0, %v2629
        %v2631 = vpop.f32.mrf.mxu0
        %2632 = vmatprep.mubr.f32.mxu0 0.0
        %2633 = vmatmul.mubr.f32.gmra.mxu0 %v2501
        %v2634 = vpop.f32.mrf.mxu0
        %v2635 = vadd.f32 0.0, %v2634
        %v2636 = vpop.f32.mrf.mxu0
        %2637 = vmatprep.mubr.f32.mxu0 0.0
        %2638 = vmatmul.mubr.f32.gmra.mxu0 %v2503
        %v2639 = vpop.f32.mrf.mxu0
        %v2640 = vadd.f32 0.0, %v2639
        %v2641 = vpop.f32.mrf.mxu0
        %2642 = vmatprep.mubr.f32.mxu0 0.0
        %2643 = vmatmul.mubr.f32.gmra.mxu0 %v2505
        %v2644 = vpop.f32.mrf.mxu0
        %v2645 = vadd.f32 0.0, %v2644
        %v2646 = vpop.f32.mrf.mxu0
        %2647 = vmatprep.mubr.f32.mxu0 0.0
        %2648 = vmatmul.mubr.f32.gmra.mxu0 %v2507
        %v2649 = vpop.f32.mrf.mxu0
        %v2650 = vadd.f32 0.0, %v2649
        %v2651 = vpop.f32.mrf.mxu0
        %2652 = vmatprep.mubr.f32.mxu0 0.0
        %2653 = vmatmul.mubr.f32.gmra.mxu0 %v2509
        %v2654 = vpop.f32.mrf.mxu0
        %v2655 = vadd.f32 0.0, %v2654
        %v2656 = vpop.f32.mrf.mxu0
        %2657 = vmatprep.mubr.f32.mxu0 0.0
        %2658 = vmatmul.mubr.f32.gmra.mxu0 %v2511
        %v2659 = vpop.f32.mrf.mxu0
        %v2660 = vadd.f32 0.0, %v2659
        %v2661 = vpop.f32.mrf.mxu0
        %2662 = vmatprep.mubr.f32.mxu0 0.0
        %2663 = vmatmul.mubr.f32.gmra.mxu0 %v2513
        %v2664 = vpop.f32.mrf.mxu0
        %v2665 = vadd.f32 0.0, %v2664
        %v2666 = vpop.f32.mrf.mxu0
        %2667 = vmatprep.mubr.f32.mxu0 0.0
        %2668 = vmatmul.mubr.f32.gmra.mxu0 %v2515
        %v2669 = vpop.f32.mrf.mxu0
        %v2670 = vadd.f32 0.0, %v2669
        %v2671 = vpop.f32.mrf.mxu0
        %2672 = vmatprep.mubr.f32.mxu0 0.0
        %2673 = vmatmul.mubr.f32.gmra.mxu0 %v2517
        %v2674 = vpop.f32.mrf.mxu0
        %v2675 = vadd.f32 0.0, %v2674
        %v2676 = vpop.f32.mrf.mxu0
        %2677 = vmatprep.mubr.f32.mxu0 0.0
        %2678 = vmatmul.mubr.f32.gmra.mxu0 %v2519
        %v2679 = vpop.f32.mrf.mxu0
        %v2680 = vadd.f32 0.0, %v2679
        %v2681 = vpop.f32.mrf.mxu0
        %2682 = vmatprep.mubr.f32.mxu0 0.0
        %2683 = vmatmul.mubr.f32.gmra.mxu0 %v2521
        %v2684 = vpop.f32.mrf.mxu0
        %v2685 = vadd.f32 0.0, %v2684
        %v2686 = vpop.f32.mrf.mxu0
        %2687 = vmatprep.mubr.f32.mxu0 0.0
        %2688 = vmatmul.mubr.f32.gmra.mxu0 %v2523
        %v2689 = vpop.f32.mrf.mxu0
        %v2690 = vadd.f32 0.0, %v2689
        %v2691 = vpop.f32.mrf.mxu0
        %2692 = vmatprep.mubr.f32.mxu0 0.0
        %2693 = vmatmul.mubr.f32.gmra.mxu0 %v2525
        %v2694 = vpop.f32.mrf.mxu0
        %v2695 = vadd.f32 0.0, %v2694
        %v2696 = vpop.f32.mrf.mxu0
        %2697 = vmatprep.mubr.f32.mxu0 0.0
        %2698 = vmatmul.mubr.f32.gmra.mxu0 %v2527
        %v2699 = vpop.f32.mrf.mxu0
        %v2700 = vadd.f32 0.0, %v2699
        %v2701 = vpop.f32.mrf.mxu0
        %2702 = vmatprep.mubr.f32.mxu0 0.0
        %2703 = vmatmul.mubr.f32.gmra.mxu0 %v2529
        %v2704 = vpop.f32.mrf.mxu0
        %v2705 = vadd.f32 0.0, %v2704
        %v2706 = vpop.f32.mrf.mxu0
        %2707 = vdwg.mxu0
        %2708 = vmax.xlane.f32.xlu0 %v2630
        %v2709 = vpop.xlane.xlu0 %2708
        %2710 = vmax.xlane.f32.xlu0 %v2635
        %v2711 = vpop.xlane.xlu0 %2710
        %2712 = vmax.xlane.f32.xlu0 %v2640
        %v2713 = vpop.xlane.xlu0 %2712
        %2714 = vmax.xlane.f32.xlu0 %v2645
        %v2715 = vpop.xlane.xlu0 %2714
        %2716 = vmax.xlane.f32.xlu0 %v2650
        %v2717 = vpop.xlane.xlu0 %2716
        %2718 = vmax.xlane.f32.xlu0 %v2655
        %v2719 = vpop.xlane.xlu0 %2718
        %2720 = vmax.xlane.f32.xlu0 %v2660
        %v2721 = vpop.xlane.xlu0 %2720
        %2722 = vmax.xlane.f32.xlu0 %v2665
        %v2723 = vpop.xlane.xlu0 %2722
        %2724 = vmax.xlane.f32.xlu0 %v2670
        %v2725 = vpop.xlane.xlu0 %2724
        %2726 = vmax.xlane.f32.xlu0 %v2675
        %v2727 = vpop.xlane.xlu0 %2726
        %2728 = vmax.xlane.f32.xlu0 %v2680
        %v2729 = vpop.xlane.xlu0 %2728
        %2730 = vmax.xlane.f32.xlu0 %v2685
        %v2731 = vpop.xlane.xlu0 %2730
        %2732 = vmax.xlane.f32.xlu0 %v2690
        %v2733 = vpop.xlane.xlu0 %2732
        %2734 = vmax.xlane.f32.xlu0 %v2695
        %v2735 = vpop.xlane.xlu0 %2734
        %2736 = vmax.xlane.f32.xlu0 %v2700
        %v2737 = vpop.xlane.xlu0 %2736
        %2738 = vmax.xlane.f32.xlu0 %v2705
        %v2739 = vpop.xlane.xlu0 %2738
        %v2740 = vsub.f32 %v2630, %v2709
        %v2741 = vsub.f32 %v2635, %v2711
        %v2742 = vsub.f32 %v2640, %v2713
        %v2743 = vsub.f32 %v2645, %v2715
        %v2744 = vsub.f32 %v2650, %v2717
        %v2745 = vsub.f32 %v2655, %v2719
        %v2746 = vsub.f32 %v2660, %v2721
        %v2747 = vsub.f32 %v2665, %v2723
        %v2748 = vsub.f32 %v2670, %v2725
        %v2749 = vsub.f32 %v2675, %v2727
        %v2750 = vsub.f32 %v2680, %v2729
        %v2751 = vsub.f32 %v2685, %v2731
        %v2752 = vsub.f32 %v2690, %v2733
        %v2753 = vsub.f32 %v2695, %v2735
        %v2754 = vsub.f32 %v2700, %v2737
        %v2755 = vsub.f32 %v2705, %v2739
        %v2756 = vmul.f32 %v2740, 1.442695
        %v2757 = vpow.pop %v2756
        %v2758 = vmul.f32 %v2741, 1.442695
        %v2759 = vpow.pop %v2758
        %v2760 = vmul.f32 %v2742, 1.442695
        %v2761 = vpow.pop %v2760
        %v2762 = vmul.f32 %v2743, 1.442695
        %v2763 = vpow.pop %v2762
        %v2764 = vmul.f32 %v2744, 1.442695
        %v2765 = vpow.pop %v2764
        %v2766 = vmul.f32 %v2745, 1.442695
        %v2767 = vpow.pop %v2766
        %v2768 = vmul.f32 %v2746, 1.442695
        %v2769 = vpow.pop %v2768
        %v2770 = vmul.f32 %v2747, 1.442695
        %v2771 = vpow.pop %v2770
        %v2772 = vmul.f32 %v2748, 1.442695
        %v2773 = vpow.pop %v2772
        %v2774 = vmul.f32 %v2749, 1.442695
        %v2775 = vpow.pop %v2774
        %v2776 = vmul.f32 %v2750, 1.442695
        %v2777 = vpow.pop %v2776
        %v2778 = vmul.f32 %v2751, 1.442695
        %v2779 = vpow.pop %v2778
        %v2780 = vmul.f32 %v2752, 1.442695
        %v2781 = vpow.pop %v2780
        %v2782 = vmul.f32 %v2753, 1.442695
        %v2783 = vpow.pop %v2782
        %v2784 = vmul.f32 %v2754, 1.442695
        %v2785 = vpow.pop %v2784
        %v2786 = vmul.f32 %v2755, 1.442695
        %v2787 = vpow.pop %v2786
        %2788 = vadd.xlane.f32.xlu0 %v2757
        %v2789 = vpop.xlane.xlu0 %2788
        %2790 = vadd.xlane.f32.xlu0 %v2759
        %v2791 = vpop.xlane.xlu0 %2790
        %2792 = vadd.xlane.f32.xlu0 %v2761
        %v2793 = vpop.xlane.xlu0 %2792
        %2794 = vadd.xlane.f32.xlu0 %v2763
        %v2795 = vpop.xlane.xlu0 %2794
        %2796 = vadd.xlane.f32.xlu0 %v2765
        %v2797 = vpop.xlane.xlu0 %2796
        %2798 = vadd.xlane.f32.xlu0 %v2767
        %v2799 = vpop.xlane.xlu0 %2798
        %2800 = vadd.xlane.f32.xlu0 %v2769
        %v2801 = vpop.xlane.xlu0 %2800
        %2802 = vadd.xlane.f32.xlu0 %v2771
        %v2803 = vpop.xlane.xlu0 %2802
        %2804 = vadd.xlane.f32.xlu0 %v2773
        %v2805 = vpop.xlane.xlu0 %2804
        %2806 = vadd.xlane.f32.xlu0 %v2775
        %v2807 = vpop.xlane.xlu0 %2806
        %2808 = vadd.xlane.f32.xlu0 %v2777
        %v2809 = vpop.xlane.xlu0 %2808
        %2810 = vadd.xlane.f32.xlu0 %v2779
        %v2811 = vpop.xlane.xlu0 %2810
        %2812 = vadd.xlane.f32.xlu0 %v2781
        %v2813 = vpop.xlane.xlu0 %2812
        %2814 = vadd.xlane.f32.xlu0 %v2783
        %v2815 = vpop.xlane.xlu0 %2814
        %2816 = vadd.xlane.f32.xlu0 %v2785
        %v2817 = vpop.xlane.xlu0 %2816
        %2818 = vadd.xlane.f32.xlu0 %v2787
        %v2819 = vpop.xlane.xlu0 %2818
        %v2820 = vrcp.pop %v2789
        %v2821 = vrcp.pop %v2791
        %v2822 = vrcp.pop %v2793
        %v2823 = vrcp.pop %v2795
        %v2824 = vrcp.pop %v2797
        %v2825 = vrcp.pop %v2799
        %v2826 = vrcp.pop %v2801
        %v2827 = vrcp.pop %v2803
        %v2828 = vrcp.pop %v2805
        %v2829 = vrcp.pop %v2807
        %v2830 = vrcp.pop %v2809
        %v2831 = vrcp.pop %v2811
        %v2832 = vrcp.pop %v2813
        %v2833 = vrcp.pop %v2815
        %v2834 = vrcp.pop %v2817
        %v2835 = vrcp.pop %v2819
        %2836 = vrot.lane.b32.xlu0 %v1068, 64
        %v2837 = vpop.permute.xlu0 %2836
        %2838 = vrot.lane.b32.xlu0 %v1073, 64
        %v2839 = vpop.permute.xlu0 %2838
        %2840 = vrot.lane.b32.xlu0 %v1078, 64
        %v2841 = vpop.permute.xlu0 %2840
        %2842 = vrot.lane.b32.xlu0 %v1083, 64
        %v2843 = vpop.permute.xlu0 %2842
        %2844 = vrot.lane.b32.xlu0 %v1088, 64
        %v2845 = vpop.permute.xlu0 %2844
        %2846 = vrot.lane.b32.xlu0 %v1093, 64
        %v2847 = vpop.permute.xlu0 %2846
        %2848 = vrot.lane.b32.xlu0 %v1098, 64
        %v2849 = vpop.permute.xlu0 %2848
        %2850 = vrot.lane.b32.xlu0 %v1103, 64
        %v2851 = vpop.permute.xlu0 %2850
        %2852 = vrot.lane.b32.xlu0 %v1108, 64
        %v2853 = vpop.permute.xlu0 %2852
        %2854 = vrot.lane.b32.xlu0 %v1113, 64
        %v2855 = vpop.permute.xlu0 %2854
        %2856 = vrot.lane.b32.xlu0 %v1118, 64
        %v2857 = vpop.permute.xlu0 %2856
        %2858 = vrot.lane.b32.xlu0 %v1123, 64
        %v2859 = vpop.permute.xlu0 %2858
        %2860 = vrot.lane.b32.xlu0 %v1128, 64
        %v2861 = vpop.permute.xlu0 %2860
        %2862 = vrot.lane.b32.xlu0 %v1133, 64
        %v2863 = vpop.permute.xlu0 %2862
        %2864 = vrot.lane.b32.xlu0 %v1138, 64
        %v2865 = vpop.permute.xlu0 %2864
        %2866 = vrot.lane.b32.xlu0 %v1143, 64
        %v2867 = vpop.permute.xlu0 %2866
        %2884 = vmatprep.subr.mxu0 0.0
        %2885 = vmatpush1.msra.mxu0 %v2867
        %2886 = vmatprep.subr.mxu0 0.0
        %2887 = vmatpush1.msra.mxu0 %v2865
        %2888 = vmatprep.subr.mxu0 0.0
        %2889 = vmatpush1.msra.mxu0 %v2863
        %2890 = vmatprep.subr.mxu0 0.0
        %2891 = vmatpush1.msra.mxu0 %v2861
        %2892 = vmatprep.subr.mxu0 0.0
        %2893 = vmatpush1.msra.mxu0 %v2859
        %2894 = vmatprep.subr.mxu0 0.0
        %2895 = vmatpush1.msra.mxu0 %v2857
        %2896 = vmatprep.subr.mxu0 0.0
        %2897 = vmatpush1.msra.mxu0 %v2855
        %2898 = vmatprep.subr.mxu0 0.0
        %2899 = vmatpush1.msra.mxu0 %v2853
        %2900 = vmatprep.subr.mxu0 0.0
        %2901 = vmatpush1.msra.mxu0 %v2851
        %2902 = vmatprep.subr.mxu0 0.0
        %2903 = vmatpush1.msra.mxu0 %v2849
        %2904 = vmatprep.subr.mxu0 0.0
        %2905 = vmatpush1.msra.mxu0 %v2847
        %2906 = vmatprep.subr.mxu0 0.0
        %2907 = vmatpush1.msra.mxu0 %v2845
        %2908 = vmatprep.subr.mxu0 0.0
        %2909 = vmatpush1.msra.mxu0 %v2843
        %2910 = vmatprep.subr.mxu0 0.0
        %2911 = vmatpush1.msra.mxu0 %v2841
        %2912 = vmatprep.subr.mxu0 0.0
        %2913 = vmatpush1.msra.mxu0 %v2839
        %2914 = vmatprep.subr.mxu0 0.0
        %2915 = vmatpush1.msra.mxu0 %v2837
        %2916 = vmatprep.subr.mxu0 0.0
        %2917 = vmatpush2.msra.mxu0 0.0
        %2918 = vmatprep.subr.mxu0 0.0
        %2919 = vmatpush2.msra.mxu0 0.0
        %2920 = vmatprep.subr.mxu0 0.0
        %2921 = vmatpush2.msra.mxu0 0.0
        %2922 = vmatprep.subr.mxu0 0.0
        %2923 = vmatpush2.msra.mxu0 0.0
        %2924 = vmatprep.subr.mxu0 0.0
        %2925 = vmatpush2.msra.mxu0 0.0
        %2926 = vmatprep.subr.mxu0 0.0
        %2927 = vmatpush2.msra.mxu0 0.0
        %2928 = vmatprep.subr.mxu0 0.0
        %2929 = vmatpush2.msra.mxu0 0.0
        %2930 = vmatprep.subr.mxu0 0.0
        %2931 = vmatpush2.msra.mxu0 0.0
        %2932 = vmatprep.subr.mxu0 0.0
        %2933 = vmatpush2.msra.mxu0 0.0
        %2934 = vmatprep.subr.mxu0 0.0
        %2935 = vmatpush2.msra.mxu0 0.0
        %2936 = vmatprep.subr.mxu0 0.0
        %2937 = vmatpush2.msra.mxu0 0.0
        %2938 = vmatprep.subr.mxu0 0.0
        %2939 = vmatpush2.msra.mxu0 0.0
        %2940 = vmatprep.subr.mxu0 0.0
        %2941 = vmatpush2.msra.mxu0 0.0
        %2942 = vmatprep.subr.mxu0 0.0
        %2943 = vmatpush2.msra.mxu0 0.0
        %2944 = vmatprep.subr.mxu0 0.0
        %2945 = vmatpush2.msra.mxu0 0.0
        %2946 = vmatprep.subr.mxu0 0.0
        %2947 = vmatpush2.msra.mxu0 0.0
        %2948 = vmatprep.mubr.f32.mxu0 0.0
        %2949 = vmatmul.mubr.f32.gmra.mxu0 %v2757
        %v2950 = vpop.f32.mrf.mxu0
        %v2951 = vadd.f32 0.0, %v2950
        %v2952 = vpop.f32.mrf.mxu0
        %2953 = vmatprep.mubr.f32.mxu0 0.0
        %2954 = vmatmul.mubr.f32.gmra.mxu0 %v2759
        %v2955 = vpop.f32.mrf.mxu0
        %v2956 = vadd.f32 0.0, %v2955
        %v2957 = vpop.f32.mrf.mxu0
        %2958 = vmatprep.mubr.f32.mxu0 0.0
        %2959 = vmatmul.mubr.f32.gmra.mxu0 %v2761
        %v2960 = vpop.f32.mrf.mxu0
        %v2961 = vadd.f32 0.0, %v2960
        %v2962 = vpop.f32.mrf.mxu0
        %2963 = vmatprep.mubr.f32.mxu0 0.0
        %2964 = vmatmul.mubr.f32.gmra.mxu0 %v2763
        %v2965 = vpop.f32.mrf.mxu0
        %v2966 = vadd.f32 0.0, %v2965
        %v2967 = vpop.f32.mrf.mxu0
        %2968 = vmatprep.mubr.f32.mxu0 0.0
        %2969 = vmatmul.mubr.f32.gmra.mxu0 %v2765
        %v2970 = vpop.f32.mrf.mxu0
        %v2971 = vadd.f32 0.0, %v2970
        %v2972 = vpop.f32.mrf.mxu0
        %2973 = vmatprep.mubr.f32.mxu0 0.0
        %2974 = vmatmul.mubr.f32.gmra.mxu0 %v2767
        %v2975 = vpop.f32.mrf.mxu0
        %v2976 = vadd.f32 0.0, %v2975
        %v2977 = vpop.f32.mrf.mxu0
        %2978 = vmatprep.mubr.f32.mxu0 0.0
        %2979 = vmatmul.mubr.f32.gmra.mxu0 %v2769
        %v2980 = vpop.f32.mrf.mxu0
        %v2981 = vadd.f32 0.0, %v2980
        %v2982 = vpop.f32.mrf.mxu0
        %2983 = vmatprep.mubr.f32.mxu0 0.0
        %2984 = vmatmul.mubr.f32.gmra.mxu0 %v2771
        %v2985 = vpop.f32.mrf.mxu0
        %v2986 = vadd.f32 0.0, %v2985
        %v2987 = vpop.f32.mrf.mxu0
        %2988 = vmatprep.mubr.f32.mxu0 0.0
        %2989 = vmatmul.mubr.f32.gmra.mxu0 %v2773
        %v2990 = vpop.f32.mrf.mxu0
        %v2991 = vadd.f32 0.0, %v2990
        %v2992 = vpop.f32.mrf.mxu0
        %2993 = vmatprep.mubr.f32.mxu0 0.0
        %2994 = vmatmul.mubr.f32.gmra.mxu0 %v2775
        %v2995 = vpop.f32.mrf.mxu0
        %v2996 = vadd.f32 0.0, %v2995
        %v2997 = vpop.f32.mrf.mxu0
        %2998 = vmatprep.mubr.f32.mxu0 0.0
        %2999 = vmatmul.mubr.f32.gmra.mxu0 %v2777
        %v3000 = vpop.f32.mrf.mxu0
        %v3001 = vadd.f32 0.0, %v3000
        %v3002 = vpop.f32.mrf.mxu0
        %3003 = vmatprep.mubr.f32.mxu0 0.0
        %3004 = vmatmul.mubr.f32.gmra.mxu0 %v2779
        %v3005 = vpop.f32.mrf.mxu0
        %v3006 = vadd.f32 0.0, %v3005
        %v3007 = vpop.f32.mrf.mxu0
        %3008 = vmatprep.mubr.f32.mxu0 0.0
        %3009 = vmatmul.mubr.f32.gmra.mxu0 %v2781
        %v3010 = vpop.f32.mrf.mxu0
        %v3011 = vadd.f32 0.0, %v3010
        %v3012 = vpop.f32.mrf.mxu0
        %3013 = vmatprep.mubr.f32.mxu0 0.0
        %3014 = vmatmul.mubr.f32.gmra.mxu0 %v2783
        %v3015 = vpop.f32.mrf.mxu0
        %v3016 = vadd.f32 0.0, %v3015
        %v3017 = vpop.f32.mrf.mxu0
        %3018 = vmatprep.mubr.f32.mxu0 0.0
        %3019 = vmatmul.mubr.f32.gmra.mxu0 %v2785
        %v3020 = vpop.f32.mrf.mxu0
        %v3021 = vadd.f32 0.0, %v3020
        %v3022 = vpop.f32.mrf.mxu0
        %3023 = vmatprep.mubr.f32.mxu0 0.0
        %3024 = vmatmul.mubr.f32.gmra.mxu0 %v2787
        %v3025 = vpop.f32.mrf.mxu0
        %v3026 = vadd.f32 0.0, %v3025
        %v3027 = vpop.f32.mrf.mxu0
        %3028 = vdwg.mxu0
        %v3029 = vmul.f32 %v2951, %v2820
        %v3030 = vmul.f32 %v2956, %v2821
        %v3031 = vmul.f32 %v2961, %v2822
        %v3032 = vmul.f32 %v2966, %v2823
        %v3033 = vmul.f32 %v2971, %v2824
        %v3034 = vmul.f32 %v2976, %v2825
        %v3035 = vmul.f32 %v2981, %v2826
        %v3036 = vmul.f32 %v2986, %v2827
        %v3037 = vmul.f32 %v2991, %v2828
        %v3038 = vmul.f32 %v2996, %v2829
        %v3039 = vmul.f32 %v3001, %v2830
        %v3040 = vmul.f32 %v3006, %v2831
        %v3041 = vmul.f32 %v3011, %v2832
        %v3042 = vmul.f32 %v3016, %v2833
        %v3043 = vmul.f32 %v3021, %v2834
        %v3044 = vmul.f32 %v3026, %v2835
        %3061 = vrot.lane.b32.xlu0 %v3029, 64
        %v3062 = vpop.permute.xlu0 %3061
        %3063 = vrot.lane.b32.xlu0 %v3030, 64
        %v3064 = vpop.permute.xlu0 %3063
        %3065 = vrot.lane.b32.xlu0 %v3031, 64
        %v3066 = vpop.permute.xlu0 %3065
        %3067 = vrot.lane.b32.xlu0 %v3032, 64
        %v3068 = vpop.permute.xlu0 %3067
        %3069 = vrot.lane.b32.xlu0 %v3033, 64
        %v3070 = vpop.permute.xlu0 %3069
        %3071 = vrot.lane.b32.xlu0 %v3034, 64
        %v3072 = vpop.permute.xlu0 %3071
        %3073 = vrot.lane.b32.xlu0 %v3035, 64
        %v3074 = vpop.permute.xlu0 %3073
        %3075 = vrot.lane.b32.xlu0 %v3036, 64
        %v3076 = vpop.permute.xlu0 %3075
        %3077 = vrot.lane.b32.xlu0 %v3037, 64
        %v3078 = vpop.permute.xlu0 %3077
        %3079 = vrot.lane.b32.xlu0 %v3038, 64
        %v3080 = vpop.permute.xlu0 %3079
        %3081 = vrot.lane.b32.xlu0 %v3039, 64
        %v3082 = vpop.permute.xlu0 %3081
        %3083 = vrot.lane.b32.xlu0 %v3040, 64
        %v3084 = vpop.permute.xlu0 %3083
        %3085 = vrot.lane.b32.xlu0 %v3041, 64
        %v3086 = vpop.permute.xlu0 %3085
        %3087 = vrot.lane.b32.xlu0 %v3042, 64
        %v3088 = vpop.permute.xlu0 %3087
        %3089 = vrot.lane.b32.xlu0 %v3043, 64
        %v3090 = vpop.permute.xlu0 %3089
        %3091 = vrot.lane.b32.xlu0 %v3044, 64
        %v3092 = vpop.permute.xlu0 %3091
        %vm3109 = vcmask 785920
        %3110 = vst.msk [vmem:[#allocation2] sm:$0xff] %vm3109, %v3062
        %3111 = vst.msk [vmem:[#allocation2 + $0x8] sm:$0xff] %vm3109, %v3064
        %3112 = vst.msk [vmem:[#allocation2 + $0x10] sm:$0xff] %vm3109, %v3066
        %3113 = vst.msk [vmem:[#allocation2 + $0x18] sm:$0xff] %vm3109, %v3068
        %3114 = vst.msk [vmem:[#allocation2 + $0x20] sm:$0xff] %vm3109, %v3070
        %3115 = vst.msk [vmem:[#allocation2 + $0x28] sm:$0xff] %vm3109, %v3072
        %3116 = vst.msk [vmem:[#allocation2 + $0x30] sm:$0xff] %vm3109, %v3074
        %3117 = vst.msk [vmem:[#allocation2 + $0x38] sm:$0xff] %vm3109, %v3076
        %3118 = vst.msk [vmem:[#allocation2 + $0x40] sm:$0xff] %vm3109, %v3078
        %3119 = vst.msk [vmem:[#allocation2 + $0x48] sm:$0xff] %vm3109, %v3080
        %3120 = vst.msk [vmem:[#allocation2 + $0x50] sm:$0xff] %vm3109, %v3082
        %3121 = vst.msk [vmem:[#allocation2 + $0x58] sm:$0xff] %vm3109, %v3084
        %3122 = vst.msk [vmem:[#allocation2 + $0x60] sm:$0xff] %vm3109, %v3086
        %3123 = vst.msk [vmem:[#allocation2 + $0x68] sm:$0xff] %vm3109, %v3088
        %3124 = vst.msk [vmem:[#allocation2 + $0x70] sm:$0xff] %vm3109, %v3090
        %3125 = vst.msk [vmem:[#allocation2 + $0x78] sm:$0xff] %vm3109, %v3092
        %3126 = vrot.lane.b32.xlu0 %v1165, 32
        %v3127 = vpop.permute.xlu0 %3126
        %3128 = vrot.lane.b32.xlu0 %v1166, 32
        %v3129 = vpop.permute.xlu0 %3128
        %3130 = vrot.lane.b32.xlu0 %v1167, 32
        %v3131 = vpop.permute.xlu0 %3130
        %3132 = vrot.lane.b32.xlu0 %v1168, 32
        %v3133 = vpop.permute.xlu0 %3132
        %3134 = vrot.lane.b32.xlu0 %v1169, 32
        %v3135 = vpop.permute.xlu0 %3134
        %3136 = vrot.lane.b32.xlu0 %v1170, 32
        %v3137 = vpop.permute.xlu0 %3136
        %3138 = vrot.lane.b32.xlu0 %v1171, 32
        %v3139 = vpop.permute.xlu0 %3138
        %3140 = vrot.lane.b32.xlu0 %v1172, 32
        %v3141 = vpop.permute.xlu0 %3140
        %3142 = vrot.lane.b32.xlu0 %v1173, 32
        %v3143 = vpop.permute.xlu0 %3142
        %3144 = vrot.lane.b32.xlu0 %v1174, 32
        %v3145 = vpop.permute.xlu0 %3144
        %3146 = vrot.lane.b32.xlu0 %v1175, 32
        %v3147 = vpop.permute.xlu0 %3146
        %3148 = vrot.lane.b32.xlu0 %v1176, 32
        %v3149 = vpop.permute.xlu0 %3148
        %3150 = vrot.lane.b32.xlu0 %v1177, 32
        %v3151 = vpop.permute.xlu0 %3150
        %3152 = vrot.lane.b32.xlu0 %v1178, 32
        %v3153 = vpop.permute.xlu0 %3152
        %3154 = vrot.lane.b32.xlu0 %v1179, 32
        %v3155 = vpop.permute.xlu0 %3154
        %3156 = vrot.lane.b32.xlu0 %v1180, 32
        %v3157 = vpop.permute.xlu0 %3156
        %3158 = vrot.lane.b32.xlu0 %v900, 32
        %v3159 = vpop.permute.xlu0 %3158
        %3160 = vrot.lane.b32.xlu0 %v905, 32
        %v3161 = vpop.permute.xlu0 %3160
        %3162 = vrot.lane.b32.xlu0 %v910, 32
        %v3163 = vpop.permute.xlu0 %3162
        %3164 = vrot.lane.b32.xlu0 %v915, 32
        %v3165 = vpop.permute.xlu0 %3164
        %3166 = vrot.lane.b32.xlu0 %v920, 32
        %v3167 = vpop.permute.xlu0 %3166
        %3168 = vrot.lane.b32.xlu0 %v925, 32
        %v3169 = vpop.permute.xlu0 %3168
        %3170 = vrot.lane.b32.xlu0 %v930, 32
        %v3171 = vpop.permute.xlu0 %3170
        %3172 = vrot.lane.b32.xlu0 %v935, 32
        %v3173 = vpop.permute.xlu0 %3172
        %3174 = vrot.lane.b32.xlu0 %v940, 32
        %v3175 = vpop.permute.xlu0 %3174
        %3176 = vrot.lane.b32.xlu0 %v945, 32
        %v3177 = vpop.permute.xlu0 %3176
        %3178 = vrot.lane.b32.xlu0 %v950, 32
        %v3179 = vpop.permute.xlu0 %3178
        %3180 = vrot.lane.b32.xlu0 %v955, 32
        %v3181 = vpop.permute.xlu0 %3180
        %3182 = vrot.lane.b32.xlu0 %v960, 32
        %v3183 = vpop.permute.xlu0 %3182
        %3184 = vrot.lane.b32.xlu0 %v965, 32
        %v3185 = vpop.permute.xlu0 %3184
        %3186 = vrot.lane.b32.xlu0 %v970, 32
        %v3187 = vpop.permute.xlu0 %3186
        %3188 = vrot.lane.b32.xlu0 %v975, 32
        %v3189 = vpop.permute.xlu0 %3188
        %v3190 = vsel %vm1181, %v3127, 0
        %v3192 = vsel %vm1181, %v3129, 0
        %v3194 = vsel %vm1181, %v3131, 0
        %v3196 = vsel %vm1181, %v3133, 0
        %v3198 = vsel %vm1181, %v3135, 0
        %v3200 = vsel %vm1181, %v3137, 0
        %v3202 = vsel %vm1181, %v3139, 0
        %v3204 = vsel %vm1181, %v3141, 0
        %v3206 = vsel %vm1181, %v3143, 0
        %v3208 = vsel %vm1181, %v3145, 0
        %v3210 = vsel %vm1181, %v3147, 0
        %v3212 = vsel %vm1181, %v3149, 0
        %v3214 = vsel %vm1181, %v3151, 0
        %v3216 = vsel %vm1181, %v3153, 0
        %v3218 = vsel %vm1181, %v3155, 0
        %v3220 = vsel %vm1181, %v3157, 0
        %v3222 = vsel %vm1181, %v3159, 0
        %v3224 = vsel %vm1181, %v3161, 0
        %v3226 = vsel %vm1181, %v3163, 0
        %v3228 = vsel %vm1181, %v3165, 0
        %v3230 = vsel %vm1181, %v3167, 0
        %v3232 = vsel %vm1181, %v3169, 0
        %v3234 = vsel %vm1181, %v3171, 0
        %v3236 = vsel %vm1181, %v3173, 0
        %v3238 = vsel %vm1181, %v3175, 0
        %v3240 = vsel %vm1181, %v3177, 0
        %v3242 = vsel %vm1181, %v3179, 0
        %v3244 = vsel %vm1181, %v3181, 0
        %v3246 = vsel %vm1181, %v3183, 0
        %v3248 = vsel %vm1181, %v3185, 0
        %v3250 = vsel %vm1181, %v3187, 0
        %v3252 = vsel %vm1181, %v3189, 0
        %3254 = vmatprep.subr.mxu0 0.0
        %3255 = vmatpush1.xpose.msra.mxu0 %v3252
        %3256 = vmatprep.subr.mxu0 0.0
        %3257 = vmatpush1.xpose.msra.mxu0 %v3250
        %3258 = vmatprep.subr.mxu0 0.0
        %3259 = vmatpush1.xpose.msra.mxu0 %v3248
        %3260 = vmatprep.subr.mxu0 0.0
        %3261 = vmatpush1.xpose.msra.mxu0 %v3246
        %3262 = vmatprep.subr.mxu0 0.0
        %3263 = vmatpush1.xpose.msra.mxu0 %v3244
        %3264 = vmatprep.subr.mxu0 0.0
        %3265 = vmatpush1.xpose.msra.mxu0 %v3242
        %3266 = vmatprep.subr.mxu0 0.0
        %3267 = vmatpush1.xpose.msra.mxu0 %v3240
        %3268 = vmatprep.subr.mxu0 0.0
        %3269 = vmatpush1.xpose.msra.mxu0 %v3238
        %3270 = vmatprep.subr.mxu0 0.0
        %3271 = vmatpush1.xpose.msra.mxu0 %v3236
        %3272 = vmatprep.subr.mxu0 0.0
        %3273 = vmatpush1.xpose.msra.mxu0 %v3234
        %3274 = vmatprep.subr.mxu0 0.0
        %3275 = vmatpush1.xpose.msra.mxu0 %v3232
        %3276 = vmatprep.subr.mxu0 0.0
        %3277 = vmatpush1.xpose.msra.mxu0 %v3230
        %3278 = vmatprep.subr.mxu0 0.0
        %3279 = vmatpush1.xpose.msra.mxu0 %v3228
        %3280 = vmatprep.subr.mxu0 0.0
        %3281 = vmatpush1.xpose.msra.mxu0 %v3226
        %3282 = vmatprep.subr.mxu0 0.0
        %3283 = vmatpush1.xpose.msra.mxu0 %v3224
        %3284 = vmatprep.subr.mxu0 0.0
        %3285 = vmatpush1.xpose.msra.mxu0 %v3222
        %3286 = vmatprep.subr.mxu0 0.0
        %3287 = vmatpush2.xpose.msra.mxu0 0.0
        %3288 = vmatprep.subr.mxu0 0.0
        %3289 = vmatpush2.xpose.msra.mxu0 0.0
        %3290 = vmatprep.subr.mxu0 0.0
        %3291 = vmatpush2.xpose.msra.mxu0 0.0
        %3292 = vmatprep.subr.mxu0 0.0
        %3293 = vmatpush2.xpose.msra.mxu0 0.0
        %3294 = vmatprep.subr.mxu0 0.0
        %3295 = vmatpush2.xpose.msra.mxu0 0.0
        %3296 = vmatprep.subr.mxu0 0.0
        %3297 = vmatpush2.xpose.msra.mxu0 0.0
        %3298 = vmatprep.subr.mxu0 0.0
        %3299 = vmatpush2.xpose.msra.mxu0 0.0
        %3300 = vmatprep.subr.mxu0 0.0
        %3301 = vmatpush2.xpose.msra.mxu0 0.0
        %3302 = vmatprep.subr.mxu0 0.0
        %3303 = vmatpush2.xpose.msra.mxu0 0.0
        %3304 = vmatprep.subr.mxu0 0.0
        %3305 = vmatpush2.xpose.msra.mxu0 0.0
        %3306 = vmatprep.subr.mxu0 0.0
        %3307 = vmatpush2.xpose.msra.mxu0 0.0
        %3308 = vmatprep.subr.mxu0 0.0
        %3309 = vmatpush2.xpose.msra.mxu0 0.0
        %3310 = vmatprep.subr.mxu0 0.0
        %3311 = vmatpush2.xpose.msra.mxu0 0.0
        %3312 = vmatprep.subr.mxu0 0.0
        %3313 = vmatpush2.xpose.msra.mxu0 0.0
        %3314 = vmatprep.subr.mxu0 0.0
        %3315 = vmatpush2.xpose.msra.mxu0 0.0
        %3316 = vmatprep.subr.mxu0 0.0
        %3317 = vmatpush2.xpose.msra.mxu0 0.0
        %3318 = vmatprep.mubr.f32.mxu0 0.0
        %3319 = vmatmul.mubr.f32.gmra.mxu0 %v3190
        %v3320 = vpop.f32.mrf.mxu0
        %v3321 = vadd.f32 0.0, %v3320
        %v3322 = vpop.f32.mrf.mxu0
        %3323 = vmatprep.mubr.f32.mxu0 0.0
        %3324 = vmatmul.mubr.f32.gmra.mxu0 %v3192
        %v3325 = vpop.f32.mrf.mxu0
        %v3326 = vadd.f32 0.0, %v3325
        %v3327 = vpop.f32.mrf.mxu0
        %3328 = vmatprep.mubr.f32.mxu0 0.0
        %3329 = vmatmul.mubr.f32.gmra.mxu0 %v3194
        %v3330 = vpop.f32.mrf.mxu0
        %v3331 = vadd.f32 0.0, %v3330
        %v3332 = vpop.f32.mrf.mxu0
        %3333 = vmatprep.mubr.f32.mxu0 0.0
        %3334 = vmatmul.mubr.f32.gmra.mxu0 %v3196
        %v3335 = vpop.f32.mrf.mxu0
        %v3336 = vadd.f32 0.0, %v3335
        %v3337 = vpop.f32.mrf.mxu0
        %3338 = vmatprep.mubr.f32.mxu0 0.0
        %3339 = vmatmul.mubr.f32.gmra.mxu0 %v3198
        %v3340 = vpop.f32.mrf.mxu0
        %v3341 = vadd.f32 0.0, %v3340
        %v3342 = vpop.f32.mrf.mxu0
        %3343 = vmatprep.mubr.f32.mxu0 0.0
        %3344 = vmatmul.mubr.f32.gmra.mxu0 %v3200
        %v3345 = vpop.f32.mrf.mxu0
        %v3346 = vadd.f32 0.0, %v3345
        %v3347 = vpop.f32.mrf.mxu0
        %3348 = vmatprep.mubr.f32.mxu0 0.0
        %3349 = vmatmul.mubr.f32.gmra.mxu0 %v3202
        %v3350 = vpop.f32.mrf.mxu0
        %v3351 = vadd.f32 0.0, %v3350
        %v3352 = vpop.f32.mrf.mxu0
        %3353 = vmatprep.mubr.f32.mxu0 0.0
        %3354 = vmatmul.mubr.f32.gmra.mxu0 %v3204
        %v3355 = vpop.f32.mrf.mxu0
        %v3356 = vadd.f32 0.0, %v3355
        %v3357 = vpop.f32.mrf.mxu0
        %3358 = vmatprep.mubr.f32.mxu0 0.0
        %3359 = vmatmul.mubr.f32.gmra.mxu0 %v3206
        %v3360 = vpop.f32.mrf.mxu0
        %v3361 = vadd.f32 0.0, %v3360
        %v3362 = vpop.f32.mrf.mxu0
        %3363 = vmatprep.mubr.f32.mxu0 0.0
        %3364 = vmatmul.mubr.f32.gmra.mxu0 %v3208
        %v3365 = vpop.f32.mrf.mxu0
        %v3366 = vadd.f32 0.0, %v3365
        %v3367 = vpop.f32.mrf.mxu0
        %3368 = vmatprep.mubr.f32.mxu0 0.0
        %3369 = vmatmul.mubr.f32.gmra.mxu0 %v3210
        %v3370 = vpop.f32.mrf.mxu0
        %v3371 = vadd.f32 0.0, %v3370
        %v3372 = vpop.f32.mrf.mxu0
        %3373 = vmatprep.mubr.f32.mxu0 0.0
        %3374 = vmatmul.mubr.f32.gmra.mxu0 %v3212
        %v3375 = vpop.f32.mrf.mxu0
        %v3376 = vadd.f32 0.0, %v3375
        %v3377 = vpop.f32.mrf.mxu0
        %3378 = vmatprep.mubr.f32.mxu0 0.0
        %3379 = vmatmul.mubr.f32.gmra.mxu0 %v3214
        %v3380 = vpop.f32.mrf.mxu0
        %v3381 = vadd.f32 0.0, %v3380
        %v3382 = vpop.f32.mrf.mxu0
        %3383 = vmatprep.mubr.f32.mxu0 0.0
        %3384 = vmatmul.mubr.f32.gmra.mxu0 %v3216
        %v3385 = vpop.f32.mrf.mxu0
        %v3386 = vadd.f32 0.0, %v3385
        %v3387 = vpop.f32.mrf.mxu0
        %3388 = vmatprep.mubr.f32.mxu0 0.0
        %3389 = vmatmul.mubr.f32.gmra.mxu0 %v3218
        %v3390 = vpop.f32.mrf.mxu0
        %v3391 = vadd.f32 0.0, %v3390
        %v3392 = vpop.f32.mrf.mxu0
        %3393 = vmatprep.mubr.f32.mxu0 0.0
        %3394 = vmatmul.mubr.f32.gmra.mxu0 %v3220
        %v3395 = vpop.f32.mrf.mxu0
        %v3396 = vadd.f32 0.0, %v3395
        %v3397 = vpop.f32.mrf.mxu0
        %3398 = vdwg.mxu0
        %3399 = vmax.xlane.f32.xlu0 %v3321
        %v3400 = vpop.xlane.xlu0 %3399
        %3401 = vmax.xlane.f32.xlu0 %v3326
        %v3402 = vpop.xlane.xlu0 %3401
        %3403 = vmax.xlane.f32.xlu0 %v3331
        %v3404 = vpop.xlane.xlu0 %3403
        %3405 = vmax.xlane.f32.xlu0 %v3336
        %v3406 = vpop.xlane.xlu0 %3405
        %3407 = vmax.xlane.f32.xlu0 %v3341
        %v3408 = vpop.xlane.xlu0 %3407
        %3409 = vmax.xlane.f32.xlu0 %v3346
        %v3410 = vpop.xlane.xlu0 %3409
        %3411 = vmax.xlane.f32.xlu0 %v3351
        %v3412 = vpop.xlane.xlu0 %3411
        %3413 = vmax.xlane.f32.xlu0 %v3356
        %v3414 = vpop.xlane.xlu0 %3413
        %3415 = vmax.xlane.f32.xlu0 %v3361
        %v3416 = vpop.xlane.xlu0 %3415
        %3417 = vmax.xlane.f32.xlu0 %v3366
        %v3418 = vpop.xlane.xlu0 %3417
        %3419 = vmax.xlane.f32.xlu0 %v3371
        %v3420 = vpop.xlane.xlu0 %3419
        %3421 = vmax.xlane.f32.xlu0 %v3376
        %v3422 = vpop.xlane.xlu0 %3421
        %3423 = vmax.xlane.f32.xlu0 %v3381
        %v3424 = vpop.xlane.xlu0 %3423
        %3425 = vmax.xlane.f32.xlu0 %v3386
        %v3426 = vpop.xlane.xlu0 %3425
        %3427 = vmax.xlane.f32.xlu0 %v3391
        %v3428 = vpop.xlane.xlu0 %3427
        %3429 = vmax.xlane.f32.xlu0 %v3396
        %v3430 = vpop.xlane.xlu0 %3429
        %v3431 = vsub.f32 %v3321, %v3400
        %v3432 = vsub.f32 %v3326, %v3402
        %v3433 = vsub.f32 %v3331, %v3404
        %v3434 = vsub.f32 %v3336, %v3406
        %v3435 = vsub.f32 %v3341, %v3408
        %v3436 = vsub.f32 %v3346, %v3410
        %v3437 = vsub.f32 %v3351, %v3412
        %v3438 = vsub.f32 %v3356, %v3414
        %v3439 = vsub.f32 %v3361, %v3416
        %v3440 = vsub.f32 %v3366, %v3418
        %v3441 = vsub.f32 %v3371, %v3420
        %v3442 = vsub.f32 %v3376, %v3422
        %v3443 = vsub.f32 %v3381, %v3424
        %v3444 = vsub.f32 %v3386, %v3426
        %v3445 = vsub.f32 %v3391, %v3428
        %v3446 = vsub.f32 %v3396, %v3430
        %v3447 = vmul.f32 %v3431, 1.442695
        %v3448 = vpow.pop %v3447
        %v3449 = vmul.f32 %v3432, 1.442695
        %v3450 = vpow.pop %v3449
        %v3451 = vmul.f32 %v3433, 1.442695
        %v3452 = vpow.pop %v3451
        %v3453 = vmul.f32 %v3434, 1.442695
        %v3454 = vpow.pop %v3453
        %v3455 = vmul.f32 %v3435, 1.442695
        %v3456 = vpow.pop %v3455
        %v3457 = vmul.f32 %v3436, 1.442695
        %v3458 = vpow.pop %v3457
        %v3459 = vmul.f32 %v3437, 1.442695
        %v3460 = vpow.pop %v3459
        %v3461 = vmul.f32 %v3438, 1.442695
        %v3462 = vpow.pop %v3461
        %v3463 = vmul.f32 %v3439, 1.442695
        %v3464 = vpow.pop %v3463
        %v3465 = vmul.f32 %v3440, 1.442695
        %v3466 = vpow.pop %v3465
        %v3467 = vmul.f32 %v3441, 1.442695
        %v3468 = vpow.pop %v3467
        %v3469 = vmul.f32 %v3442, 1.442695
        %v3470 = vpow.pop %v3469
        %v3471 = vmul.f32 %v3443, 1.442695
        %v3472 = vpow.pop %v3471
        %v3473 = vmul.f32 %v3444, 1.442695
        %v3474 = vpow.pop %v3473
        %v3475 = vmul.f32 %v3445, 1.442695
        %v3476 = vpow.pop %v3475
        %v3477 = vmul.f32 %v3446, 1.442695
        %v3478 = vpow.pop %v3477
        %3479 = vadd.xlane.f32.xlu0 %v3448
        %v3480 = vpop.xlane.xlu0 %3479
        %3481 = vadd.xlane.f32.xlu0 %v3450
        %v3482 = vpop.xlane.xlu0 %3481
        %3483 = vadd.xlane.f32.xlu0 %v3452
        %v3484 = vpop.xlane.xlu0 %3483
        %3485 = vadd.xlane.f32.xlu0 %v3454
        %v3486 = vpop.xlane.xlu0 %3485
        %3487 = vadd.xlane.f32.xlu0 %v3456
        %v3488 = vpop.xlane.xlu0 %3487
        %3489 = vadd.xlane.f32.xlu0 %v3458
        %v3490 = vpop.xlane.xlu0 %3489
        %3491 = vadd.xlane.f32.xlu0 %v3460
        %v3492 = vpop.xlane.xlu0 %3491
        %3493 = vadd.xlane.f32.xlu0 %v3462
        %v3494 = vpop.xlane.xlu0 %3493
        %3495 = vadd.xlane.f32.xlu0 %v3464
        %v3496 = vpop.xlane.xlu0 %3495
        %3497 = vadd.xlane.f32.xlu0 %v3466
        %v3498 = vpop.xlane.xlu0 %3497
        %3499 = vadd.xlane.f32.xlu0 %v3468
        %v3500 = vpop.xlane.xlu0 %3499
        %3501 = vadd.xlane.f32.xlu0 %v3470
        %v3502 = vpop.xlane.xlu0 %3501
        %3503 = vadd.xlane.f32.xlu0 %v3472
        %v3504 = vpop.xlane.xlu0 %3503
        %3505 = vadd.xlane.f32.xlu0 %v3474
        %v3506 = vpop.xlane.xlu0 %3505
        %3507 = vadd.xlane.f32.xlu0 %v3476
        %v3508 = vpop.xlane.xlu0 %3507
        %3509 = vadd.xlane.f32.xlu0 %v3478
        %v3510 = vpop.xlane.xlu0 %3509
        %v3511 = vrcp.pop %v3480
        %v3512 = vrcp.pop %v3482
        %v3513 = vrcp.pop %v3484
        %v3514 = vrcp.pop %v3486
        %v3515 = vrcp.pop %v3488
        %v3516 = vrcp.pop %v3490
        %v3517 = vrcp.pop %v3492
        %v3518 = vrcp.pop %v3494
        %v3519 = vrcp.pop %v3496
        %v3520 = vrcp.pop %v3498
        %v3521 = vrcp.pop %v3500
        %v3522 = vrcp.pop %v3502
        %v3523 = vrcp.pop %v3504
        %v3524 = vrcp.pop %v3506
        %v3525 = vrcp.pop %v3508
        %v3526 = vrcp.pop %v3510
        %3527 = vrot.lane.b32.xlu0 %v1068, 32
        %v3528 = vpop.permute.xlu0 %3527
        %3529 = vrot.lane.b32.xlu0 %v1073, 32
        %v3530 = vpop.permute.xlu0 %3529
        %3531 = vrot.lane.b32.xlu0 %v1078, 32
        %v3532 = vpop.permute.xlu0 %3531
        %3533 = vrot.lane.b32.xlu0 %v1083, 32
        %v3534 = vpop.permute.xlu0 %3533
        %3535 = vrot.lane.b32.xlu0 %v1088, 32
        %v3536 = vpop.permute.xlu0 %3535
        %3537 = vrot.lane.b32.xlu0 %v1093, 32
        %v3538 = vpop.permute.xlu0 %3537
        %3539 = vrot.lane.b32.xlu0 %v1098, 32
        %v3540 = vpop.permute.xlu0 %3539
        %3541 = vrot.lane.b32.xlu0 %v1103, 32
        %v3542 = vpop.permute.xlu0 %3541
        %3543 = vrot.lane.b32.xlu0 %v1108, 32
        %v3544 = vpop.permute.xlu0 %3543
        %3545 = vrot.lane.b32.xlu0 %v1113, 32
        %v3546 = vpop.permute.xlu0 %3545
        %3547 = vrot.lane.b32.xlu0 %v1118, 32
        %v3548 = vpop.permute.xlu0 %3547
        %3549 = vrot.lane.b32.xlu0 %v1123, 32
        %v3550 = vpop.permute.xlu0 %3549
        %3551 = vrot.lane.b32.xlu0 %v1128, 32
        %v3552 = vpop.permute.xlu0 %3551
        %3553 = vrot.lane.b32.xlu0 %v1133, 32
        %v3554 = vpop.permute.xlu0 %3553
        %3555 = vrot.lane.b32.xlu0 %v1138, 32
        %v3556 = vpop.permute.xlu0 %3555
        %3557 = vrot.lane.b32.xlu0 %v1143, 32
        %v3558 = vpop.permute.xlu0 %3557
        %3575 = vmatprep.subr.mxu0 0.0
        %3576 = vmatpush1.msra.mxu0 %v3558
        %3577 = vmatprep.subr.mxu0 0.0
        %3578 = vmatpush1.msra.mxu0 %v3556
        %3579 = vmatprep.subr.mxu0 0.0
        %3580 = vmatpush1.msra.mxu0 %v3554
        %3581 = vmatprep.subr.mxu0 0.0
        %3582 = vmatpush1.msra.mxu0 %v3552
        %3583 = vmatprep.subr.mxu0 0.0
        %3584 = vmatpush1.msra.mxu0 %v3550
        %3585 = vmatprep.subr.mxu0 0.0
        %3586 = vmatpush1.msra.mxu0 %v3548
        %3587 = vmatprep.subr.mxu0 0.0
        %3588 = vmatpush1.msra.mxu0 %v3546
        %3589 = vmatprep.subr.mxu0 0.0
        %3590 = vmatpush1.msra.mxu0 %v3544
        %3591 = vmatprep.subr.mxu0 0.0
        %3592 = vmatpush1.msra.mxu0 %v3542
        %3593 = vmatprep.subr.mxu0 0.0
        %3594 = vmatpush1.msra.mxu0 %v3540
        %3595 = vmatprep.subr.mxu0 0.0
        %3596 = vmatpush1.msra.mxu0 %v3538
        %3597 = vmatprep.subr.mxu0 0.0
        %3598 = vmatpush1.msra.mxu0 %v3536
        %3599 = vmatprep.subr.mxu0 0.0
        %3600 = vmatpush1.msra.mxu0 %v3534
        %3601 = vmatprep.subr.mxu0 0.0
        %3602 = vmatpush1.msra.mxu0 %v3532
        %3603 = vmatprep.subr.mxu0 0.0
        %3604 = vmatpush1.msra.mxu0 %v3530
        %3605 = vmatprep.subr.mxu0 0.0
        %3606 = vmatpush1.msra.mxu0 %v3528
        %3607 = vmatprep.subr.mxu0 0.0
        %3608 = vmatpush2.msra.mxu0 0.0
        %3609 = vmatprep.subr.mxu0 0.0
        %3610 = vmatpush2.msra.mxu0 0.0
        %3611 = vmatprep.subr.mxu0 0.0
        %3612 = vmatpush2.msra.mxu0 0.0
        %3613 = vmatprep.subr.mxu0 0.0
        %3614 = vmatpush2.msra.mxu0 0.0
        %3615 = vmatprep.subr.mxu0 0.0
        %3616 = vmatpush2.msra.mxu0 0.0
        %3617 = vmatprep.subr.mxu0 0.0
        %3618 = vmatpush2.msra.mxu0 0.0
        %3619 = vmatprep.subr.mxu0 0.0
        %3620 = vmatpush2.msra.mxu0 0.0
        %3621 = vmatprep.subr.mxu0 0.0
        %3622 = vmatpush2.msra.mxu0 0.0
        %3623 = vmatprep.subr.mxu0 0.0
        %3624 = vmatpush2.msra.mxu0 0.0
        %3625 = vmatprep.subr.mxu0 0.0
        %3626 = vmatpush2.msra.mxu0 0.0
        %3627 = vmatprep.subr.mxu0 0.0
        %3628 = vmatpush2.msra.mxu0 0.0
        %3629 = vmatprep.subr.mxu0 0.0
        %3630 = vmatpush2.msra.mxu0 0.0
        %3631 = vmatprep.subr.mxu0 0.0
        %3632 = vmatpush2.msra.mxu0 0.0
        %3633 = vmatprep.subr.mxu0 0.0
        %3634 = vmatpush2.msra.mxu0 0.0
        %3635 = vmatprep.subr.mxu0 0.0
        %3636 = vmatpush2.msra.mxu0 0.0
        %3637 = vmatprep.subr.mxu0 0.0
        %3638 = vmatpush2.msra.mxu0 0.0
        %3639 = vmatprep.mubr.f32.mxu0 0.0
        %3640 = vmatmul.mubr.f32.gmra.mxu0 %v3448
        %v3641 = vpop.f32.mrf.mxu0
        %v3642 = vadd.f32 0.0, %v3641
        %v3643 = vpop.f32.mrf.mxu0
        %3644 = vmatprep.mubr.f32.mxu0 0.0
        %3645 = vmatmul.mubr.f32.gmra.mxu0 %v3450
        %v3646 = vpop.f32.mrf.mxu0
        %v3647 = vadd.f32 0.0, %v3646
        %v3648 = vpop.f32.mrf.mxu0
        %3649 = vmatprep.mubr.f32.mxu0 0.0
        %3650 = vmatmul.mubr.f32.gmra.mxu0 %v3452
        %v3651 = vpop.f32.mrf.mxu0
        %v3652 = vadd.f32 0.0, %v3651
        %v3653 = vpop.f32.mrf.mxu0
        %3654 = vmatprep.mubr.f32.mxu0 0.0
        %3655 = vmatmul.mubr.f32.gmra.mxu0 %v3454
        %v3656 = vpop.f32.mrf.mxu0
        %v3657 = vadd.f32 0.0, %v3656
        %v3658 = vpop.f32.mrf.mxu0
        %3659 = vmatprep.mubr.f32.mxu0 0.0
        %3660 = vmatmul.mubr.f32.gmra.mxu0 %v3456
        %v3661 = vpop.f32.mrf.mxu0
        %v3662 = vadd.f32 0.0, %v3661
        %v3663 = vpop.f32.mrf.mxu0
        %3664 = vmatprep.mubr.f32.mxu0 0.0
        %3665 = vmatmul.mubr.f32.gmra.mxu0 %v3458
        %v3666 = vpop.f32.mrf.mxu0
        %v3667 = vadd.f32 0.0, %v3666
        %v3668 = vpop.f32.mrf.mxu0
        %3669 = vmatprep.mubr.f32.mxu0 0.0
        %3670 = vmatmul.mubr.f32.gmra.mxu0 %v3460
        %v3671 = vpop.f32.mrf.mxu0
        %v3672 = vadd.f32 0.0, %v3671
        %v3673 = vpop.f32.mrf.mxu0
        %3674 = vmatprep.mubr.f32.mxu0 0.0
        %3675 = vmatmul.mubr.f32.gmra.mxu0 %v3462
        %v3676 = vpop.f32.mrf.mxu0
        %v3677 = vadd.f32 0.0, %v3676
        %v3678 = vpop.f32.mrf.mxu0
        %3679 = vmatprep.mubr.f32.mxu0 0.0
        %3680 = vmatmul.mubr.f32.gmra.mxu0 %v3464
        %v3681 = vpop.f32.mrf.mxu0
        %v3682 = vadd.f32 0.0, %v3681
        %v3683 = vpop.f32.mrf.mxu0
        %3684 = vmatprep.mubr.f32.mxu0 0.0
        %3685 = vmatmul.mubr.f32.gmra.mxu0 %v3466
        %v3686 = vpop.f32.mrf.mxu0
        %v3687 = vadd.f32 0.0, %v3686
        %v3688 = vpop.f32.mrf.mxu0
        %3689 = vmatprep.mubr.f32.mxu0 0.0
        %3690 = vmatmul.mubr.f32.gmra.mxu0 %v3468
        %v3691 = vpop.f32.mrf.mxu0
        %v3692 = vadd.f32 0.0, %v3691
        %v3693 = vpop.f32.mrf.mxu0
        %3694 = vmatprep.mubr.f32.mxu0 0.0
        %3695 = vmatmul.mubr.f32.gmra.mxu0 %v3470
        %v3696 = vpop.f32.mrf.mxu0
        %v3697 = vadd.f32 0.0, %v3696
        %v3698 = vpop.f32.mrf.mxu0
        %3699 = vmatprep.mubr.f32.mxu0 0.0
        %3700 = vmatmul.mubr.f32.gmra.mxu0 %v3472
        %v3701 = vpop.f32.mrf.mxu0
        %v3702 = vadd.f32 0.0, %v3701
        %v3703 = vpop.f32.mrf.mxu0
        %3704 = vmatprep.mubr.f32.mxu0 0.0
        %3705 = vmatmul.mubr.f32.gmra.mxu0 %v3474
        %v3706 = vpop.f32.mrf.mxu0
        %v3707 = vadd.f32 0.0, %v3706
        %v3708 = vpop.f32.mrf.mxu0
        %3709 = vmatprep.mubr.f32.mxu0 0.0
        %3710 = vmatmul.mubr.f32.gmra.mxu0 %v3476
        %v3711 = vpop.f32.mrf.mxu0
        %v3712 = vadd.f32 0.0, %v3711
        %v3713 = vpop.f32.mrf.mxu0
        %3714 = vmatprep.mubr.f32.mxu0 0.0
        %3715 = vmatmul.mubr.f32.gmra.mxu0 %v3478
        %v3716 = vpop.f32.mrf.mxu0
        %v3717 = vadd.f32 0.0, %v3716
        %v3718 = vpop.f32.mrf.mxu0
        %3719 = vdwg.mxu0
        %v3720 = vmul.f32 %v3642, %v3511
        %v3721 = vmul.f32 %v3647, %v3512
        %v3722 = vmul.f32 %v3652, %v3513
        %v3723 = vmul.f32 %v3657, %v3514
        %v3724 = vmul.f32 %v3662, %v3515
        %v3725 = vmul.f32 %v3667, %v3516
        %v3726 = vmul.f32 %v3672, %v3517
        %v3727 = vmul.f32 %v3677, %v3518
        %v3728 = vmul.f32 %v3682, %v3519
        %v3729 = vmul.f32 %v3687, %v3520
        %v3730 = vmul.f32 %v3692, %v3521
        %v3731 = vmul.f32 %v3697, %v3522
        %v3732 = vmul.f32 %v3702, %v3523
        %v3733 = vmul.f32 %v3707, %v3524
        %v3734 = vmul.f32 %v3712, %v3525
        %v3735 = vmul.f32 %v3717, %v3526
        %3752 = vrot.lane.b32.xlu0 %v3720, 96
        %v3753 = vpop.permute.xlu0 %3752
        %3754 = vrot.lane.b32.xlu0 %v3721, 96
        %v3755 = vpop.permute.xlu0 %3754
        %3756 = vrot.lane.b32.xlu0 %v3722, 96
        %v3757 = vpop.permute.xlu0 %3756
        %3758 = vrot.lane.b32.xlu0 %v3723, 96
        %v3759 = vpop.permute.xlu0 %3758
        %3760 = vrot.lane.b32.xlu0 %v3724, 96
        %v3761 = vpop.permute.xlu0 %3760
        %3762 = vrot.lane.b32.xlu0 %v3725, 96
        %v3763 = vpop.permute.xlu0 %3762
        %3764 = vrot.lane.b32.xlu0 %v3726, 96
        %v3765 = vpop.permute.xlu0 %3764
        %3766 = vrot.lane.b32.xlu0 %v3727, 96
        %v3767 = vpop.permute.xlu0 %3766
        %3768 = vrot.lane.b32.xlu0 %v3728, 96
        %v3769 = vpop.permute.xlu0 %3768
        %3770 = vrot.lane.b32.xlu0 %v3729, 96
        %v3771 = vpop.permute.xlu0 %3770
        %3772 = vrot.lane.b32.xlu0 %v3730, 96
        %v3773 = vpop.permute.xlu0 %3772
        %3774 = vrot.lane.b32.xlu0 %v3731, 96
        %v3775 = vpop.permute.xlu0 %3774
        %3776 = vrot.lane.b32.xlu0 %v3732, 96
        %v3777 = vpop.permute.xlu0 %3776
        %3778 = vrot.lane.b32.xlu0 %v3733, 96
        %v3779 = vpop.permute.xlu0 %3778
        %3780 = vrot.lane.b32.xlu0 %v3734, 96
        %v3781 = vpop.permute.xlu0 %3780
        %3782 = vrot.lane.b32.xlu0 %v3735, 96
        %v3783 = vpop.permute.xlu0 %3782
        %vm3800 = vcmask 1048320
        %3801 = vst.msk [vmem:[#allocation2] sm:$0xff] %vm3800, %v3753
        %3802 = vst.msk [vmem:[#allocation2 + $0x8] sm:$0xff] %vm3800, %v3755
        %3803 = vst.msk [vmem:[#allocation2 + $0x10] sm:$0xff] %vm3800, %v3757
        %3804 = vst.msk [vmem:[#allocation2 + $0x18] sm:$0xff] %vm3800, %v3759
        %3805 = vst.msk [vmem:[#allocation2 + $0x20] sm:$0xff] %vm3800, %v3761
        %3806 = vst.msk [vmem:[#allocation2 + $0x28] sm:$0xff] %vm3800, %v3763
        %3807 = vst.msk [vmem:[#allocation2 + $0x30] sm:$0xff] %vm3800, %v3765
        %3808 = vst.msk [vmem:[#allocation2 + $0x38] sm:$0xff] %vm3800, %v3767
        %3809 = vst.msk [vmem:[#allocation2 + $0x40] sm:$0xff] %vm3800, %v3769
        %3810 = vst.msk [vmem:[#allocation2 + $0x48] sm:$0xff] %vm3800, %v3771
        %3811 = vst.msk [vmem:[#allocation2 + $0x50] sm:$0xff] %vm3800, %v3773
        %3812 = vst.msk [vmem:[#allocation2 + $0x58] sm:$0xff] %vm3800, %v3775
        %3813 = vst.msk [vmem:[#allocation2 + $0x60] sm:$0xff] %vm3800, %v3777
        %3814 = vst.msk [vmem:[#allocation2 + $0x68] sm:$0xff] %vm3800, %v3779
        %3815 = vst.msk [vmem:[#allocation2 + $0x70] sm:$0xff] %vm3800, %v3781
        %3816 = vst.msk [vmem:[#allocation2 + $0x78] sm:$0xff] %vm3800, %v3783
        %v3818 = vlaneseq
        %v3819 = vshrl.u32 %v3818, 7
        %v3820 = vsub.s32 0, %v3819
        %v3821 = vrot.slane %v1162, %v3820
        %v3823 = vadd.f32 %v732, %v3821
        %v3824 = vadd.f32 %v737, %v3821
        %v3825 = vadd.f32 %v742, %v3821
        %v3826 = vadd.f32 %v747, %v3821
        %v3827 = vadd.f32 %v752, %v3821
        %v3828 = vadd.f32 %v757, %v3821
        %v3829 = vadd.f32 %v762, %v3821
        %v3830 = vadd.f32 %v767, %v3821
        %v3831 = vadd.f32 %v772, %v3821
        %v3832 = vadd.f32 %v777, %v3821
        %v3833 = vadd.f32 %v782, %v3821
        %v3834 = vadd.f32 %v787, %v3821
        %v3835 = vadd.f32 %v792, %v3821
        %v3836 = vadd.f32 %v797, %v3821
        %v3837 = vadd.f32 %v802, %v3821
        %v3838 = vadd.f32 %v807, %v3821
        %v3839 = vld [vmem:[#allocation2] sm:$0xff]
        %v3840 = vld [vmem:[#allocation2 + $0x8] sm:$0xff]
        %v3841 = vld [vmem:[#allocation2 + $0x10] sm:$0xff]
        %v3842 = vld [vmem:[#allocation2 + $0x18] sm:$0xff]
        %v3843 = vld [vmem:[#allocation2 + $0x20] sm:$0xff]
        %v3844 = vld [vmem:[#allocation2 + $0x28] sm:$0xff]
        %v3845 = vld [vmem:[#allocation2 + $0x30] sm:$0xff]
        %v3846 = vld [vmem:[#allocation2 + $0x38] sm:$0xff]
        %v3847 = vld [vmem:[#allocation2 + $0x40] sm:$0xff]
        %v3848 = vld [vmem:[#allocation2 + $0x48] sm:$0xff]
        %v3849 = vld [vmem:[#allocation2 + $0x50] sm:$0xff]
        %v3850 = vld [vmem:[#allocation2 + $0x58] sm:$0xff]
        %v3851 = vld [vmem:[#allocation2 + $0x60] sm:$0xff]
        %v3852 = vld [vmem:[#allocation2 + $0x68] sm:$0xff]
        %v3853 = vld [vmem:[#allocation2 + $0x70] sm:$0xff]
        %v3854 = vld [vmem:[#allocation2 + $0x78] sm:$0xff]
        %3855 = vmatprep.subr.mxu0 0.0
        %3856 = vmatpush1.msra.mxu0 %v1161
        %3857 = vmatprep.subr.mxu0 0.0
        %3858 = vmatpush1.msra.mxu0 %v1160
        %3859 = vmatprep.subr.mxu0 0.0
        %3860 = vmatpush1.msra.mxu0 %v1159
        %3861 = vmatprep.subr.mxu0 0.0
        %3862 = vmatpush1.msra.mxu0 %v1158
        %3863 = vmatprep.subr.mxu0 0.0
        %3864 = vmatpush1.msra.mxu0 %v1157
        %3865 = vmatprep.subr.mxu0 0.0
        %3866 = vmatpush1.msra.mxu0 %v1156
        %3867 = vmatprep.subr.mxu0 0.0
        %3868 = vmatpush1.msra.mxu0 %v1155
        %3869 = vmatprep.subr.mxu0 0.0
        %3870 = vmatpush1.msra.mxu0 %v1154
        %3871 = vmatprep.subr.mxu0 0.0
        %3872 = vmatpush1.msra.mxu0 %v1153
        %3873 = vmatprep.subr.mxu0 0.0
        %3874 = vmatpush1.msra.mxu0 %v1152
        %3875 = vmatprep.subr.mxu0 0.0
        %3876 = vmatpush1.msra.mxu0 %v1151
        %3877 = vmatprep.subr.mxu0 0.0
        %3878 = vmatpush1.msra.mxu0 %v1150
        %3879 = vmatprep.subr.mxu0 0.0
        %3880 = vmatpush1.msra.mxu0 %v1149
        %3881 = vmatprep.subr.mxu0 0.0
        %3882 = vmatpush1.msra.mxu0 %v1148
        %3883 = vmatprep.subr.mxu0 0.0
        %3884 = vmatpush1.msra.mxu0 %v1147
        %3885 = vmatprep.subr.mxu0 0.0
        %3886 = vmatpush1.msra.mxu0 %v1146
        %3887 = vmatprep.subr.mxu0 0.0
        %3888 = vmatpush2.msra.mxu0 0.0
        %3889 = vmatprep.subr.mxu0 0.0
        %3890 = vmatpush2.msra.mxu0 0.0
        %3891 = vmatprep.subr.mxu0 0.0
        %3892 = vmatpush2.msra.mxu0 0.0
        %3893 = vmatprep.subr.mxu0 0.0
        %3894 = vmatpush2.msra.mxu0 0.0
        %3895 = vmatprep.subr.mxu0 0.0
        %3896 = vmatpush2.msra.mxu0 0.0
        %3897 = vmatprep.subr.mxu0 0.0
        %3898 = vmatpush2.msra.mxu0 0.0
        %3899 = vmatprep.subr.mxu0 0.0
        %3900 = vmatpush2.msra.mxu0 0.0
        %3901 = vmatprep.subr.mxu0 0.0
        %3902 = vmatpush2.msra.mxu0 0.0
        %3903 = vmatprep.subr.mxu0 0.0
        %3904 = vmatpush2.msra.mxu0 0.0
        %3905 = vmatprep.subr.mxu0 0.0
        %3906 = vmatpush2.msra.mxu0 0.0
        %3907 = vmatprep.subr.mxu0 0.0
        %3908 = vmatpush2.msra.mxu0 0.0
        %3909 = vmatprep.subr.mxu0 0.0
        %3910 = vmatpush2.msra.mxu0 0.0
        %3911 = vmatprep.subr.mxu0 0.0
        %3912 = vmatpush2.msra.mxu0 0.0
        %3913 = vmatprep.subr.mxu0 0.0
        %3914 = vmatpush2.msra.mxu0 0.0
        %3915 = vmatprep.subr.mxu0 0.0
        %3916 = vmatpush2.msra.mxu0 0.0
        %3917 = vmatprep.subr.mxu0 0.0
        %3918 = vmatpush2.msra.mxu0 0.0
        %3919 = vmatprep.mubr.f32.mxu0 0.0
        %3920 = vmatmul.mubr.f32.gmra.mxu0 %v3839
        %v3921 = vpop.f32.mrf.mxu0
        %v3922 = vadd.f32 0.0, %v3921
        %v3923 = vpop.f32.mrf.mxu0
        %3924 = vmatprep.mubr.f32.mxu0 0.0
        %3925 = vmatmul.mubr.f32.gmra.mxu0 %v3840
        %v3926 = vpop.f32.mrf.mxu0
        %v3927 = vadd.f32 0.0, %v3926
        %v3928 = vpop.f32.mrf.mxu0
        %3929 = vmatprep.mubr.f32.mxu0 0.0
        %3930 = vmatmul.mubr.f32.gmra.mxu0 %v3841
        %v3931 = vpop.f32.mrf.mxu0
        %v3932 = vadd.f32 0.0, %v3931
        %v3933 = vpop.f32.mrf.mxu0
        %3934 = vmatprep.mubr.f32.mxu0 0.0
        %3935 = vmatmul.mubr.f32.gmra.mxu0 %v3842
        %v3936 = vpop.f32.mrf.mxu0
        %v3937 = vadd.f32 0.0, %v3936
        %v3938 = vpop.f32.mrf.mxu0
        %3939 = vmatprep.mubr.f32.mxu0 0.0
        %3940 = vmatmul.mubr.f32.gmra.mxu0 %v3843
        %v3941 = vpop.f32.mrf.mxu0
        %v3942 = vadd.f32 0.0, %v3941
        %v3943 = vpop.f32.mrf.mxu0
        %3944 = vmatprep.mubr.f32.mxu0 0.0
        %3945 = vmatmul.mubr.f32.gmra.mxu0 %v3844
        %v3946 = vpop.f32.mrf.mxu0
        %v3947 = vadd.f32 0.0, %v3946
        %v3948 = vpop.f32.mrf.mxu0
        %3949 = vmatprep.mubr.f32.mxu0 0.0
        %3950 = vmatmul.mubr.f32.gmra.mxu0 %v3845
        %v3951 = vpop.f32.mrf.mxu0
        %v3952 = vadd.f32 0.0, %v3951
        %v3953 = vpop.f32.mrf.mxu0
        %3954 = vmatprep.mubr.f32.mxu0 0.0
        %3955 = vmatmul.mubr.f32.gmra.mxu0 %v3846
        %v3956 = vpop.f32.mrf.mxu0
        %v3957 = vadd.f32 0.0, %v3956
        %v3958 = vpop.f32.mrf.mxu0
        %3959 = vmatprep.mubr.f32.mxu0 0.0
        %3960 = vmatmul.mubr.f32.gmra.mxu0 %v3847
        %v3961 = vpop.f32.mrf.mxu0
        %v3962 = vadd.f32 0.0, %v3961
        %v3963 = vpop.f32.mrf.mxu0
        %3964 = vmatprep.mubr.f32.mxu0 0.0
        %3965 = vmatmul.mubr.f32.gmra.mxu0 %v3848
        %v3966 = vpop.f32.mrf.mxu0
        %v3967 = vadd.f32 0.0, %v3966
        %v3968 = vpop.f32.mrf.mxu0
        %3969 = vmatprep.mubr.f32.mxu0 0.0
        %3970 = vmatmul.mubr.f32.gmra.mxu0 %v3849
        %v3971 = vpop.f32.mrf.mxu0
        %v3972 = vadd.f32 0.0, %v3971
        %v3973 = vpop.f32.mrf.mxu0
        %3974 = vmatprep.mubr.f32.mxu0 0.0
        %3975 = vmatmul.mubr.f32.gmra.mxu0 %v3850
        %v3976 = vpop.f32.mrf.mxu0
        %v3977 = vadd.f32 0.0, %v3976
        %v3978 = vpop.f32.mrf.mxu0
        %3979 = vmatprep.mubr.f32.mxu0 0.0
        %3980 = vmatmul.mubr.f32.gmra.mxu0 %v3851
        %v3981 = vpop.f32.mrf.mxu0
        %v3982 = vadd.f32 0.0, %v3981
        %v3983 = vpop.f32.mrf.mxu0
        %3984 = vmatprep.mubr.f32.mxu0 0.0
        %3985 = vmatmul.mubr.f32.gmra.mxu0 %v3852
        %v3986 = vpop.f32.mrf.mxu0
        %v3987 = vadd.f32 0.0, %v3986
        %v3988 = vpop.f32.mrf.mxu0
        %3989 = vmatprep.mubr.f32.mxu0 0.0
        %3990 = vmatmul.mubr.f32.gmra.mxu0 %v3853
        %v3991 = vpop.f32.mrf.mxu0
        %v3992 = vadd.f32 0.0, %v3991
        %v3993 = vpop.f32.mrf.mxu0
        %3994 = vmatprep.mubr.f32.mxu0 0.0
        %3995 = vmatmul.mubr.f32.gmra.mxu0 %v3854
        %v3996 = vpop.f32.mrf.mxu0
        %v3997 = vadd.f32 0.0, %v3996
        %v3998 = vpop.f32.mrf.mxu0
        %3999 = vdwg.mxu0
        %v4000 = vadd.f32 %v3823, %v3922
        %v4001 = vadd.f32 %v3824, %v3927
        %v4002 = vadd.f32 %v3825, %v3932
        %v4003 = vadd.f32 %v3826, %v3937
        %v4004 = vadd.f32 %v3827, %v3942
        %v4005 = vadd.f32 %v3828, %v3947
        %v4006 = vadd.f32 %v3829, %v3952
        %v4007 = vadd.f32 %v3830, %v3957
        %v4008 = vadd.f32 %v3831, %v3962
        %v4009 = vadd.f32 %v3832, %v3967
        %v4010 = vadd.f32 %v3833, %v3972
        %v4011 = vadd.f32 %v3834, %v3977
        %v4012 = vadd.f32 %v3835, %v3982
        %v4013 = vadd.f32 %v3836, %v3987
        %v4014 = vadd.f32 %v3837, %v3992
        %v4015 = vadd.f32 %v3838, %v3997
        %4016 = vadd.xlane.f32.xlu0 %v4000
        %v4017 = vpop.xlane.xlu0 %4016
        %4018 = vadd.xlane.f32.xlu0 %v4001
        %v4019 = vpop.xlane.xlu0 %4018
        %4020 = vadd.xlane.f32.xlu0 %v4002
        %v4021 = vpop.xlane.xlu0 %4020
        %4022 = vadd.xlane.f32.xlu0 %v4003
        %v4023 = vpop.xlane.xlu0 %4022
        %4024 = vadd.xlane.f32.xlu0 %v4004
        %v4025 = vpop.xlane.xlu0 %4024
        %4026 = vadd.xlane.f32.xlu0 %v4005
        %v4027 = vpop.xlane.xlu0 %4026
        %4028 = vadd.xlane.f32.xlu0 %v4006
        %v4029 = vpop.xlane.xlu0 %4028
        %4030 = vadd.xlane.f32.xlu0 %v4007
        %v4031 = vpop.xlane.xlu0 %4030
        %4032 = vadd.xlane.f32.xlu0 %v4008
        %v4033 = vpop.xlane.xlu0 %4032
        %4034 = vadd.xlane.f32.xlu0 %v4009
        %v4035 = vpop.xlane.xlu0 %4034
        %4036 = vadd.xlane.f32.xlu0 %v4010
        %v4037 = vpop.xlane.xlu0 %4036
        %4038 = vadd.xlane.f32.xlu0 %v4011
        %v4039 = vpop.xlane.xlu0 %4038
        %4040 = vadd.xlane.f32.xlu0 %v4012
        %v4041 = vpop.xlane.xlu0 %4040
        %4042 = vadd.xlane.f32.xlu0 %v4013
        %v4043 = vpop.xlane.xlu0 %4042
        %4044 = vadd.xlane.f32.xlu0 %v4014
        %v4045 = vpop.xlane.xlu0 %4044
        %4046 = vadd.xlane.f32.xlu0 %v4015
        %v4047 = vpop.xlane.xlu0 %4046
        %v4048 = vrcp.pop 128.0
        %v4049 = vmul.f32 %v4017, %v4048
        %v4050 = vmul.f32 %v4019, %v4048
        %v4051 = vmul.f32 %v4021, %v4048
        %v4052 = vmul.f32 %v4023, %v4048
        %v4053 = vmul.f32 %v4025, %v4048
        %v4054 = vmul.f32 %v4027, %v4048
        %v4055 = vmul.f32 %v4029, %v4048
        %v4056 = vmul.f32 %v4031, %v4048
        %v4057 = vmul.f32 %v4033, %v4048
        %v4058 = vmul.f32 %v4035, %v4048
        %v4059 = vmul.f32 %v4037, %v4048
        %v4060 = vmul.f32 %v4039, %v4048
        %v4061 = vmul.f32 %v4041, %v4048
        %v4062 = vmul.f32 %v4043, %v4048
        %v4063 = vmul.f32 %v4045, %v4048
        %v4064 = vmul.f32 %v4047, %v4048
        %v4065 = vsub.f32 %v4000, %v4049
        %v4066 = vsub.f32 %v4001, %v4050
        %v4067 = vsub.f32 %v4002, %v4051
        %v4068 = vsub.f32 %v4003, %v4052
        %v4069 = vsub.f32 %v4004, %v4053
        %v4070 = vsub.f32 %v4005, %v4054
        %v4071 = vsub.f32 %v4006, %v4055
        %v4072 = vsub.f32 %v4007, %v4056
        %v4073 = vsub.f32 %v4008, %v4057
        %v4074 = vsub.f32 %v4009, %v4058
        %v4075 = vsub.f32 %v4010, %v4059
        %v4076 = vsub.f32 %v4011, %v4060
        %v4077 = vsub.f32 %v4012, %v4061
        %v4078 = vsub.f32 %v4013, %v4062
        %v4079 = vsub.f32 %v4014, %v4063
        %v4080 = vsub.f32 %v4015, %v4064
        %v4081 = vmul.f32 %v4065, %v4065
        %v4082 = vmul.f32 %v4066, %v4066
        %v4083 = vmul.f32 %v4067, %v4067
        %v4084 = vmul.f32 %v4068, %v4068
        %v4085 = vmul.f32 %v4069, %v4069
        %v4086 = vmul.f32 %v4070, %v4070
        %v4087 = vmul.f32 %v4071, %v4071
        %v4088 = vmul.f32 %v4072, %v4072
        %v4089 = vmul.f32 %v4073, %v4073
        %v4090 = vmul.f32 %v4074, %v4074
        %v4091 = vmul.f32 %v4075, %v4075
        %v4092 = vmul.f32 %v4076, %v4076
        %v4093 = vmul.f32 %v4077, %v4077
        %v4094 = vmul.f32 %v4078, %v4078
        %v4095 = vmul.f32 %v4079, %v4079
        %v4096 = vmul.f32 %v4080, %v4080
        %4097 = vadd.xlane.f32.xlu0 %v4081
        %v4098 = vpop.xlane.xlu0 %4097
        %4099 = vadd.xlane.f32.xlu0 %v4082
        %v4100 = vpop.xlane.xlu0 %4099
        %4101 = vadd.xlane.f32.xlu0 %v4083
        %v4102 = vpop.xlane.xlu0 %4101
        %4103 = vadd.xlane.f32.xlu0 %v4084
        %v4104 = vpop.xlane.xlu0 %4103
        %4105 = vadd.xlane.f32.xlu0 %v4085
        %v4106 = vpop.xlane.xlu0 %4105
        %4107 = vadd.xlane.f32.xlu0 %v4086
        %v4108 = vpop.xlane.xlu0 %4107
        %4109 = vadd.xlane.f32.xlu0 %v4087
        %v4110 = vpop.xlane.xlu0 %4109
        %4111 = vadd.xlane.f32.xlu0 %v4088
        %v4112 = vpop.xlane.xlu0 %4111
        %4113 = vadd.xlane.f32.xlu0 %v4089
        %v4114 = vpop.xlane.xlu0 %4113
        %4115 = vadd.xlane.f32.xlu0 %v4090
        %v4116 = vpop.xlane.xlu0 %4115
        %4117 = vadd.xlane.f32.xlu0 %v4091
        %v4118 = vpop.xlane.xlu0 %4117
        %4119 = vadd.xlane.f32.xlu0 %v4092
        %v4120 = vpop.xlane.xlu0 %4119
        %4121 = vadd.xlane.f32.xlu0 %v4093
        %v4122 = vpop.xlane.xlu0 %4121
        %4123 = vadd.xlane.f32.xlu0 %v4094
        %v4124 = vpop.xlane.xlu0 %4123
        %4125 = vadd.xlane.f32.xlu0 %v4095
        %v4126 = vpop.xlane.xlu0 %4125
        %4127 = vadd.xlane.f32.xlu0 %v4096
        %v4128 = vpop.xlane.xlu0 %4127
        %v4129 = vmul.f32 %v4098, %v4048
        %v4130 = vmul.f32 %v4100, %v4048
        %v4131 = vmul.f32 %v4102, %v4048
        %v4132 = vmul.f32 %v4104, %v4048
        %v4133 = vmul.f32 %v4106, %v4048
        %v4134 = vmul.f32 %v4108, %v4048
        %v4135 = vmul.f32 %v4110, %v4048
        %v4136 = vmul.f32 %v4112, %v4048
        %v4137 = vmul.f32 %v4114, %v4048
        %v4138 = vmul.f32 %v4116, %v4048
        %v4139 = vmul.f32 %v4118, %v4048
        %v4140 = vmul.f32 %v4120, %v4048
        %v4141 = vmul.f32 %v4122, %v4048
        %v4142 = vmul.f32 %v4124, %v4048
        %v4143 = vmul.f32 %v4126, %v4048
        %v4144 = vmul.f32 %v4128, %v4048
        %v4145 = vadd.f32 %v4129, 1e-05
        %v4146 = vadd.f32 %v4130, 1e-05
        %v4147 = vadd.f32 %v4131, 1e-05
        %v4148 = vadd.f32 %v4132, 1e-05
        %v4149 = vadd.f32 %v4133, 1e-05
        %v4150 = vadd.f32 %v4134, 1e-05
        %v4151 = vadd.f32 %v4135, 1e-05
        %v4152 = vadd.f32 %v4136, 1e-05
        %v4153 = vadd.f32 %v4137, 1e-05
        %v4154 = vadd.f32 %v4138, 1e-05
        %v4155 = vadd.f32 %v4139, 1e-05
        %v4156 = vadd.f32 %v4140, 1e-05
        %v4157 = vadd.f32 %v4141, 1e-05
        %v4158 = vadd.f32 %v4142, 1e-05
        %v4159 = vadd.f32 %v4143, 1e-05
        %v4160 = vadd.f32 %v4144, 1e-05
        %v4161 = vrsqrt.pop %v4145
        %v4162 = vrsqrt.pop %v4146
        %v4163 = vrsqrt.pop %v4147
        %v4164 = vrsqrt.pop %v4148
        %v4165 = vrsqrt.pop %v4149
        %v4166 = vrsqrt.pop %v4150
        %v4167 = vrsqrt.pop %v4151
        %v4168 = vrsqrt.pop %v4152
        %v4169 = vrsqrt.pop %v4153
        %v4170 = vrsqrt.pop %v4154
        %v4171 = vrsqrt.pop %v4155
        %v4172 = vrsqrt.pop %v4156
        %v4173 = vrsqrt.pop %v4157
        %v4174 = vrsqrt.pop %v4158
        %v4175 = vrsqrt.pop %v4159
        %v4176 = vrsqrt.pop %v4160
        %v4177 = vmul.f32 %v4065, %v4161
        %v4178 = vmul.f32 %v4066, %v4162
        %v4179 = vmul.f32 %v4067, %v4163
        %v4180 = vmul.f32 %v4068, %v4164
        %v4181 = vmul.f32 %v4069, %v4165
        %v4182 = vmul.f32 %v4070, %v4166
        %v4183 = vmul.f32 %v4071, %v4167
        %v4184 = vmul.f32 %v4072, %v4168
        %v4185 = vmul.f32 %v4073, %v4169
        %v4186 = vmul.f32 %v4074, %v4170
        %v4187 = vmul.f32 %v4075, %v4171
        %v4188 = vmul.f32 %v4076, %v4172
        %v4189 = vmul.f32 %v4077, %v4173
        %v4190 = vmul.f32 %v4078, %v4174
        %v4191 = vmul.f32 %v4079, %v4175
        %v4192 = vmul.f32 %v4080, %v4176
        %v4194 = vlaneseq
        %v4195 = vshrl.u32 %v4194, 7
        %v4196 = vsub.s32 0, %v4195
        %v4197 = vrot.slane %v1163, %v4196
        %v4199 = vmul.f32 %v4177, %v4197
        %v4200 = vmul.f32 %v4178, %v4197
        %v4201 = vmul.f32 %v4179, %v4197
        %v4202 = vmul.f32 %v4180, %v4197
        %v4203 = vmul.f32 %v4181, %v4197
        %v4204 = vmul.f32 %v4182, %v4197
        %v4205 = vmul.f32 %v4183, %v4197
        %v4206 = vmul.f32 %v4184, %v4197
        %v4207 = vmul.f32 %v4185, %v4197
        %v4208 = vmul.f32 %v4186, %v4197
        %v4209 = vmul.f32 %v4187, %v4197
        %v4210 = vmul.f32 %v4188, %v4197
        %v4211 = vmul.f32 %v4189, %v4197
        %v4212 = vmul.f32 %v4190, %v4197
        %v4213 = vmul.f32 %v4191, %v4197
        %v4214 = vmul.f32 %v4192, %v4197
        %v4216 = vlaneseq
        %v4217 = vshrl.u32 %v4216, 7
        %v4218 = vsub.s32 0, %v4217
        %v4219 = vrot.slane %v1164, %v4218
        %v4221 = vadd.f32 %v4199, %v4219
        %v4222 = vadd.f32 %v4200, %v4219
        %v4223 = vadd.f32 %v4201, %v4219
        %v4224 = vadd.f32 %v4202, %v4219
        %v4225 = vadd.f32 %v4203, %v4219
        %v4226 = vadd.f32 %v4204, %v4219
        %v4227 = vadd.f32 %v4205, %v4219
        %v4228 = vadd.f32 %v4206, %v4219
        %v4229 = vadd.f32 %v4207, %v4219
        %v4230 = vadd.f32 %v4208, %v4219
        %v4231 = vadd.f32 %v4209, %v4219
        %v4232 = vadd.f32 %v4210, %v4219
        %v4233 = vadd.f32 %v4211, %v4219
        %v4234 = vadd.f32 %v4212, %v4219
        %v4235 = vadd.f32 %v4213, %v4219
        %v4236 = vadd.f32 %v4214, %v4219
        %4237 = vst [vmem:[%s593] sm:$0xff] %v4221
        %4238 = vst [vmem:[%s593 + $0x8] sm:$0xff] %v4222
        %4239 = vst [vmem:[%s593 + $0x10] sm:$0xff] %v4223
        %4240 = vst [vmem:[%s593 + $0x18] sm:$0xff] %v4224
        %4241 = vst [vmem:[%s593 + $0x20] sm:$0xff] %v4225
        %4242 = vst [vmem:[%s593 + $0x28] sm:$0xff] %v4226
        %4243 = vst [vmem:[%s593 + $0x30] sm:$0xff] %v4227
        %4244 = vst [vmem:[%s593 + $0x38] sm:$0xff] %v4228
        %4245 = vst [vmem:[%s593 + $0x40] sm:$0xff] %v4229
        %4246 = vst [vmem:[%s593 + $0x48] sm:$0xff] %v4230
        %4247 = vst [vmem:[%s593 + $0x50] sm:$0xff] %v4231
        %4248 = vst [vmem:[%s593 + $0x58] sm:$0xff] %v4232
        %4249 = vst [vmem:[%s593 + $0x60] sm:$0xff] %v4233
        %4250 = vst [vmem:[%s593 + $0x68] sm:$0xff] %v4234
        %4251 = vst [vmem:[%s593 + $0x70] sm:$0xff] %v4235
        %4252 = vst [vmem:[%s593 + $0x78] sm:$0xff] %v4236
        %s4253 = sand.u32 %s331, 1
        %s4254 = scalar_lea.sflag [#allocation5], %s4253
        %s4255 = sand.u32 %s331, 1
        %s4256 = smul.addr %s4255, 128
        %s4257 = scalar_lea.vmem [#allocation15], %s4256
        // Predicated region
        $region101: #{tpu_custom_call.1} parent=71 // pred_check
          %p4258 = pneg %p341
        $region102: #{tpu_custom_call.1} parent=71 // pred_check_branch
          %4260 = sbr.rel (%p4258) target = $region104
        $region103: #{tpu_custom_call.1} parent=71 // pred_region
          %s4262 = ssub.s32 2048, 2048
          %4263 = vsyncadd %s4254, %s4262
          %s4264 = smul.addr %s35, 16
          %s4265 = smul.addr %s4264, 128
          %s4266 = scalar_lea.hbm %s13, %s4265
          %s4267 = sshll.u32 %s4257, 4
          %s4268 = int_to_ptr.vmem [resolvable:$true] %s4267
          %4273 = dma.vmem_to_hbm [thread:$0]  %s4268, 2048, %s4266, %s4254, 128, 128, 8
        $region104: #{tpu_custom_call.1} parent=71 // pred_fallthru
          _
      $region72: #{tpu_custom_call.1} parent=5 // pred_fallthru
        _
      %p4274 = scmp.le.s32.totalorder 2, %s30
      // Predicated region
      $region105: #{tpu_custom_call.1} parent=5 // pred_check
        %p4275 = pneg %p4274
      $region106: #{tpu_custom_call.1} parent=5 // pred_check_branch
        %4277 = sbr.rel (%p4275) target = $region108
      $region107: #{tpu_custom_call.1} parent=5 // pred_region
        %s4278 = ssub.s32 %s30, 2
        // Predicated region
        $region109: #{tpu_custom_call.1} parent=107 // pred_check
          %p4279 = pneg %p347
        $region110: #{tpu_custom_call.1} parent=107 // pred_check_branch
          %4281 = sbr.rel (%p4279) target = $region112
        $region111: #{tpu_custom_call.1} parent=107 // pred_region
          %s4282 = sand.u32 %s332, 1
          %s4283 = scalar_lea.sflag [#allocation5], %s4282
          %s4284 = sand.u32 %s332, 1
          %s4285 = smul.addr %s4284, 128
          %s4286 = scalar_lea.vmem [#allocation15], %s4285
          %4287 = dma.done %s4283, 2048
        $region112: #{tpu_custom_call.1} parent=107 // pred_fallthru
          _
      $region108: #{tpu_custom_call.1} parent=5 // pred_fallthru
        _
    $region6: #{tpu_custom_call.1} parent=1 // loop_footer
      %s34 = sadd.s32 1, %s30
    $region7: #{tpu_custom_call.1} parent=1 // loop_footer_branch
      %29 = sbr.rel target = $region3
    $region8: #{tpu_custom_call.1} parent=1 // loop_exit
      _
    %4288 = vsyncpa [#allocation4], 1
    %s4289 = scalar_lea.sflag [#allocation4], 1
    %4290 = vsyncpa %s4289, 1
    %4291 = vsyncpa [#allocation7], 1
    %s4292 = scalar_lea.sflag [#allocation7], 1
    %4293 = vsyncpa %s4292, 1
    %4294 = vsyncpa [#allocation10], 1
    %4295 = vsyncpa [#allocation13], 1
    %4296 = vsyncpa [#allocation5], 1
    %s4297 = scalar_lea.sflag [#allocation5], 1
    %4298 = vsyncpa %s4297, 1

</llo_original>
